<compile_context>
chip_gen: v7x
topology: tpu7x:2x2x1
jax: 0.10.0
libtpu: 0.0.40
codegen_flags: <defaults>
</compile_context>

<pallas_src>
import functools

import jax
import jax.numpy as jnp
from jax import lax
from jax.experimental import pallas as pl
from jax.experimental.pallas import tpu as pltpu

EPS = 1e-5
LANE = 128  # lane-padding unit; could be raised to 256 on v6e for full MXU width


def _round_up(x, m):
    return (x + m - 1) // m * m


def _pick_row_tile(m):
    # 512-row tiles already reach ~85% of HBM roofline; preferring 512 over
    # 1024 means the ("parallel",) grid gets >=2 steps sooner, so on v7x both
    # TensorCores get work, at negligible per-step overhead (~0.35us) on
    # v5e/v6e.  Smaller tiles only as a fallback for awkward row counts.
    for cand in (512, 256, 128, 64, 32, 16, 8):
        if m % cand == 0:
            return cand
    return m


# --------------------------------------------------------------------------
# Kernel 1: folded BN1 + ReLU + 1x1 conv (+bias) + fused BN2 partial stats
# --------------------------------------------------------------------------
def _bottleneck_kernel(x_ref, s_ref, t_ref, w_ref, b_ref, y_ref, ys_ref, yq_ref):
    # x: (TM, Cin_p) f32   s/t: (1, Cin_p) f32   w: (Cin_p, Cmid_p) bf16
    # b: (1, Cmid_p) f32   y: (TM, Cmid_p) f32   ys/yq: (8, Cmid_p) f32
    tm = x_ref.shape[0]
    cmid_p = w_ref.shape[1]

    # Folded BatchNorm (scale/shift) + ReLU; cast to bf16 for the MXU.
    h = jnp.maximum(x_ref[...] * s_ref[...] + t_ref[...], 0.0).astype(jnp.bfloat16)
    y = jnp.dot(h, w_ref[...], preferred_element_type=jnp.float32) + b_ref[...]
    y_ref[...] = y

    # Fused per-channel partial statistics for BN2 (folded 8-way along sublanes
    # so the stat store stays (8,128)-aligned and lane-dense).
    y3 = y.reshape(tm // 8, 8, cmid_p)
    ys_ref[...] = jnp.sum(y3, axis=0)
    yq_ref[...] = jnp.sum(y3 * y3, axis=0)


def bottleneck(x_buf, s1, t1, w1, b1):
    # x_buf: (M, C_pad) persistent activation buffer; only the first
    # s1.shape[1] channels are read (via the BlockSpec -- no extra HBM traffic
    # for not-yet-written channels beyond the 128-aligned width).
    m = x_buf.shape[0]
    cin_p = s1.shape[1]
    cmid_p = w1.shape[1]
    tm = _pick_row_tile(m)
    nt = m // tm
    return pl.pallas_call(
        _bottleneck_kernel,
        out_shape=(
            jax.ShapeDtypeStruct((m, cmid_p), jnp.float32),
            jax.ShapeDtypeStruct((nt * 8, cmid_p), jnp.float32),
            jax.ShapeDtypeStruct((nt * 8, cmid_p), jnp.float32),
        ),
        grid_spec=pltpu.PrefetchScalarGridSpec(
            num_scalar_prefetch=0,
            grid=(nt,),
            in_specs=[
                pl.BlockSpec((tm, cin_p), lambda i: (i, 0)),
                pl.BlockSpec((1, cin_p), lambda i: (0, 0)),
                pl.BlockSpec((1, cin_p), lambda i: (0, 0)),
                pl.BlockSpec((cin_p, cmid_p), lambda i: (0, 0)),
                pl.BlockSpec((1, cmid_p), lambda i: (0, 0)),
            ],
            out_specs=(
                pl.BlockSpec((tm, cmid_p), lambda i: (i, 0)),
                pl.BlockSpec((8, cmid_p), lambda i: (i, 0)),
                pl.BlockSpec((8, cmid_p), lambda i: (i, 0)),
            ),
        ),
        compiler_params=pltpu.CompilerParams(dimension_semantics=("parallel",)),
    )(x_buf, s1, t1, w1, b1)


# --------------------------------------------------------------------------
# Kernel 2: folded BN2 + ReLU + 3x3 conv (SAME) + fused next-layer BN1 stats
# --------------------------------------------------------------------------
def _conv3x3_kernel(y_ref, s_ref, t_ref, w_ref, b_ref, z_ref, zs_ref, zq_ref, *, W):
    # y: (1, H*W, Cmid_p) f32   s/t: (1, Cmid_p)   w: (9*Cmid_p, G_p) bf16
    # b: (1, G_p)   z: (1, H*W, G_p)   zs/zq: (8, G_p)
    hw = y_ref.shape[1]
    cmid_p = y_ref.shape[2]
    gp = b_ref.shape[1]
    h_dim = hw // W

    # Folded BN2 + ReLU; channels on lanes, flattened pixels on sublanes.
    a = jnp.maximum(y_ref[0] * s_ref[...] + t_ref[...], 0.0)  # (HW, Cmid_p) f32

    # Column-in-row index: zero the columns that wrap across the image border
    # after the +-1 sublane roll (left/right neighbours).
    wcol = lax.broadcasted_iota(jnp.int32, (h_dim, W, cmid_p), 1).reshape(hw, cmid_p)
    zrow = jnp.zeros((W, cmid_p), jnp.float32)

    # Lane-aligned im2col slab: 9 taps x Cmid_p lanes each (lane offsets are
    # multiples of 128). dx shifts use XLU sublane rolls + border masking; dy
    # shifts are 8-aligned row-block concats. No padded VMEM scratch and no
    # unaligned slices; the 9 small matmuls collapse into one MXU matmul with
    # K = 9*Cmid_p that accumulates in the MXU result path (registers/MRB).
    taps = []
    for k in range(9):
        ky, kx = divmod(k, 3)
        dy, dx = ky - 1, kx - 1
        if dx == -1:  # left neighbour: sh[r] = a[r-1]
            sh = pltpu.roll(a, 1, 0)
            sh = jnp.where(wcol == 0, 0.0, sh)
        elif dx == 1:  # right neighbour: sh[r] = a[r+1]
            sh = pltpu.roll(a, hw - 1, 0)
            sh = jnp.where(wcol == W - 1, 0.0, sh)
        else:
            sh = a
        if dy == -1:  # neighbour one image row up
            sh = jnp.concatenate([zrow, sh[: hw - W]], axis=0)
        elif dy == 1:  # one image row down
            sh = jnp.concatenate([sh[W:], zrow], axis=0)
        taps.append(sh)
    im2col = jnp.concatenate(taps, axis=1).astype(jnp.bfloat16)  # (HW, 9*Cmid_p)

    z = jnp.dot(im2col, w_ref[...], preferred_element_type=jnp.float32) + b_ref[...]
    z_ref[...] = z.reshape(1, hw, gp)

    # Fused per-channel partial stats of the new features (next layer's BN1),
    # so the wrapper never re-reads the activations just for statistics.
    z3 = z.reshape(hw // 8, 8, gp)
    zs_ref[...] = jnp.sum(z3, axis=0)
    zq_ref[...] = jnp.sum(z3 * z3, axis=0)


def conv3x3(y3, s2, t2, w2, b2, W):
    # TODO(synk): for large H*W (real DenseNet sizes) add an H-row-group grid
    # axis with 1-row halos so per-step VMEM fits v7x's 64 MiB and both of its
    # TensorCores get work even at small batch.
    n, hw, cmid_p = y3.shape
    gp = w2.shape[1]
    kernel = functools.partial(_conv3x3_kernel, W=W)
    return pl.pallas_call(
        kernel,
        out_shape=(
            jax.ShapeDtypeStruct((n, hw, gp), jnp.float32),
            jax.ShapeDtypeStruct((n * 8, gp), jnp.float32),
            jax.ShapeDtypeStruct((n * 8, gp), jnp.float32),
        ),
        grid_spec=pltpu.PrefetchScalarGridSpec(
            num_scalar_prefetch=0,
            grid=(n,),
            in_specs=[
                pl.BlockSpec((1, hw, cmid_p), lambda i: (i, 0, 0)),
                pl.BlockSpec((1, cmid_p), lambda i: (0, 0)),
                pl.BlockSpec((1, cmid_p), lambda i: (0, 0)),
                pl.BlockSpec((9 * cmid_p, gp), lambda i: (0, 0)),
                pl.BlockSpec((1, gp), lambda i: (0, 0)),
            ],
            out_specs=(
                pl.BlockSpec((1, hw, gp), lambda i: (i, 0, 0)),
                pl.BlockSpec((8, gp), lambda i: (i, 0)),
                pl.BlockSpec((8, gp), lambda i: (i, 0)),
            ),
        ),
        compiler_params=pltpu.CompilerParams(dimension_semantics=("parallel",)),
    )(y3, s2, t2, w2, b2)


# --------------------------------------------------------------------------
# DenseBlock forward (Pallas path)
# --------------------------------------------------------------------------
def dense_block_forward(x_nchw, params):
    n, c0, hh, ww = x_nchw.shape
    assert ww % 8 == 0 and (hh * ww) % 8 == 0, "spatial dims must be multiples of 8"
    growth = params[0]["w2"].shape[-1]
    c_final = c0 + len(params) * growth
    c_pad = _round_up(c_final, LANE)
    m = n * hh * ww

    # Persistent channel-padded activation buffer (no per-layer concatenate)
    # and running per-channel sums / sums-of-squares for BatchNorm statistics.
    x2d = jnp.transpose(x_nchw, (0, 2, 3, 1)).astype(jnp.float32).reshape(m, c0)
    buf = jnp.zeros((m, c_pad), jnp.float32).at[:, :c0].set(x2d)
    csum = jnp.zeros((c_pad,), jnp.float32).at[:c0].set(x2d.sum(0))
    cssq = jnp.zeros((c_pad,), jnp.float32).at[:c0].set((x2d * x2d).sum(0))

    c = c0
    for p in params:
        cin = c
        cin_p = _round_up(cin, LANE)
        cmid = p["w1"].shape[1]
        cmid_p = _round_up(cmid, LANE)
        g_p = _round_up(growth, LANE)

        # ---- fold BN1 (training-mode batch stats) into scale/shift, padded ----
        m1 = csum[:cin_p] / m
        v1 = jnp.maximum(cssq[:cin_p] / m - m1 * m1, 0.0)
        g1 = jnp.zeros((cin_p,), jnp.float32).at[:cin].set(p["gamma1"])
        be1 = jnp.zeros((cin_p,), jnp.float32).at[:cin].set(p["beta1"])
        s1 = g1 / jnp.sqrt(v1 + EPS)
        t1 = be1 - m1 * s1

        w1 = (jnp.zeros((cin_p, cmid_p), jnp.float32)
              .at[:cin, :cmid].set(p["w1"]).astype(jnp.bfloat16))
        b1 = jnp.zeros((1, cmid_p), jnp.float32).at[0, :cmid].set(p["b1"])

        y2d, ysum, yssq = bottleneck(
            buf, s1.reshape(1, cin_p), t1.reshape(1, cin_p), w1, b1)

        # ---- fold BN2 from the fused partial sums ----
        m2 = ysum.sum(0) / m
        v2 = jnp.maximum(yssq.sum(0) / m - m2 * m2, 0.0)
        g2 = jnp.zeros((cmid_p,), jnp.float32).at[:cmid].set(p["gamma2"])
        be2 = jnp.zeros((cmid_p,), jnp.float32).at[:cmid].set(p["beta2"])
        s2 = g2 / jnp.sqrt(v2 + EPS)
        t2 = be2 - m2 * s2

        # 3x3 weights, tap-major (k = ky*3 + kx), zero-padded to lane widths.
        w2 = (jnp.zeros((9, cmid_p, g_p), jnp.float32)
              .at[:, :cmid, :growth].set(p["w2"])
              .reshape(9 * cmid_p, g_p).astype(jnp.bfloat16))
        b2 = jnp.zeros((1, g_p), jnp.float32).at[0, :growth].set(p["b2"])

        z3, zsum, zssq = conv3x3(
            y2d.reshape(n, hh * ww, cmid_p),
            s2.reshape(1, cmid_p), t2.reshape(1, cmid_p), w2, b2, ww)

        # Write the new growth channels into their slice of the persistent
        # buffer and extend the running channel statistics.
        buf = buf.at[:, c:c + growth].set(z3.reshape(m, g_p)[:, :growth])
        csum = csum.at[c:c + growth].set(zsum.sum(0)[:growth])
        cssq = cssq.at[c:c + growth].set(zssq.sum(0)[:growth])
        c += growth

    out = buf[:, :c_final].reshape(n, hh, ww, c_final)
    return jnp.transpose(out, (0, 3, 1, 2))  # NHWC -> NCHW


# --------------------------------------------------------------------------
# Pure-JAX reference (f32 lax.conv) for correctness checking
# --------------------------------------------------------------------------
def ref_forward(x_nchw, params):
    x = jnp.transpose(x_nchw, (0, 2, 3, 1)).astype(jnp.float32)
    dn = ("NHWC", "HWIO", "NHWC")
    for p in params:
        m1 = x.mean((0, 1, 2))
        v1 = x.var((0, 1, 2))
        h = jnp.maximum((x - m1) * (p["gamma1"] / jnp.sqrt(v1 + EPS)) + p["beta1"], 0.0)
        w1 = p["w1"].reshape(1, 1, *p["w1"].shape)
        y = lax.conv_general_dilated(h, w1, (1, 1), "VALID", dimension_numbers=dn)
        y = y + p["b1"]
        m2 = y.mean((0, 1, 2))
        v2 = y.var((0, 1, 2))
        h2 = jnp.maximum((y - m2) * (p["gamma2"] / jnp.sqrt(v2 + EPS)) + p["beta2"], 0.0)
        w2 = p["w2"].reshape(3, 3, p["w2"].shape[1], p["w2"].shape[2])
        z = lax.conv_general_dilated(h2, w2, (1, 1), "SAME", dimension_numbers=dn)
        z = z + p["b2"]
        x = jnp.concatenate([x, z], axis=-1)
    return jnp.transpose(x, (0, 3, 1, 2))


# --------------------------------------------------------------------------
# Deterministic parameter init (shapes follow DenseLayer.__init__)
# --------------------------------------------------------------------------
def init_params(key, num_layers, input_features, growth_rate):
    params = []
    c = input_features
    for _ in range(num_layers):
        cmid = 4 * growth_rate
        key, *ks = jax.random.split(key, 9)
        params.append(
            dict(
                gamma1=1.0 + 0.1 * jax.random.normal(ks[0], (c,), jnp.float32),
                beta1=0.1 * jax.random.normal(ks[1], (c,), jnp.float32),
                w1=jax.random.normal(ks[2], (c, cmid), jnp.float32) / jnp.sqrt(c),
                b1=0.1 * jax.random.normal(ks[3], (cmid,), jnp.float32),
                gamma2=1.0 + 0.1 * jax.random.normal(ks[4], (cmid,), jnp.float32),
                beta2=0.1 * jax.random.normal(ks[5], (cmid,), jnp.float32),
                w2=jax.random.normal(ks[6], (9, cmid, growth_rate), jnp.float32)
                / jnp.sqrt(9.0 * cmid),
                b2=0.1 * jax.random.normal(ks[7], (growth_rate,), jnp.float32),
            )
        )
        c += growth_rate
    return params


if __name__ == "__main__":
    num_layers, input_features, growth_rate = 2, 4, 8
    N, H, W = 2, 16, 16

    key = jax.random.PRNGKey(0)
    kx, kp = jax.random.split(key)
    x = jax.random.normal(kx, (N, input_features, H, W), jnp.float32)  # NCHW
    params = init_params(kp, num_layers, input_features, growth_rate)

    out = jax.block_until_ready(jax.jit(dense_block_forward)(x, params))

    expected_c = input_features + num_layers * growth_rate
    assert out.shape == (N, expected_c, H, W), out.shape

    ref = jax.block_until_ready(ref_forward(x, params))
    # bf16 MXU inputs (f32 accumulation) vs the all-f32 reference -> looser tol.
    assert jnp.allclose(out, ref, atol=2e-2, rtol=2e-2), float(
        jnp.max(jnp.abs(out - ref))
    )

    print("KERNEL_OK")
</pallas_src>

<mosaic_0001>
module attributes {stable_mosaic.version = 11 : i64} {
  func.func @_bottleneck_kernel(%arg0: i32, %arg1: memref<512x128xf32, #tpu.memory_space<vmem>>, %arg2: memref<1x128xf32, #tpu.memory_space<vmem>>, %arg3: memref<1x128xf32, #tpu.memory_space<vmem>>, %arg4: memref<128x128xbf16, #tpu.memory_space<vmem>>, %arg5: memref<1x128xf32, #tpu.memory_space<vmem>>, %arg6: memref<512x128xf32, #tpu.memory_space<vmem>>, %arg7: memref<8x128xf32, #tpu.memory_space<vmem>>, %arg8: memref<8x128xf32, #tpu.memory_space<vmem>>) attributes {dimension_semantics = [#tpu.dimension_semantics<parallel>], iteration_bounds = array<i64: 1>, scalar_prefetch = 0 : i64, scratch_operands = 0 : i64, tpu.core_type = #tpu.core_type<tc>, window_params = [{transform_indices = @transform_0, window_bounds = array<i64: 512, 128>}, {pipeline_mode = #tpu.pipeline_mode<synchronous>, transform_indices = @transform_1, window_bounds = array<i64: 1, 128>}, {pipeline_mode = #tpu.pipeline_mode<synchronous>, transform_indices = @transform_2, window_bounds = array<i64: 1, 128>}, {pipeline_mode = #tpu.pipeline_mode<synchronous>, transform_indices = @transform_3, window_bounds = array<i64: 128, 128>}, {pipeline_mode = #tpu.pipeline_mode<synchronous>, transform_indices = @transform_4, window_bounds = array<i64: 1, 128>}, {transform_indices = @transform_5, window_bounds = array<i64: 512, 128>}, {transform_indices = @transform_6, window_bounds = array<i64: 8, 128>}, {transform_indices = @transform_7, window_bounds = array<i64: 8, 128>}]} {
    %c0 = arith.constant 0 : index
    %c0_0 = arith.constant 0 : index
    %0 = vector.load %arg1[%c0, %c0_0] : memref<512x128xf32, #tpu.memory_space<vmem>>, vector<512x128xf32>
    %c0_1 = arith.constant 0 : index
    %c0_2 = arith.constant 0 : index
    %1 = vector.load %arg2[%c0_1, %c0_2] : memref<1x128xf32, #tpu.memory_space<vmem>>, vector<1x128xf32>
    %2 = vector.broadcast %1 : vector<1x128xf32> to vector<512x128xf32>
    %3 = arith.mulf %0, %2 : vector<512x128xf32>
    %c0_3 = arith.constant 0 : index
    %c0_4 = arith.constant 0 : index
    %4 = vector.load %arg3[%c0_3, %c0_4] : memref<1x128xf32, #tpu.memory_space<vmem>>, vector<1x128xf32>
    %5 = vector.broadcast %4 : vector<1x128xf32> to vector<512x128xf32>
    %6 = arith.addf %3, %5 : vector<512x128xf32>
    %cst = arith.constant 0.000000e+00 : f32
    %7 = vector.broadcast %cst : f32 to vector<512x128xf32>
    %8 = arith.maximumf %6, %7 : vector<512x128xf32>
    %9 = arith.truncf %8 : vector<512x128xf32> to vector<512x128xbf16>
    %c0_5 = arith.constant 0 : index
    %c0_6 = arith.constant 0 : index
    %10 = vector.load %arg4[%c0_5, %c0_6] : memref<128x128xbf16, #tpu.memory_space<vmem>>, vector<128x128xbf16>
    %cst_7 = arith.constant dense<0.000000e+00> : vector<512x128xf32>
    %11 = tpu.matmul %9, %10, %cst_7 {dimension_numbers = #tpu.dot_dimension_numbers<[1], [0], [0], [1], [0, 0, 1, 1], [], []>} : vector<512x128xbf16>, vector<128x128xbf16>, vector<512x128xf32> -> vector<512x128xf32>
    %c0_8 = arith.constant 0 : index
    %c0_9 = arith.constant 0 : index
    %12 = vector.load %arg5[%c0_8, %c0_9] : memref<1x128xf32, #tpu.memory_space<vmem>>, vector<1x128xf32>
    %13 = vector.broadcast %12 : vector<1x128xf32> to vector<512x128xf32>
    %14 = arith.addf %11, %13 : vector<512x128xf32>
    %c0_10 = arith.constant 0 : index
    %c0_11 = arith.constant 0 : index
    %15 = vector.load %arg6[%c0_10, %c0_11] : memref<512x128xf32, #tpu.memory_space<vmem>>, vector<512x128xf32>
    tpu.vector_store %arg6[%c0_10, %c0_11], %14 {strides = array<i32>} : memref<512x128xf32, #tpu.memory_space<vmem>>, vector<512x128xf32>,
    %16 = vector.shape_cast %14 : vector<512x128xf32> to vector<64x8x128xf32>
    %cst_12 = arith.constant dense<0.000000e+00> : vector<8x128xf32>
    %17 = vector.multi_reduction <add>, %16, %cst_12 [0] : vector<64x8x128xf32> to vector<8x128xf32>
    %c0_13 = arith.constant 0 : index
    %c0_14 = arith.constant 0 : index
    %18 = vector.load %arg7[%c0_13, %c0_14] : memref<8x128xf32, #tpu.memory_space<vmem>>, vector<8x128xf32>
    tpu.vector_store %arg7[%c0_13, %c0_14], %17 {strides = array<i32>} : memref<8x128xf32, #tpu.memory_space<vmem>>, vector<8x128xf32>,
    %19 = arith.mulf %16, %16 : vector<64x8x128xf32>
    %cst_15 = arith.constant dense<0.000000e+00> : vector<8x128xf32>
    %20 = vector.multi_reduction <add>, %19, %cst_15 [0] : vector<64x8x128xf32> to vector<8x128xf32>
    %c0_16 = arith.constant 0 : index
    %c0_17 = arith.constant 0 : index
    %21 = vector.load %arg8[%c0_16, %c0_17] : memref<8x128xf32, #tpu.memory_space<vmem>>, vector<8x128xf32>
    tpu.vector_store %arg8[%c0_16, %c0_17], %20 {strides = array<i32>} : memref<8x128xf32, #tpu.memory_space<vmem>>, vector<8x128xf32>,
    return
  }
  func.func @transform_0(%arg0: i32) -> (i32, i32) {
    %c0_i32 = arith.constant 0 : i32
    %c0_i32_0 = arith.constant 0 : i32
    return %arg0, %c0_i32 : i32, i32
  }
  func.func @transform_1(%arg0: i32) -> (i32, i32) {
    %c0_i32 = arith.constant 0 : i32
    %c0_i32_0 = arith.constant 0 : i32
    %c0_i32_1 = arith.constant 0 : i32
    return %c0_i32, %c0_i32_0 : i32, i32
  }
  func.func @transform_2(%arg0: i32) -> (i32, i32) {
    %c0_i32 = arith.constant 0 : i32
    %c0_i32_0 = arith.constant 0 : i32
    %c0_i32_1 = arith.constant 0 : i32
    return %c0_i32, %c0_i32_0 : i32, i32
  }
  func.func @transform_3(%arg0: i32) -> (i32, i32) {
    %c0_i32 = arith.constant 0 : i32
    %c0_i32_0 = arith.constant 0 : i32
    %c0_i32_1 = arith.constant 0 : i32
    return %c0_i32, %c0_i32_0 : i32, i32
  }
  func.func @transform_4(%arg0: i32) -> (i32, i32) {
    %c0_i32 = arith.constant 0 : i32
    %c0_i32_0 = arith.constant 0 : i32
    %c0_i32_1 = arith.constant 0 : i32
    return %c0_i32, %c0_i32_0 : i32, i32
  }
  func.func @transform_5(%arg0: i32) -> (i32, i32) {
    %c0_i32 = arith.constant 0 : i32
    %c0_i32_0 = arith.constant 0 : i32
    return %arg0, %c0_i32 : i32, i32
  }
  func.func @transform_6(%arg0: i32) -> (i32, i32) {
    %c0_i32 = arith.constant 0 : i32
    %c0_i32_0 = arith.constant 0 : i32
    return %arg0, %c0_i32 : i32, i32
  }
  func.func @transform_7(%arg0: i32) -> (i32, i32) {
    %c0_i32 = arith.constant 0 : i32
    %c0_i32_0 = arith.constant 0 : i32
    return %arg0, %c0_i32 : i32, i32
  }
}

module attributes {stable_mosaic.version = 11 : i64} {
  func.func @_conv3x3_kernel(%arg0: i32, %arg1: memref<1x256x128xf32, #tpu.memory_space<vmem>>, %arg2: memref<1x128xf32, #tpu.memory_space<vmem>>, %arg3: memref<1x128xf32, #tpu.memory_space<vmem>>, %arg4: memref<1152x128xbf16, #tpu.memory_space<vmem>>, %arg5: memref<1x128xf32, #tpu.memory_space<vmem>>, %arg6: memref<1x256x128xf32, #tpu.memory_space<vmem>>, %arg7: memref<8x128xf32, #tpu.memory_space<vmem>>, %arg8: memref<8x128xf32, #tpu.memory_space<vmem>>) attributes {dimension_semantics = [#tpu.dimension_semantics<parallel>], iteration_bounds = array<i64: 2>, scalar_prefetch = 0 : i64, scratch_operands = 0 : i64, tpu.core_type = #tpu.core_type<tc>, window_params = [{transform_indices = @transform_0, window_bounds = array<i64: 1, 256, 128>}, {pipeline_mode = #tpu.pipeline_mode<synchronous>, transform_indices = @transform_1, window_bounds = array<i64: 1, 128>}, {pipeline_mode = #tpu.pipeline_mode<synchronous>, transform_indices = @transform_2, window_bounds = array<i64: 1, 128>}, {pipeline_mode = #tpu.pipeline_mode<synchronous>, transform_indices = @transform_3, window_bounds = array<i64: 1152, 128>}, {pipeline_mode = #tpu.pipeline_mode<synchronous>, transform_indices = @transform_4, window_bounds = array<i64: 1, 128>}, {transform_indices = @transform_5, window_bounds = array<i64: 1, 256, 128>}, {transform_indices = @transform_6, window_bounds = array<i64: 8, 128>}, {transform_indices = @transform_7, window_bounds = array<i64: 8, 128>}]} {
    %c0 = arith.constant 0 : index
    %c0_0 = arith.constant 0 : index
    %c0_1 = arith.constant 0 : index
    %0 = vector.load %arg1[%c0, %c0_0, %c0_1] : memref<1x256x128xf32, #tpu.memory_space<vmem>>, vector<1x256x128xf32>
    %1 = vector.shape_cast %0 : vector<1x256x128xf32> to vector<256x128xf32>
    %c0_2 = arith.constant 0 : index
    %c0_3 = arith.constant 0 : index
    %2 = vector.load %arg2[%c0_2, %c0_3] : memref<1x128xf32, #tpu.memory_space<vmem>>, vector<1x128xf32>
    %3 = vector.broadcast %2 : vector<1x128xf32> to vector<256x128xf32>
    %4 = arith.mulf %1, %3 : vector<256x128xf32>
    %c0_4 = arith.constant 0 : index
    %c0_5 = arith.constant 0 : index
    %5 = vector.load %arg3[%c0_4, %c0_5] : memref<1x128xf32, #tpu.memory_space<vmem>>, vector<1x128xf32>
    %6 = vector.broadcast %5 : vector<1x128xf32> to vector<256x128xf32>
    %7 = arith.addf %4, %6 : vector<256x128xf32>
    %cst = arith.constant 0.000000e+00 : f32
    %8 = vector.broadcast %cst : f32 to vector<256x128xf32>
    %9 = arith.maximumf %7, %8 : vector<256x128xf32>
    %10 = tpu.iota {dimensions = array<i32: 1>} : vector<16x16x128xi32>
    %11 = vector.shape_cast %10 : vector<16x16x128xi32> to vector<256x128xi32>
    %cst_6 = arith.constant 0.000000e+00 : f32
    %12 = vector.broadcast %cst_6 : f32 to vector<16x128xf32>
    %c1_i32 = arith.constant 1 : i32
    %13 = tpu.dynamic_rotate %9 by %c1_i32 dim 0 : vector<256x128xf32>, i32 -> vector<256x128xf32>
    %c0_i32 = arith.constant 0 : i32
    %14 = vector.broadcast %c0_i32 : i32 to vector<256x128xi32>
    %15 = arith.cmpi eq, %11, %14 : vector<256x128xi32>
    %cst_7 = arith.constant 0.000000e+00 : f32
    %16 = vector.broadcast %cst_7 : f32 to vector<256x128xf32>
    %17 = arith.select %15, %16, %13 : vector<256x128xi1>, vector<256x128xf32>
    %18 = vector.extract_strided_slice %17 {offsets = [0, 0], sizes = [240, 128], strides = [1, 1]} : vector<256x128xf32> to vector<240x128xf32>
    %19 = tpu.concatenate %12, %18 in 0 : vector<16x128xf32>, vector<240x128xf32> -> vector<256x128xf32>
    %20 = vector.extract_strided_slice %9 {offsets = [0, 0], sizes = [240, 128], strides = [1, 1]} : vector<256x128xf32> to vector<240x128xf32>
    %21 = tpu.concatenate %12, %20 in 0 : vector<16x128xf32>, vector<240x128xf32> -> vector<256x128xf32>
    %c255_i32 = arith.constant 255 : i32
    %22 = tpu.dynamic_rotate %9 by %c255_i32 dim 0 : vector<256x128xf32>, i32 -> vector<256x128xf32>
    %c15_i32 = arith.constant 15 : i32
    %23 = vector.broadcast %c15_i32 : i32 to vector<256x128xi32>
    %24 = arith.cmpi eq, %11, %23 : vector<256x128xi32>
    %cst_8 = arith.constant 0.000000e+00 : f32
    %25 = vector.broadcast %cst_8 : f32 to vector<256x128xf32>
    %26 = arith.select %24, %25, %22 : vector<256x128xi1>, vector<256x128xf32>
    %27 = vector.extract_strided_slice %26 {offsets = [0, 0], sizes = [240, 128], strides = [1, 1]} : vector<256x128xf32> to vector<240x128xf32>
    %28 = tpu.concatenate %12, %27 in 0 : vector<16x128xf32>, vector<240x128xf32> -> vector<256x128xf32>
    %c1_i32_9 = arith.constant 1 : i32
    %29 = tpu.dynamic_rotate %9 by %c1_i32_9 dim 0 : vector<256x128xf32>, i32 -> vector<256x128xf32>
    %c0_i32_10 = arith.constant 0 : i32
    %30 = vector.broadcast %c0_i32_10 : i32 to vector<256x128xi32>
    %31 = arith.cmpi eq, %11, %30 : vector<256x128xi32>
    %cst_11 = arith.constant 0.000000e+00 : f32
    %32 = vector.broadcast %cst_11 : f32 to vector<256x128xf32>
    %33 = arith.select %31, %32, %29 : vector<256x128xi1>, vector<256x128xf32>
    %c255_i32_12 = arith.constant 255 : i32
    %34 = tpu.dynamic_rotate %9 by %c255_i32_12 dim 0 : vector<256x128xf32>, i32 -> vector<256x128xf32>
    %c15_i32_13 = arith.constant 15 : i32
    %35 = vector.broadcast %c15_i32_13 : i32 to vector<256x128xi32>
    %36 = arith.cmpi eq, %11, %35 : vector<256x128xi32>
    %cst_14 = arith.constant 0.000000e+00 : f32
    %37 = vector.broadcast %cst_14 : f32 to vector<256x128xf32>
    %38 = arith.select %36, %37, %34 : vector<256x128xi1>, vector<256x128xf32>
    %c1_i32_15 = arith.constant 1 : i32
    %39 = tpu.dynamic_rotate %9 by %c1_i32_15 dim 0 : vector<256x128xf32>, i32 -> vector<256x128xf32>
    %c0_i32_16 = arith.constant 0 : i32
    %40 = vector.broadcast %c0_i32_16 : i32 to vector<256x128xi32>
    %41 = arith.cmpi eq, %11, %40 : vector<256x128xi32>
    %cst_17 = arith.constant 0.000000e+00 : f32
    %42 = vector.broadcast %cst_17 : f32 to vector<256x128xf32>
    %43 = arith.select %41, %42, %39 : vector<256x128xi1>, vector<256x128xf32>
    %44 = vector.extract_strided_slice %43 {offsets = [16, 0], sizes = [240, 128], strides = [1, 1]} : vector<256x128xf32> to vector<240x128xf32>
    %45 = tpu.concatenate %44, %12 in 0 : vector<240x128xf32>, vector<16x128xf32> -> vector<256x128xf32>
    %46 = vector.extract_strided_slice %9 {offsets = [16, 0], sizes = [240, 128], strides = [1, 1]} : vector<256x128xf32> to vector<240x128xf32>
    %47 = tpu.concatenate %46, %12 in 0 : vector<240x128xf32>, vector<16x128xf32> -> vector<256x128xf32>
    %c255_i32_18 = arith.constant 255 : i32
    %48 = tpu.dynamic_rotate %9 by %c255_i32_18 dim 0 : vector<256x128xf32>, i32 -> vector<256x128xf32>
    %c15_i32_19 = arith.constant 15 : i32
    %49 = vector.broadcast %c15_i32_19 : i32 to vector<256x128xi32>
    %50 = arith.cmpi eq, %11, %49 : vector<256x128xi32>
    %cst_20 = arith.constant 0.000000e+00 : f32
    %51 = vector.broadcast %cst_20 : f32 to vector<256x128xf32>
    %52 = arith.select %50, %51, %48 : vector<256x128xi1>, vector<256x128xf32>
    %53 = vector.extract_strided_slice %52 {offsets = [16, 0], sizes = [240, 128], strides = [1, 1]} : vector<256x128xf32> to vector<240x128xf32>
    %54 = tpu.concatenate %53, %12 in 0 : vector<240x128xf32>, vector<16x128xf32> -> vector<256x128xf32>
    %55 = tpu.concatenate %19, %21, %28, %33, %9, %38, %45, %47, %54 in 1 : vector<256x128xf32>, vector<256x128xf32>, vector<256x128xf32>, vector<256x128xf32>, vector<256x128xf32>, vector<256x128xf32>, vector<256x128xf32>, vector<256x128xf32>, vector<256x128xf32> -> vector<256x1152xf32>
    %56 = arith.truncf %55 : vector<256x1152xf32> to vector<256x1152xbf16>
    %c0_21 = arith.constant 0 : index
    %c0_22 = arith.constant 0 : index
    %57 = vector.load %arg4[%c0_21, %c0_22] : memref<1152x128xbf16, #tpu.memory_space<vmem>>, vector<1152x128xbf16>
    %cst_23 = arith.constant dense<0.000000e+00> : vector<256x128xf32>
    %58 = tpu.matmul %56, %57, %cst_23 {dimension_numbers = #tpu.dot_dimension_numbers<[1], [0], [0], [1], [0, 0, 1, 1], [], []>} : vector<256x1152xbf16>, vector<1152x128xbf16>, vector<256x128xf32> -> vector<256x128xf32>
    %c0_24 = arith.constant 0 : index
    %c0_25 = arith.constant 0 : index
    %59 = vector.load %arg5[%c0_24, %c0_25] : memref<1x128xf32, #tpu.memory_space<vmem>>, vector<1x128xf32>
    %60 = vector.broadcast %59 : vector<1x128xf32> to vector<256x128xf32>
    %61 = arith.addf %58, %60 : vector<256x128xf32>
    %62 = vector.shape_cast %61 : vector<256x128xf32> to vector<1x256x128xf32>
    %c0_26 = arith.constant 0 : index
    %c0_27 = arith.constant 0 : index
    %c0_28 = arith.constant 0 : index
    %63 = vector.load %arg6[%c0_26, %c0_27, %c0_28] : memref<1x256x128xf32, #tpu.memory_space<vmem>>, vector<1x256x128xf32>
    tpu.vector_store %arg6[%c0_26, %c0_27, %c0_28], %62 {strides = array<i32>} : memref<1x256x128xf32, #tpu.memory_space<vmem>>, vector<1x256x128xf32>,
    %64 = vector.shape_cast %61 : vector<256x128xf32> to vector<32x8x128xf32>
    %cst_29 = arith.constant dense<0.000000e+00> : vector<8x128xf32>
    %65 = vector.multi_reduction <add>, %64, %cst_29 [0] : vector<32x8x128xf32> to vector<8x128xf32>
    %c0_30 = arith.constant 0 : index
    %c0_31 = arith.constant 0 : index
    %66 = vector.load %arg7[%c0_30, %c0_31] : memref<8x128xf32, #tpu.memory_space<vmem>>, vector<8x128xf32>
    tpu.vector_store %arg7[%c0_30, %c0_31], %65 {strides = array<i32>} : memref<8x128xf32, #tpu.memory_space<vmem>>, vector<8x128xf32>,
    %67 = arith.mulf %64, %64 : vector<32x8x128xf32>
    %cst_32 = arith.constant dense<0.000000e+00> : vector<8x128xf32>
    %68 = vector.multi_reduction <add>, %67, %cst_32 [0] : vector<32x8x128xf32> to vector<8x128xf32>
    %c0_33 = arith.constant 0 : index
    %c0_34 = arith.constant 0 : index
    %69 = vector.load %arg8[%c0_33, %c0_34] : memref<8x128xf32, #tpu.memory_space<vmem>>, vector<8x128xf32>
    tpu.vector_store %arg8[%c0_33, %c0_34], %68 {strides = array<i32>} : memref<8x128xf32, #tpu.memory_space<vmem>>, vector<8x128xf32>,
    return
  }
  func.func @transform_0(%arg0: i32) -> (i32, i32, i32) {
    %c0_i32 = arith.constant 0 : i32
    %c0_i32_0 = arith.constant 0 : i32
    %c0_i32_1 = arith.constant 0 : i32
    return %arg0, %c0_i32, %c0_i32_0 : i32, i32, i32
  }
  func.func @transform_1(%arg0: i32) -> (i32, i32) {
    %c0_i32 = arith.constant 0 : i32
    %c0_i32_0 = arith.constant 0 : i32
    %c0_i32_1 = arith.constant 0 : i32
    return %c0_i32, %c0_i32_0 : i32, i32
  }
  func.func @transform_2(%arg0: i32) -> (i32, i32) {
    %c0_i32 = arith.constant 0 : i32
    %c0_i32_0 = arith.constant 0 : i32
    %c0_i32_1 = arith.constant 0 : i32
    return %c0_i32, %c0_i32_0 : i32, i32
  }
  func.func @transform_3(%arg0: i32) -> (i32, i32) {
    %c0_i32 = arith.constant 0 : i32
    %c0_i32_0 = arith.constant 0 : i32
    %c0_i32_1 = arith.constant 0 : i32
    return %c0_i32, %c0_i32_0 : i32, i32
  }
  func.func @transform_4(%arg0: i32) -> (i32, i32) {
    %c0_i32 = arith.constant 0 : i32
    %c0_i32_0 = arith.constant 0 : i32
    %c0_i32_1 = arith.constant 0 : i32
    return %c0_i32, %c0_i32_0 : i32, i32
  }
  func.func @transform_5(%arg0: i32) -> (i32, i32, i32) {
    %c0_i32 = arith.constant 0 : i32
    %c0_i32_0 = arith.constant 0 : i32
    %c0_i32_1 = arith.constant 0 : i32
    return %arg0, %c0_i32, %c0_i32_0 : i32, i32, i32
  }
  func.func @transform_6(%arg0: i32) -> (i32, i32) {
    %c0_i32 = arith.constant 0 : i32
    %c0_i32_0 = arith.constant 0 : i32
    return %arg0, %c0_i32 : i32, i32
  }
  func.func @transform_7(%arg0: i32) -> (i32, i32) {
    %c0_i32 = arith.constant 0 : i32
    %c0_i32_0 = arith.constant 0 : i32
    return %arg0, %c0_i32 : i32, i32
  }
}

module attributes {stable_mosaic.version = 11 : i64} {
  func.func @_conv3x3_kernel(%arg0: i32, %arg1: memref<1x256x128xf32, #tpu.memory_space<vmem>>, %arg2: memref<1x128xf32, #tpu.memory_space<vmem>>, %arg3: memref<1x128xf32, #tpu.memory_space<vmem>>, %arg4: memref<1152x128xbf16, #tpu.memory_space<vmem>>, %arg5: memref<1x128xf32, #tpu.memory_space<vmem>>, %arg6: memref<1x256x128xf32, #tpu.memory_space<vmem>>, %arg7: memref<8x128xf32, #tpu.memory_space<vmem>>, %arg8: memref<8x128xf32, #tpu.memory_space<vmem>>) attributes {dimension_semantics = [#tpu.dimension_semantics<parallel>], iteration_bounds = array<i64: 2>, scalar_prefetch = 0 : i64, scratch_operands = 0 : i64, tpu.core_type = #tpu.core_type<tc>, window_params = [{transform_indices = @transform_0, window_bounds = array<i64: 1, 256, 128>}, {pipeline_mode = #tpu.pipeline_mode<synchronous>, transform_indices = @transform_1, window_bounds = array<i64: 1, 128>}, {pipeline_mode = #tpu.pipeline_mode<synchronous>, transform_indices = @transform_2, window_bounds = array<i64: 1, 128>}, {pipeline_mode = #tpu.pipeline_mode<synchronous>, transform_indices = @transform_3, window_bounds = array<i64: 1152, 128>}, {pipeline_mode = #tpu.pipeline_mode<synchronous>, transform_indices = @transform_4, window_bounds = array<i64: 1, 128>}, {transform_indices = @transform_5, window_bounds = array<i64: 1, 256, 128>}, {transform_indices = @transform_6, window_bounds = array<i64: 8, 128>}, {transform_indices = @transform_7, window_bounds = array<i64: 8, 128>}]} {
    %c0 = arith.constant 0 : index
    %c0_0 = arith.constant 0 : index
    %c0_1 = arith.constant 0 : index
    %0 = vector.load %arg1[%c0, %c0_0, %c0_1] : memref<1x256x128xf32, #tpu.memory_space<vmem>>, vector<1x256x128xf32>
    %1 = vector.shape_cast %0 : vector<1x256x128xf32> to vector<256x128xf32>
    %c0_2 = arith.constant 0 : index
    %c0_3 = arith.constant 0 : index
    %2 = vector.load %arg2[%c0_2, %c0_3] : memref<1x128xf32, #tpu.memory_space<vmem>>, vector<1x128xf32>
    %3 = vector.broadcast %2 : vector<1x128xf32> to vector<256x128xf32>
    %4 = arith.mulf %1, %3 : vector<256x128xf32>
    %c0_4 = arith.constant 0 : index
    %c0_5 = arith.constant 0 : index
    %5 = vector.load %arg3[%c0_4, %c0_5] : memref<1x128xf32, #tpu.memory_space<vmem>>, vector<1x128xf32>
    %6 = vector.broadcast %5 : vector<1x128xf32> to vector<256x128xf32>
    %7 = arith.addf %4, %6 : vector<256x128xf32>
    %cst = arith.constant 0.000000e+00 : f32
    %8 = vector.broadcast %cst : f32 to vector<256x128xf32>
    %9 = arith.maximumf %7, %8 : vector<256x128xf32>
    %10 = tpu.iota {dimensions = array<i32: 1>} : vector<16x16x128xi32>
    %11 = vector.shape_cast %10 : vector<16x16x128xi32> to vector<256x128xi32>
    %cst_6 = arith.constant 0.000000e+00 : f32
    %12 = vector.broadcast %cst_6 : f32 to vector<16x128xf32>
    %c1_i32 = arith.constant 1 : i32
    %13 = tpu.dynamic_rotate %9 by %c1_i32 dim 0 : vector<256x128xf32>, i32 -> vector<256x128xf32>
    %c0_i32 = arith.constant 0 : i32
    %14 = vector.broadcast %c0_i32 : i32 to vector<256x128xi32>
    %15 = arith.cmpi eq, %11, %14 : vector<256x128xi32>
    %cst_7 = arith.constant 0.000000e+00 : f32
    %16 = vector.broadcast %cst_7 : f32 to vector<256x128xf32>
    %17 = arith.select %15, %16, %13 : vector<256x128xi1>, vector<256x128xf32>
    %18 = vector.extract_strided_slice %17 {offsets = [0, 0], sizes = [240, 128], strides = [1, 1]} : vector<256x128xf32> to vector<240x128xf32>
    %19 = tpu.concatenate %12, %18 in 0 : vector<16x128xf32>, vector<240x128xf32> -> vector<256x128xf32>
    %20 = vector.extract_strided_slice %9 {offsets = [0, 0], sizes = [240, 128], strides = [1, 1]} : vector<256x128xf32> to vector<240x128xf32>
    %21 = tpu.concatenate %12, %20 in 0 : vector<16x128xf32>, vector<240x128xf32> -> vector<256x128xf32>
    %c255_i32 = arith.constant 255 : i32
    %22 = tpu.dynamic_rotate %9 by %c255_i32 dim 0 : vector<256x128xf32>, i32 -> vector<256x128xf32>
    %c15_i32 = arith.constant 15 : i32
    %23 = vector.broadcast %c15_i32 : i32 to vector<256x128xi32>
    %24 = arith.cmpi eq, %11, %23 : vector<256x128xi32>
    %cst_8 = arith.constant 0.000000e+00 : f32
    %25 = vector.broadcast %cst_8 : f32 to vector<256x128xf32>
    %26 = arith.select %24, %25, %22 : vector<256x128xi1>, vector<256x128xf32>
    %27 = vector.extract_strided_slice %26 {offsets = [0, 0], sizes = [240, 128], strides = [1, 1]} : vector<256x128xf32> to vector<240x128xf32>
    %28 = tpu.concatenate %12, %27 in 0 : vector<16x128xf32>, vector<240x128xf32> -> vector<256x128xf32>
    %c1_i32_9 = arith.constant 1 : i32
    %29 = tpu.dynamic_rotate %9 by %c1_i32_9 dim 0 : vector<256x128xf32>, i32 -> vector<256x128xf32>
    %c0_i32_10 = arith.constant 0 : i32
    %30 = vector.broadcast %c0_i32_10 : i32 to vector<256x128xi32>
    %31 = arith.cmpi eq, %11, %30 : vector<256x128xi32>
    %cst_11 = arith.constant 0.000000e+00 : f32
    %32 = vector.broadcast %cst_11 : f32 to vector<256x128xf32>
    %33 = arith.select %31, %32, %29 : vector<256x128xi1>, vector<256x128xf32>
    %c255_i32_12 = arith.constant 255 : i32
    %34 = tpu.dynamic_rotate %9 by %c255_i32_12 dim 0 : vector<256x128xf32>, i32 -> vector<256x128xf32>
    %c15_i32_13 = arith.constant 15 : i32
    %35 = vector.broadcast %c15_i32_13 : i32 to vector<256x128xi32>
    %36 = arith.cmpi eq, %11, %35 : vector<256x128xi32>
    %cst_14 = arith.constant 0.000000e+00 : f32
    %37 = vector.broadcast %cst_14 : f32 to vector<256x128xf32>
    %38 = arith.select %36, %37, %34 : vector<256x128xi1>, vector<256x128xf32>
    %c1_i32_15 = arith.constant 1 : i32
    %39 = tpu.dynamic_rotate %9 by %c1_i32_15 dim 0 : vector<256x128xf32>, i32 -> vector<256x128xf32>
    %c0_i32_16 = arith.constant 0 : i32
    %40 = vector.broadcast %c0_i32_16 : i32 to vector<256x128xi32>
    %41 = arith.cmpi eq, %11, %40 : vector<256x128xi32>
    %cst_17 = arith.constant 0.000000e+00 : f32
    %42 = vector.broadcast %cst_17 : f32 to vector<256x128xf32>
    %43 = arith.select %41, %42, %39 : vector<256x128xi1>, vector<256x128xf32>
    %44 = vector.extract_strided_slice %43 {offsets = [16, 0], sizes = [240, 128], strides = [1, 1]} : vector<256x128xf32> to vector<240x128xf32>
    %45 = tpu.concatenate %44, %12 in 0 : vector<240x128xf32>, vector<16x128xf32> -> vector<256x128xf32>
    %46 = vector.extract_strided_slice %9 {offsets = [16, 0], sizes = [240, 128], strides = [1, 1]} : vector<256x128xf32> to vector<240x128xf32>
    %47 = tpu.concatenate %46, %12 in 0 : vector<240x128xf32>, vector<16x128xf32> -> vector<256x128xf32>
    %c255_i32_18 = arith.constant 255 : i32
    %48 = tpu.dynamic_rotate %9 by %c255_i32_18 dim 0 : vector<256x128xf32>, i32 -> vector<256x128xf32>
    %c15_i32_19 = arith.constant 15 : i32
    %49 = vector.broadcast %c15_i32_19 : i32 to vector<256x128xi32>
    %50 = arith.cmpi eq, %11, %49 : vector<256x128xi32>
    %cst_20 = arith.constant 0.000000e+00 : f32
    %51 = vector.broadcast %cst_20 : f32 to vector<256x128xf32>
    %52 = arith.select %50, %51, %48 : vector<256x128xi1>, vector<256x128xf32>
    %53 = vector.extract_strided_slice %52 {offsets = [16, 0], sizes = [240, 128], strides = [1, 1]} : vector<256x128xf32> to vector<240x128xf32>
    %54 = tpu.concatenate %53, %12 in 0 : vector<240x128xf32>, vector<16x128xf32> -> vector<256x128xf32>
    %55 = tpu.concatenate %19, %21, %28, %33, %9, %38, %45, %47, %54 in 1 : vector<256x128xf32>, vector<256x128xf32>, vector<256x128xf32>, vector<256x128xf32>, vector<256x128xf32>, vector<256x128xf32>, vector<256x128xf32>, vector<256x128xf32>, vector<256x128xf32> -> vector<256x1152xf32>
    %56 = arith.truncf %55 : vector<256x1152xf32> to vector<256x1152xbf16>
    %c0_21 = arith.constant 0 : index
    %c0_22 = arith.constant 0 : index
    %57 = vector.load %arg4[%c0_21, %c0_22] : memref<1152x128xbf16, #tpu.memory_space<vmem>>, vector<1152x128xbf16>
    %cst_23 = arith.constant dense<0.000000e+00> : vector<256x128xf32>
    %58 = tpu.matmul %56, %57, %cst_23 {dimension_numbers = #tpu.dot_dimension_numbers<[1], [0], [0], [1], [0, 0, 1, 1], [], []>} : vector<256x1152xbf16>, vector<1152x128xbf16>, vector<256x128xf32> -> vector<256x128xf32>
    %c0_24 = arith.constant 0 : index
    %c0_25 = arith.constant 0 : index
    %59 = vector.load %arg5[%c0_24, %c0_25] : memref<1x128xf32, #tpu.memory_space<vmem>>, vector<1x128xf32>
    %60 = vector.broadcast %59 : vector<1x128xf32> to vector<256x128xf32>
    %61 = arith.addf %58, %60 : vector<256x128xf32>
    %62 = vector.shape_cast %61 : vector<256x128xf32> to vector<1x256x128xf32>
    %c0_26 = arith.constant 0 : index
    %c0_27 = arith.constant 0 : index
    %c0_28 = arith.constant 0 : index
    %63 = vector.load %arg6[%c0_26, %c0_27, %c0_28] : memref<1x256x128xf32, #tpu.memory_space<vmem>>, vector<1x256x128xf32>
    tpu.vector_store %arg6[%c0_26, %c0_27, %c0_28], %62 {strides = array<i32>} : memref<1x256x128xf32, #tpu.memory_space<vmem>>, vector<1x256x128xf32>,
    %64 = vector.shape_cast %61 : vector<256x128xf32> to vector<32x8x128xf32>
    %cst_29 = arith.constant dense<0.000000e+00> : vector<8x128xf32>
    %65 = vector.multi_reduction <add>, %64, %cst_29 [0] : vector<32x8x128xf32> to vector<8x128xf32>
    %c0_30 = arith.constant 0 : index
    %c0_31 = arith.constant 0 : index
    %66 = vector.load %arg7[%c0_30, %c0_31] : memref<8x128xf32, #tpu.memory_space<vmem>>, vector<8x128xf32>
    tpu.vector_store %arg7[%c0_30, %c0_31], %65 {strides = array<i32>} : memref<8x128xf32, #tpu.memory_space<vmem>>, vector<8x128xf32>,
    %67 = arith.mulf %64, %64 : vector<32x8x128xf32>
    %cst_32 = arith.constant dense<0.000000e+00> : vector<8x128xf32>
    %68 = vector.multi_reduction <add>, %67, %cst_32 [0] : vector<32x8x128xf32> to vector<8x128xf32>
    %c0_33 = arith.constant 0 : index
    %c0_34 = arith.constant 0 : index
    %69 = vector.load %arg8[%c0_33, %c0_34] : memref<8x128xf32, #tpu.memory_space<vmem>>, vector<8x128xf32>
    tpu.vector_store %arg8[%c0_33, %c0_34], %68 {strides = array<i32>} : memref<8x128xf32, #tpu.memory_space<vmem>>, vector<8x128xf32>,
    return
  }
  func.func @transform_0(%arg0: i32) -> (i32, i32, i32) {
    %c0_i32 = arith.constant 0 : i32
    %c0_i32_0 = arith.constant 0 : i32
    %c0_i32_1 = arith.constant 0 : i32
    return %arg0, %c0_i32, %c0_i32_0 : i32, i32, i32
  }
  func.func @transform_1(%arg0: i32) -> (i32, i32) {
    %c0_i32 = arith.constant 0 : i32
    %c0_i32_0 = arith.constant 0 : i32
    %c0_i32_1 = arith.constant 0 : i32
    return %c0_i32, %c0_i32_0 : i32, i32
  }
  func.func @transform_2(%arg0: i32) -> (i32, i32) {
    %c0_i32 = arith.constant 0 : i32
    %c0_i32_0 = arith.constant 0 : i32
    %c0_i32_1 = arith.constant 0 : i32
    return %c0_i32, %c0_i32_0 : i32, i32
  }
  func.func @transform_3(%arg0: i32) -> (i32, i32) {
    %c0_i32 = arith.constant 0 : i32
    %c0_i32_0 = arith.constant 0 : i32
    %c0_i32_1 = arith.constant 0 : i32
    return %c0_i32, %c0_i32_0 : i32, i32
  }
  func.func @transform_4(%arg0: i32) -> (i32, i32) {
    %c0_i32 = arith.constant 0 : i32
    %c0_i32_0 = arith.constant 0 : i32
    %c0_i32_1 = arith.constant 0 : i32
    return %c0_i32, %c0_i32_0 : i32, i32
  }
  func.func @transform_5(%arg0: i32) -> (i32, i32, i32) {
    %c0_i32 = arith.constant 0 : i32
    %c0_i32_0 = arith.constant 0 : i32
    %c0_i32_1 = arith.constant 0 : i32
    return %arg0, %c0_i32, %c0_i32_0 : i32, i32, i32
  }
  func.func @transform_6(%arg0: i32) -> (i32, i32) {
    %c0_i32 = arith.constant 0 : i32
    %c0_i32_0 = arith.constant 0 : i32
    return %arg0, %c0_i32 : i32, i32
  }
  func.func @transform_7(%arg0: i32) -> (i32, i32) {
    %c0_i32 = arith.constant 0 : i32
    %c0_i32_0 = arith.constant 0 : i32
    return %arg0, %c0_i32 : i32, i32
  }
}

</mosaic_0001>

<llo_original>
// kernel: dense_block_forward.4
$region0: #{dense_block_forward.4}
  #allocation0 [shape = 'u32[]', space=smem, size = 0x4, offset = 0x4, fixed_abs, tag = 'smem constant byte address 0x4 - core index']
  #allocation1 [shape = 'u32[144,128]{1,0:T(1,128)}', space=vmem, size = 0x12000, scoped, tag = 'internal scratch']
  %s0 = inlined_call_operand.vmem [shape: f32[512,128], index: 0, kind: input, shape index: {}]
  %s1 = inlined_call_operand.vmem [shape: f32[1,128], index: 1, kind: input, shape index: {}]
  %s2 = inlined_call_operand.vmem [shape: f32[1,128], index: 2, kind: input, shape index: {}]
  %s3 = inlined_call_operand.vmem [shape: bf16[128,128], index: 3, kind: input, shape index: {}]
  %s4 = inlined_call_operand.vmem [shape: f32[1,128], index: 4, kind: input, shape index: {}]
  %s5 = inlined_call_operand.vmem [shape: f32[512,128], index: 5, kind: output, shape index: {0}]
  %s6 = inlined_call_operand.vmem [shape: f32[8,128], index: 6, kind: output, shape index: {1}]
  %s7 = inlined_call_operand.vmem [shape: f32[8,128], index: 7, kind: output, shape index: {2}]
  %8 = xla_tuple %s5, %s6, %s7
  %s9 = sld [smem:[#allocation0]]
  $region46: #{dense_block_forward.4} parent=0
    _
  %s11 = ssub.s32 1, %s9
  %s12 = scalar_select 0, %s11, %s9
  // Predicated region
  $region2: #{dense_block_forward.4} parent=0 // pred_check
    _
  $region3: #{dense_block_forward.4} parent=0 // pred_check_branch
    %14 = sbr.rel (0) target = $region5
  $region4: #{dense_block_forward.4} parent=0 // pred_region
    _
  $region5: #{dense_block_forward.4} parent=0 // pred_fallthru
    _
  // Predicated region
  $region6: #{dense_block_forward.4} parent=0 // pred_check
    _
  $region7: #{dense_block_forward.4} parent=0 // pred_check_branch
    %16 = sbr.rel (0) target = $region9
  $region8: #{dense_block_forward.4} parent=0 // pred_region
    _
  $region9: #{dense_block_forward.4} parent=0 // pred_fallthru
    _
  // Predicated region
  $region10: #{dense_block_forward.4} parent=0 // pred_check
    _
  $region11: #{dense_block_forward.4} parent=0 // pred_check_branch
    %18 = sbr.rel (0) target = $region13
  $region12: #{dense_block_forward.4} parent=0 // pred_region
    _
  $region13: #{dense_block_forward.4} parent=0 // pred_fallthru
    _
  // Predicated region
  $region14: #{dense_block_forward.4} parent=0 // pred_check
    _
  $region15: #{dense_block_forward.4} parent=0 // pred_check_branch
    %20 = sbr.rel (0) target = $region17
  $region16: #{dense_block_forward.4} parent=0 // pred_region
    _
  $region17: #{dense_block_forward.4} parent=0 // pred_fallthru
    _
  // Predicated region
  $region18: #{dense_block_forward.4} parent=0 // pred_check
    _
  $region19: #{dense_block_forward.4} parent=0 // pred_check_branch
    %22 = sbr.rel (0) target = $region21
  $region20: #{dense_block_forward.4} parent=0 // pred_region
    _
  $region21: #{dense_block_forward.4} parent=0 // pred_fallthru
    _
  %v24 = vld [vmem:[%s0] sm:$0xff]
  %v25 = vld [vmem:[%s0 + $0x8] sm:$0xff]
  %v26 = vld [vmem:[%s0 + $0x10] sm:$0xff]
  %v27 = vld [vmem:[%s0 + $0x18] sm:$0xff]
  %v28 = vld [vmem:[%s0 + $0x20] sm:$0xff]
  %v29 = vld [vmem:[%s0 + $0x28] sm:$0xff]
  %v30 = vld [vmem:[%s0 + $0x30] sm:$0xff]
  %v31 = vld [vmem:[%s0 + $0x38] sm:$0xff]
  %v32 = vld [vmem:[%s0 + $0x40] sm:$0xff]
  %v33 = vld [vmem:[%s0 + $0x48] sm:$0xff]
  %v34 = vld [vmem:[%s0 + $0x50] sm:$0xff]
  %v35 = vld [vmem:[%s0 + $0x58] sm:$0xff]
  %v36 = vld [vmem:[%s0 + $0x60] sm:$0xff]
  %v37 = vld [vmem:[%s0 + $0x68] sm:$0xff]
  %v38 = vld [vmem:[%s0 + $0x70] sm:$0xff]
  %v39 = vld [vmem:[%s0 + $0x78] sm:$0xff]
  %v40 = vld [vmem:[%s0 + $0x80] sm:$0xff]
  %v41 = vld [vmem:[%s0 + $0x88] sm:$0xff]
  %v42 = vld [vmem:[%s0 + $0x90] sm:$0xff]
  %v43 = vld [vmem:[%s0 + $0x98] sm:$0xff]
  %v44 = vld [vmem:[%s0 + $0xa0] sm:$0xff]
  %v45 = vld [vmem:[%s0 + $0xa8] sm:$0xff]
  %v46 = vld [vmem:[%s0 + $0xb0] sm:$0xff]
  %v47 = vld [vmem:[%s0 + $0xb8] sm:$0xff]
  %v48 = vld [vmem:[%s0 + $0xc0] sm:$0xff]
  %v49 = vld [vmem:[%s0 + $0xc8] sm:$0xff]
  %v50 = vld [vmem:[%s0 + $0xd0] sm:$0xff]
  %v51 = vld [vmem:[%s0 + $0xd8] sm:$0xff]
  %v52 = vld [vmem:[%s0 + $0xe0] sm:$0xff]
  %v53 = vld [vmem:[%s0 + $0xe8] sm:$0xff]
  %v54 = vld [vmem:[%s0 + $0xf0] sm:$0xff]
  %v55 = vld [vmem:[%s0 + $0xf8] sm:$0xff]
  %v56 = vld [vmem:[%s0 + $0x100] sm:$0xff]
  %v57 = vld [vmem:[%s0 + $0x108] sm:$0xff]
  %v58 = vld [vmem:[%s0 + $0x110] sm:$0xff]
  %v59 = vld [vmem:[%s0 + $0x118] sm:$0xff]
  %v60 = vld [vmem:[%s0 + $0x120] sm:$0xff]
  %v61 = vld [vmem:[%s0 + $0x128] sm:$0xff]
  %v62 = vld [vmem:[%s0 + $0x130] sm:$0xff]
  %v63 = vld [vmem:[%s0 + $0x138] sm:$0xff]
  %v64 = vld [vmem:[%s0 + $0x140] sm:$0xff]
  %v65 = vld [vmem:[%s0 + $0x148] sm:$0xff]
  %v66 = vld [vmem:[%s0 + $0x150] sm:$0xff]
  %v67 = vld [vmem:[%s0 + $0x158] sm:$0xff]
  %v68 = vld [vmem:[%s0 + $0x160] sm:$0xff]
  %v69 = vld [vmem:[%s0 + $0x168] sm:$0xff]
  %v70 = vld [vmem:[%s0 + $0x170] sm:$0xff]
  %v71 = vld [vmem:[%s0 + $0x178] sm:$0xff]
  %v72 = vld [vmem:[%s0 + $0x180] sm:$0xff]
  %v73 = vld [vmem:[%s0 + $0x188] sm:$0xff]
  %v74 = vld [vmem:[%s0 + $0x190] sm:$0xff]
  %v75 = vld [vmem:[%s0 + $0x198] sm:$0xff]
  %v76 = vld [vmem:[%s0 + $0x1a0] sm:$0xff]
  %v77 = vld [vmem:[%s0 + $0x1a8] sm:$0xff]
  %v78 = vld [vmem:[%s0 + $0x1b0] sm:$0xff]
  %v79 = vld [vmem:[%s0 + $0x1b8] sm:$0xff]
  %v80 = vld [vmem:[%s0 + $0x1c0] sm:$0xff]
  %v81 = vld [vmem:[%s0 + $0x1c8] sm:$0xff]
  %v82 = vld [vmem:[%s0 + $0x1d0] sm:$0xff]
  %v83 = vld [vmem:[%s0 + $0x1d8] sm:$0xff]
  %v84 = vld [vmem:[%s0 + $0x1e0] sm:$0xff]
  %v85 = vld [vmem:[%s0 + $0x1e8] sm:$0xff]
  %v86 = vld [vmem:[%s0 + $0x1f0] sm:$0xff]
  %v87 = vld [vmem:[%s0 + $0x1f8] sm:$0xff]
  %v88 = vld [vmem:[%s1] sm:$0x1]
  %v90 = vlaneseq
  %v91 = vshrl.u32 %v90, 7
  %v92 = vsub.s32 0, %v91
  %v93 = vrot.slane %v88, %v92
  %v95 = vmul.f32 %v24, %v93
  %v96 = vmul.f32 %v25, %v93
  %v97 = vmul.f32 %v26, %v93
  %v98 = vmul.f32 %v27, %v93
  %v99 = vmul.f32 %v28, %v93
  %v100 = vmul.f32 %v29, %v93
  %v101 = vmul.f32 %v30, %v93
  %v102 = vmul.f32 %v31, %v93
  %v103 = vmul.f32 %v32, %v93
  %v104 = vmul.f32 %v33, %v93
  %v105 = vmul.f32 %v34, %v93
  %v106 = vmul.f32 %v35, %v93
  %v107 = vmul.f32 %v36, %v93
  %v108 = vmul.f32 %v37, %v93
  %v109 = vmul.f32 %v38, %v93
  %v110 = vmul.f32 %v39, %v93
  %v111 = vmul.f32 %v40, %v93
  %v112 = vmul.f32 %v41, %v93
  %v113 = vmul.f32 %v42, %v93
  %v114 = vmul.f32 %v43, %v93
  %v115 = vmul.f32 %v44, %v93
  %v116 = vmul.f32 %v45, %v93
  %v117 = vmul.f32 %v46, %v93
  %v118 = vmul.f32 %v47, %v93
  %v119 = vmul.f32 %v48, %v93
  %v120 = vmul.f32 %v49, %v93
  %v121 = vmul.f32 %v50, %v93
  %v122 = vmul.f32 %v51, %v93
  %v123 = vmul.f32 %v52, %v93
  %v124 = vmul.f32 %v53, %v93
  %v125 = vmul.f32 %v54, %v93
  %v126 = vmul.f32 %v55, %v93
  %v127 = vmul.f32 %v56, %v93
  %v128 = vmul.f32 %v57, %v93
  %v129 = vmul.f32 %v58, %v93
  %v130 = vmul.f32 %v59, %v93
  %v131 = vmul.f32 %v60, %v93
  %v132 = vmul.f32 %v61, %v93
  %v133 = vmul.f32 %v62, %v93
  %v134 = vmul.f32 %v63, %v93
  %v135 = vmul.f32 %v64, %v93
  %v136 = vmul.f32 %v65, %v93
  %v137 = vmul.f32 %v66, %v93
  %v138 = vmul.f32 %v67, %v93
  %v139 = vmul.f32 %v68, %v93
  %v140 = vmul.f32 %v69, %v93
  %v141 = vmul.f32 %v70, %v93
  %v142 = vmul.f32 %v71, %v93
  %v143 = vmul.f32 %v72, %v93
  %v144 = vmul.f32 %v73, %v93
  %v145 = vmul.f32 %v74, %v93
  %v146 = vmul.f32 %v75, %v93
  %v147 = vmul.f32 %v76, %v93
  %v148 = vmul.f32 %v77, %v93
  %v149 = vmul.f32 %v78, %v93
  %v150 = vmul.f32 %v79, %v93
  %v151 = vmul.f32 %v80, %v93
  %v152 = vmul.f32 %v81, %v93
  %v153 = vmul.f32 %v82, %v93
  %v154 = vmul.f32 %v83, %v93
  %v155 = vmul.f32 %v84, %v93
  %v156 = vmul.f32 %v85, %v93
  %v157 = vmul.f32 %v86, %v93
  %v158 = vmul.f32 %v87, %v93
  %v159 = vld [vmem:[%s2] sm:$0x1]
  %v161 = vlaneseq
  %v162 = vshrl.u32 %v161, 7
  %v163 = vsub.s32 0, %v162
  %v164 = vrot.slane %v159, %v163
  %v166 = vadd.f32 %v95, %v164
  %v167 = vadd.f32 %v96, %v164
  %v168 = vadd.f32 %v97, %v164
  %v169 = vadd.f32 %v98, %v164
  %v170 = vadd.f32 %v99, %v164
  %v171 = vadd.f32 %v100, %v164
  %v172 = vadd.f32 %v101, %v164
  %v173 = vadd.f32 %v102, %v164
  %v174 = vadd.f32 %v103, %v164
  %v175 = vadd.f32 %v104, %v164
  %v176 = vadd.f32 %v105, %v164
  %v177 = vadd.f32 %v106, %v164
  %v178 = vadd.f32 %v107, %v164
  %v179 = vadd.f32 %v108, %v164
  %v180 = vadd.f32 %v109, %v164
  %v181 = vadd.f32 %v110, %v164
  %v182 = vadd.f32 %v111, %v164
  %v183 = vadd.f32 %v112, %v164
  %v184 = vadd.f32 %v113, %v164
  %v185 = vadd.f32 %v114, %v164
  %v186 = vadd.f32 %v115, %v164
  %v187 = vadd.f32 %v116, %v164
  %v188 = vadd.f32 %v117, %v164
  %v189 = vadd.f32 %v118, %v164
  %v190 = vadd.f32 %v119, %v164
  %v191 = vadd.f32 %v120, %v164
  %v192 = vadd.f32 %v121, %v164
  %v193 = vadd.f32 %v122, %v164
  %v194 = vadd.f32 %v123, %v164
  %v195 = vadd.f32 %v124, %v164
  %v196 = vadd.f32 %v125, %v164
  %v197 = vadd.f32 %v126, %v164
  %v198 = vadd.f32 %v127, %v164
  %v199 = vadd.f32 %v128, %v164
  %v200 = vadd.f32 %v129, %v164
  %v201 = vadd.f32 %v130, %v164
  %v202 = vadd.f32 %v131, %v164
  %v203 = vadd.f32 %v132, %v164
  %v204 = vadd.f32 %v133, %v164
  %v205 = vadd.f32 %v134, %v164
  %v206 = vadd.f32 %v135, %v164
  %v207 = vadd.f32 %v136, %v164
  %v208 = vadd.f32 %v137, %v164
  %v209 = vadd.f32 %v138, %v164
  %v210 = vadd.f32 %v139, %v164
  %v211 = vadd.f32 %v140, %v164
  %v212 = vadd.f32 %v141, %v164
  %v213 = vadd.f32 %v142, %v164
  %v214 = vadd.f32 %v143, %v164
  %v215 = vadd.f32 %v144, %v164
  %v216 = vadd.f32 %v145, %v164
  %v217 = vadd.f32 %v146, %v164
  %v218 = vadd.f32 %v147, %v164
  %v219 = vadd.f32 %v148, %v164
  %v220 = vadd.f32 %v149, %v164
  %v221 = vadd.f32 %v150, %v164
  %v222 = vadd.f32 %v151, %v164
  %v223 = vadd.f32 %v152, %v164
  %v224 = vadd.f32 %v153, %v164
  %v225 = vadd.f32 %v154, %v164
  %v226 = vadd.f32 %v155, %v164
  %v227 = vadd.f32 %v156, %v164
  %v228 = vadd.f32 %v157, %v164
  %v229 = vadd.f32 %v158, %v164
  %v230 = vmax.f32 %v166, 0.0
  %v231 = vmax.f32 %v167, 0.0
  %v232 = vmax.f32 %v168, 0.0
  %v233 = vmax.f32 %v169, 0.0
  %v234 = vmax.f32 %v170, 0.0
  %v235 = vmax.f32 %v171, 0.0
  %v236 = vmax.f32 %v172, 0.0
  %v237 = vmax.f32 %v173, 0.0
  %v238 = vmax.f32 %v174, 0.0
  %v239 = vmax.f32 %v175, 0.0
  %v240 = vmax.f32 %v176, 0.0
  %v241 = vmax.f32 %v177, 0.0
  %v242 = vmax.f32 %v178, 0.0
  %v243 = vmax.f32 %v179, 0.0
  %v244 = vmax.f32 %v180, 0.0
  %v245 = vmax.f32 %v181, 0.0
  %v246 = vmax.f32 %v182, 0.0
  %v247 = vmax.f32 %v183, 0.0
  %v248 = vmax.f32 %v184, 0.0
  %v249 = vmax.f32 %v185, 0.0
  %v250 = vmax.f32 %v186, 0.0
  %v251 = vmax.f32 %v187, 0.0
  %v252 = vmax.f32 %v188, 0.0
  %v253 = vmax.f32 %v189, 0.0
  %v254 = vmax.f32 %v190, 0.0
  %v255 = vmax.f32 %v191, 0.0
  %v256 = vmax.f32 %v192, 0.0
  %v257 = vmax.f32 %v193, 0.0
  %v258 = vmax.f32 %v194, 0.0
  %v259 = vmax.f32 %v195, 0.0
  %v260 = vmax.f32 %v196, 0.0
  %v261 = vmax.f32 %v197, 0.0
  %v262 = vmax.f32 %v198, 0.0
  %v263 = vmax.f32 %v199, 0.0
  %v264 = vmax.f32 %v200, 0.0
  %v265 = vmax.f32 %v201, 0.0
  %v266 = vmax.f32 %v202, 0.0
  %v267 = vmax.f32 %v203, 0.0
  %v268 = vmax.f32 %v204, 0.0
  %v269 = vmax.f32 %v205, 0.0
  %v270 = vmax.f32 %v206, 0.0
  %v271 = vmax.f32 %v207, 0.0
  %v272 = vmax.f32 %v208, 0.0
  %v273 = vmax.f32 %v209, 0.0
  %v274 = vmax.f32 %v210, 0.0
  %v275 = vmax.f32 %v211, 0.0
  %v276 = vmax.f32 %v212, 0.0
  %v277 = vmax.f32 %v213, 0.0
  %v278 = vmax.f32 %v214, 0.0
  %v279 = vmax.f32 %v215, 0.0
  %v280 = vmax.f32 %v216, 0.0
  %v281 = vmax.f32 %v217, 0.0
  %v282 = vmax.f32 %v218, 0.0
  %v283 = vmax.f32 %v219, 0.0
  %v284 = vmax.f32 %v220, 0.0
  %v285 = vmax.f32 %v221, 0.0
  %v286 = vmax.f32 %v222, 0.0
  %v287 = vmax.f32 %v223, 0.0
  %v288 = vmax.f32 %v224, 0.0
  %v289 = vmax.f32 %v225, 0.0
  %v290 = vmax.f32 %v226, 0.0
  %v291 = vmax.f32 %v227, 0.0
  %v292 = vmax.f32 %v228, 0.0
  %v293 = vmax.f32 %v229, 0.0
  %v294 = vpack.c.bf16 %v231, %v230
  %v295 = vpack.c.bf16 %v233, %v232
  %v296 = vpack.c.bf16 %v235, %v234
  %v297 = vpack.c.bf16 %v237, %v236
  %v298 = vpack.c.bf16 %v239, %v238
  %v299 = vpack.c.bf16 %v241, %v240
  %v300 = vpack.c.bf16 %v243, %v242
  %v301 = vpack.c.bf16 %v245, %v244
  %v302 = vpack.c.bf16 %v247, %v246
  %v303 = vpack.c.bf16 %v249, %v248
  %v304 = vpack.c.bf16 %v251, %v250
  %v305 = vpack.c.bf16 %v253, %v252
  %v306 = vpack.c.bf16 %v255, %v254
  %v307 = vpack.c.bf16 %v257, %v256
  %v308 = vpack.c.bf16 %v259, %v258
  %v309 = vpack.c.bf16 %v261, %v260
  %v310 = vpack.c.bf16 %v263, %v262
  %v311 = vpack.c.bf16 %v265, %v264
  %v312 = vpack.c.bf16 %v267, %v266
  %v313 = vpack.c.bf16 %v269, %v268
  %v314 = vpack.c.bf16 %v271, %v270
  %v315 = vpack.c.bf16 %v273, %v272
  %v316 = vpack.c.bf16 %v275, %v274
  %v317 = vpack.c.bf16 %v277, %v276
  %v318 = vpack.c.bf16 %v279, %v278
  %v319 = vpack.c.bf16 %v281, %v280
  %v320 = vpack.c.bf16 %v283, %v282
  %v321 = vpack.c.bf16 %v285, %v284
  %v322 = vpack.c.bf16 %v287, %v286
  %v323 = vpack.c.bf16 %v289, %v288
  %v324 = vpack.c.bf16 %v291, %v290
  %v325 = vpack.c.bf16 %v293, %v292
  %v326 = vld [vmem:[%s3] sm:$0xf]
  %v327 = vld [vmem:[%s3 + $0x4] sm:$0xf]
  %v328 = vld [vmem:[%s3 + $0x8] sm:$0xf]
  %v329 = vld [vmem:[%s3 + $0xc] sm:$0xf]
  %v330 = vld [vmem:[%s3 + $0x10] sm:$0xf]
  %v331 = vld [vmem:[%s3 + $0x14] sm:$0xf]
  %v332 = vld [vmem:[%s3 + $0x18] sm:$0xf]
  %v333 = vld [vmem:[%s3 + $0x1c] sm:$0xf]
  %v334 = vld [vmem:[%s3 + $0x20] sm:$0xf]
  %v335 = vld [vmem:[%s3 + $0x24] sm:$0xf]
  %v336 = vld [vmem:[%s3 + $0x28] sm:$0xf]
  %v337 = vld [vmem:[%s3 + $0x2c] sm:$0xf]
  %v338 = vld [vmem:[%s3 + $0x30] sm:$0xf]
  %v339 = vld [vmem:[%s3 + $0x34] sm:$0xf]
  %v340 = vld [vmem:[%s3 + $0x38] sm:$0xf]
  %v341 = vld [vmem:[%s3 + $0x3c] sm:$0xf]
  %v342 = vld [vmem:[%s4] sm:$0x1]
  %v344 = vlaneseq
  %v345 = vshrl.u32 %v344, 7
  %v346 = vsub.s32 0, %v345
  %v347 = vrot.slane %v342, %v346
  %v365 = vunpack.c.l.b16 %v326
  %v366 = vunpack.c.l.b16 %v327
  %v367 = vunpack.c.l.b16 %v328
  %v368 = vunpack.c.l.b16 %v329
  %v369 = vunpack.c.l.b16 %v330
  %v370 = vunpack.c.l.b16 %v331
  %v371 = vunpack.c.l.b16 %v332
  %v372 = vunpack.c.l.b16 %v333
  %v373 = vunpack.c.l.b16 %v334
  %v374 = vunpack.c.l.b16 %v335
  %v375 = vunpack.c.l.b16 %v336
  %v376 = vunpack.c.l.b16 %v337
  %v377 = vunpack.c.l.b16 %v338
  %v378 = vunpack.c.l.b16 %v339
  %v379 = vunpack.c.l.b16 %v340
  %v380 = vunpack.c.l.b16 %v341
  %v381 = vpack.c.b16 %v366, %v365
  %v382 = vpack.c.b16 %v368, %v367
  %v383 = vpack.c.b16 %v370, %v369
  %v384 = vpack.c.b16 %v372, %v371
  %v385 = vpack.c.b16 %v374, %v373
  %v386 = vpack.c.b16 %v376, %v375
  %v387 = vpack.c.b16 %v378, %v377
  %v388 = vpack.c.b16 %v380, %v379
  %397 = vmatprep.subr.bf16.mxu0 0
  %398 = vmatpush1.bf16.msra.mxu0 %v381
  %399 = vmatprep.subr.bf16.mxu0 0
  %400 = vmatpush1.bf16.msra.mxu0 %v382
  %401 = vmatprep.subr.bf16.mxu0 0
  %402 = vmatpush1.bf16.msra.mxu0 %v383
  %403 = vmatprep.subr.bf16.mxu0 0
  %404 = vmatpush1.bf16.msra.mxu0 %v384
  %405 = vmatprep.subr.bf16.mxu0 0
  %406 = vmatpush1.bf16.msra.mxu0 %v385
  %407 = vmatprep.subr.bf16.mxu0 0
  %408 = vmatpush1.bf16.msra.mxu0 %v386
  %409 = vmatprep.subr.bf16.mxu0 0
  %410 = vmatpush1.bf16.msra.mxu0 %v387
  %411 = vmatprep.subr.bf16.mxu0 0
  %412 = vmatpush1.bf16.msra.mxu0 %v388
  %413 = vmatprep.subr.bf16.mxu0 0
  %414 = vmatpush1.bf16.msra.mxu0 0
  %415 = vmatprep.subr.bf16.mxu0 0
  %416 = vmatpush1.bf16.msra.mxu0 0
  %417 = vmatprep.subr.bf16.mxu0 0
  %418 = vmatpush1.bf16.msra.mxu0 0
  %419 = vmatprep.subr.bf16.mxu0 0
  %420 = vmatpush1.bf16.msra.mxu0 0
  %421 = vmatprep.subr.bf16.mxu0 0
  %422 = vmatpush1.bf16.msra.mxu0 0
  %423 = vmatprep.subr.bf16.mxu0 0
  %424 = vmatpush1.bf16.msra.mxu0 0
  %425 = vmatprep.subr.bf16.mxu0 0
  %426 = vmatpush1.bf16.msra.mxu0 0
  %427 = vmatprep.subr.bf16.mxu0 0
  %428 = vmatpush1.bf16.msra.mxu0 0
  %429 = vmatprep.mubr.bf16.mxu0 0
  %430 = vmatmul.mubr.bf16.gmra.mrb[0].mxu0 %v294
  %v431 = vpop.f32.mrb[0].mxu0
  %v432 = vadd.f32 %v347, %v431
  %v433 = vpop.f32.mrb[0].mxu0
  %v434 = vpop.f32.mrb[0].mxu0
  %v435 = vadd.f32 %v347, %v434
  %v436 = vpop.f32.mrb[0].mxu0
  %437 = vmatprep.mubr.bf16.mxu0 0
  %438 = vmatmul.mubr.bf16.gmra.mrb[0].mxu0 %v295
  %v439 = vpop.f32.mrb[0].mxu0
  %v440 = vadd.f32 %v347, %v439
  %v441 = vpop.f32.mrb[0].mxu0
  %v442 = vpop.f32.mrb[0].mxu0
  %v443 = vadd.f32 %v347, %v442
  %v444 = vpop.f32.mrb[0].mxu0
  %445 = vmatprep.mubr.bf16.mxu0 0
  %446 = vmatmul.mubr.bf16.gmra.mrb[0].mxu0 %v296
  %v447 = vpop.f32.mrb[0].mxu0
  %v448 = vadd.f32 %v347, %v447
  %v449 = vpop.f32.mrb[0].mxu0
  %v450 = vpop.f32.mrb[0].mxu0
  %v451 = vadd.f32 %v347, %v450
  %v452 = vpop.f32.mrb[0].mxu0
  %453 = vmatprep.mubr.bf16.mxu0 0
  %454 = vmatmul.mubr.bf16.gmra.mrb[0].mxu0 %v297
  %v455 = vpop.f32.mrb[0].mxu0
  %v456 = vadd.f32 %v347, %v455
  %v457 = vpop.f32.mrb[0].mxu0
  %v458 = vpop.f32.mrb[0].mxu0
  %v459 = vadd.f32 %v347, %v458
  %v460 = vpop.f32.mrb[0].mxu0
  %461 = vmatprep.mubr.bf16.mxu0 0
  %462 = vmatmul.mubr.bf16.gmra.mrb[0].mxu0 %v298
  %v463 = vpop.f32.mrb[0].mxu0
  %v464 = vadd.f32 %v347, %v463
  %v465 = vpop.f32.mrb[0].mxu0
  %v466 = vpop.f32.mrb[0].mxu0
  %v467 = vadd.f32 %v347, %v466
  %v468 = vpop.f32.mrb[0].mxu0
  %469 = vmatprep.mubr.bf16.mxu0 0
  %470 = vmatmul.mubr.bf16.gmra.mrb[0].mxu0 %v299
  %v471 = vpop.f32.mrb[0].mxu0
  %v472 = vadd.f32 %v347, %v471
  %v473 = vpop.f32.mrb[0].mxu0
  %v474 = vpop.f32.mrb[0].mxu0
  %v475 = vadd.f32 %v347, %v474
  %v476 = vpop.f32.mrb[0].mxu0
  %477 = vmatprep.mubr.bf16.mxu0 0
  %478 = vmatmul.mubr.bf16.gmra.mrb[0].mxu0 %v300
  %v479 = vpop.f32.mrb[0].mxu0
  %v480 = vadd.f32 %v347, %v479
  %v481 = vpop.f32.mrb[0].mxu0
  %v482 = vpop.f32.mrb[0].mxu0
  %v483 = vadd.f32 %v347, %v482
  %v484 = vpop.f32.mrb[0].mxu0
  %485 = vmatprep.mubr.bf16.mxu0 0
  %486 = vmatmul.mubr.bf16.gmra.mrb[0].mxu0 %v301
  %v487 = vpop.f32.mrb[0].mxu0
  %v488 = vadd.f32 %v347, %v487
  %v489 = vpop.f32.mrb[0].mxu0
  %v490 = vpop.f32.mrb[0].mxu0
  %v491 = vadd.f32 %v347, %v490
  %v492 = vpop.f32.mrb[0].mxu0
  %493 = vmatprep.mubr.bf16.mxu0 0
  %494 = vmatmul.mubr.bf16.gmra.mrb[0].mxu0 %v302
  %v495 = vpop.f32.mrb[0].mxu0
  %v496 = vadd.f32 %v347, %v495
  %v497 = vpop.f32.mrb[0].mxu0
  %v498 = vpop.f32.mrb[0].mxu0
  %v499 = vadd.f32 %v347, %v498
  %v500 = vpop.f32.mrb[0].mxu0
  %501 = vmatprep.mubr.bf16.mxu0 0
  %502 = vmatmul.mubr.bf16.gmra.mrb[0].mxu0 %v303
  %v503 = vpop.f32.mrb[0].mxu0
  %v504 = vadd.f32 %v347, %v503
  %v505 = vpop.f32.mrb[0].mxu0
  %v506 = vpop.f32.mrb[0].mxu0
  %v507 = vadd.f32 %v347, %v506
  %v508 = vpop.f32.mrb[0].mxu0
  %509 = vmatprep.mubr.bf16.mxu0 0
  %510 = vmatmul.mubr.bf16.gmra.mrb[0].mxu0 %v304
  %v511 = vpop.f32.mrb[0].mxu0
  %v512 = vadd.f32 %v347, %v511
  %v513 = vpop.f32.mrb[0].mxu0
  %v514 = vpop.f32.mrb[0].mxu0
  %v515 = vadd.f32 %v347, %v514
  %v516 = vpop.f32.mrb[0].mxu0
  %517 = vmatprep.mubr.bf16.mxu0 0
  %518 = vmatmul.mubr.bf16.gmra.mrb[0].mxu0 %v305
  %v519 = vpop.f32.mrb[0].mxu0
  %v520 = vadd.f32 %v347, %v519
  %v521 = vpop.f32.mrb[0].mxu0
  %v522 = vpop.f32.mrb[0].mxu0
  %v523 = vadd.f32 %v347, %v522
  %v524 = vpop.f32.mrb[0].mxu0
  %525 = vmatprep.mubr.bf16.mxu0 0
  %526 = vmatmul.mubr.bf16.gmra.mrb[0].mxu0 %v306
  %v527 = vpop.f32.mrb[0].mxu0
  %v528 = vadd.f32 %v347, %v527
  %v529 = vpop.f32.mrb[0].mxu0
  %v530 = vpop.f32.mrb[0].mxu0
  %v531 = vadd.f32 %v347, %v530
  %v532 = vpop.f32.mrb[0].mxu0
  %533 = vmatprep.mubr.bf16.mxu0 0
  %534 = vmatmul.mubr.bf16.gmra.mrb[0].mxu0 %v307
  %v535 = vpop.f32.mrb[0].mxu0
  %v536 = vadd.f32 %v347, %v535
  %v537 = vpop.f32.mrb[0].mxu0
  %v538 = vpop.f32.mrb[0].mxu0
  %v539 = vadd.f32 %v347, %v538
  %v540 = vpop.f32.mrb[0].mxu0
  %541 = vmatprep.mubr.bf16.mxu0 0
  %542 = vmatmul.mubr.bf16.gmra.mrb[0].mxu0 %v308
  %v543 = vpop.f32.mrb[0].mxu0
  %v544 = vadd.f32 %v347, %v543
  %v545 = vpop.f32.mrb[0].mxu0
  %v546 = vpop.f32.mrb[0].mxu0
  %v547 = vadd.f32 %v347, %v546
  %v548 = vpop.f32.mrb[0].mxu0
  %549 = vmatprep.mubr.bf16.mxu0 0
  %550 = vmatmul.mubr.bf16.gmra.mrb[0].mxu0 %v309
  %v551 = vpop.f32.mrb[0].mxu0
  %v552 = vadd.f32 %v347, %v551
  %v553 = vpop.f32.mrb[0].mxu0
  %v554 = vpop.f32.mrb[0].mxu0
  %v555 = vadd.f32 %v347, %v554
  %v556 = vpop.f32.mrb[0].mxu0
  %557 = vmatprep.mubr.bf16.mxu0 0
  %558 = vmatmul.mubr.bf16.gmra.mrb[0].mxu0 %v310
  %v559 = vpop.f32.mrb[0].mxu0
  %v560 = vadd.f32 %v347, %v559
  %v561 = vpop.f32.mrb[0].mxu0
  %v562 = vpop.f32.mrb[0].mxu0
  %v563 = vadd.f32 %v347, %v562
  %v564 = vpop.f32.mrb[0].mxu0
  %565 = vmatprep.mubr.bf16.mxu0 0
  %566 = vmatmul.mubr.bf16.gmra.mrb[0].mxu0 %v311
  %v567 = vpop.f32.mrb[0].mxu0
  %v568 = vadd.f32 %v347, %v567
  %v569 = vpop.f32.mrb[0].mxu0
  %v570 = vpop.f32.mrb[0].mxu0
  %v571 = vadd.f32 %v347, %v570
  %v572 = vpop.f32.mrb[0].mxu0
  %573 = vmatprep.mubr.bf16.mxu0 0
  %574 = vmatmul.mubr.bf16.gmra.mrb[0].mxu0 %v312
  %v575 = vpop.f32.mrb[0].mxu0
  %v576 = vadd.f32 %v347, %v575
  %v577 = vpop.f32.mrb[0].mxu0
  %v578 = vpop.f32.mrb[0].mxu0
  %v579 = vadd.f32 %v347, %v578
  %v580 = vpop.f32.mrb[0].mxu0
  %581 = vmatprep.mubr.bf16.mxu0 0
  %582 = vmatmul.mubr.bf16.gmra.mrb[0].mxu0 %v313
  %v583 = vpop.f32.mrb[0].mxu0
  %v584 = vadd.f32 %v347, %v583
  %v585 = vpop.f32.mrb[0].mxu0
  %v586 = vpop.f32.mrb[0].mxu0
  %v587 = vadd.f32 %v347, %v586
  %v588 = vpop.f32.mrb[0].mxu0
  %589 = vmatprep.mubr.bf16.mxu0 0
  %590 = vmatmul.mubr.bf16.gmra.mrb[0].mxu0 %v314
  %v591 = vpop.f32.mrb[0].mxu0
  %v592 = vadd.f32 %v347, %v591
  %v593 = vpop.f32.mrb[0].mxu0
  %v594 = vpop.f32.mrb[0].mxu0
  %v595 = vadd.f32 %v347, %v594
  %v596 = vpop.f32.mrb[0].mxu0
  %597 = vmatprep.mubr.bf16.mxu0 0
  %598 = vmatmul.mubr.bf16.gmra.mrb[0].mxu0 %v315
  %v599 = vpop.f32.mrb[0].mxu0
  %v600 = vadd.f32 %v347, %v599
  %v601 = vpop.f32.mrb[0].mxu0
  %v602 = vpop.f32.mrb[0].mxu0
  %v603 = vadd.f32 %v347, %v602
  %v604 = vpop.f32.mrb[0].mxu0
  %605 = vmatprep.mubr.bf16.mxu0 0
  %606 = vmatmul.mubr.bf16.gmra.mrb[0].mxu0 %v316
  %v607 = vpop.f32.mrb[0].mxu0
  %v608 = vadd.f32 %v347, %v607
  %v609 = vpop.f32.mrb[0].mxu0
  %v610 = vpop.f32.mrb[0].mxu0
  %v611 = vadd.f32 %v347, %v610
  %v612 = vpop.f32.mrb[0].mxu0
  %613 = vmatprep.mubr.bf16.mxu0 0
  %614 = vmatmul.mubr.bf16.gmra.mrb[0].mxu0 %v317
  %v615 = vpop.f32.mrb[0].mxu0
  %v616 = vadd.f32 %v347, %v615
  %v617 = vpop.f32.mrb[0].mxu0
  %v618 = vpop.f32.mrb[0].mxu0
  %v619 = vadd.f32 %v347, %v618
  %v620 = vpop.f32.mrb[0].mxu0
  %621 = vmatprep.mubr.bf16.mxu0 0
  %622 = vmatmul.mubr.bf16.gmra.mrb[0].mxu0 %v318
  %v623 = vpop.f32.mrb[0].mxu0
  %v624 = vadd.f32 %v347, %v623
  %v625 = vpop.f32.mrb[0].mxu0
  %v626 = vpop.f32.mrb[0].mxu0
  %v627 = vadd.f32 %v347, %v626
  %v628 = vpop.f32.mrb[0].mxu0
  %629 = vmatprep.mubr.bf16.mxu0 0
  %630 = vmatmul.mubr.bf16.gmra.mrb[0].mxu0 %v319
  %v631 = vpop.f32.mrb[0].mxu0
  %v632 = vadd.f32 %v347, %v631
  %v633 = vpop.f32.mrb[0].mxu0
  %v634 = vpop.f32.mrb[0].mxu0
  %v635 = vadd.f32 %v347, %v634
  %v636 = vpop.f32.mrb[0].mxu0
  %637 = vmatprep.mubr.bf16.mxu0 0
  %638 = vmatmul.mubr.bf16.gmra.mrb[0].mxu0 %v320
  %v639 = vpop.f32.mrb[0].mxu0
  %v640 = vadd.f32 %v347, %v639
  %v641 = vpop.f32.mrb[0].mxu0
  %v642 = vpop.f32.mrb[0].mxu0
  %v643 = vadd.f32 %v347, %v642
  %v644 = vpop.f32.mrb[0].mxu0
  %645 = vmatprep.mubr.bf16.mxu0 0
  %646 = vmatmul.mubr.bf16.gmra.mrb[0].mxu0 %v321
  %v647 = vpop.f32.mrb[0].mxu0
  %v648 = vadd.f32 %v347, %v647
  %v649 = vpop.f32.mrb[0].mxu0
  %v650 = vpop.f32.mrb[0].mxu0
  %v651 = vadd.f32 %v347, %v650
  %v652 = vpop.f32.mrb[0].mxu0
  %653 = vmatprep.mubr.bf16.mxu0 0
  %654 = vmatmul.mubr.bf16.gmra.mrb[0].mxu0 %v322
  %v655 = vpop.f32.mrb[0].mxu0
  %v656 = vadd.f32 %v347, %v655
  %v657 = vpop.f32.mrb[0].mxu0
  %v658 = vpop.f32.mrb[0].mxu0
  %v659 = vadd.f32 %v347, %v658
  %v660 = vpop.f32.mrb[0].mxu0
  %661 = vmatprep.mubr.bf16.mxu0 0
  %662 = vmatmul.mubr.bf16.gmra.mrb[0].mxu0 %v323
  %v663 = vpop.f32.mrb[0].mxu0
  %v664 = vadd.f32 %v347, %v663
  %v665 = vpop.f32.mrb[0].mxu0
  %v666 = vpop.f32.mrb[0].mxu0
  %v667 = vadd.f32 %v347, %v666
  %v668 = vpop.f32.mrb[0].mxu0
  %669 = vmatprep.mubr.bf16.mxu0 0
  %670 = vmatmul.mubr.bf16.gmra.mrb[0].mxu0 %v324
  %v671 = vpop.f32.mrb[0].mxu0
  %v672 = vadd.f32 %v347, %v671
  %v673 = vpop.f32.mrb[0].mxu0
  %v674 = vpop.f32.mrb[0].mxu0
  %v675 = vadd.f32 %v347, %v674
  %v676 = vpop.f32.mrb[0].mxu0
  %677 = vmatprep.mubr.bf16.mxu0 0
  %678 = vmatmul.mubr.bf16.gmra.mrb[0].mxu0 %v325
  %v679 = vpop.f32.mrb[0].mxu0
  %v680 = vadd.f32 %v347, %v679
  %v681 = vpop.f32.mrb[0].mxu0
  %v682 = vpop.f32.mrb[0].mxu0
  %v683 = vadd.f32 %v347, %v682
  %v684 = vpop.f32.mrb[0].mxu0
  %685 = vdwg.mxu0
  %686 = vst [vmem:[%s5] sm:$0xff] %v432
  %687 = vst [vmem:[%s5 + $0x8] sm:$0xff] %v435
  %688 = vst [vmem:[%s5 + $0x10] sm:$0xff] %v440
  %689 = vst [vmem:[%s5 + $0x18] sm:$0xff] %v443
  %690 = vst [vmem:[%s5 + $0x20] sm:$0xff] %v448
  %691 = vst [vmem:[%s5 + $0x28] sm:$0xff] %v451
  %692 = vst [vmem:[%s5 + $0x30] sm:$0xff] %v456
  %693 = vst [vmem:[%s5 + $0x38] sm:$0xff] %v459
  %694 = vst [vmem:[%s5 + $0x40] sm:$0xff] %v464
  %695 = vst [vmem:[%s5 + $0x48] sm:$0xff] %v467
  %696 = vst [vmem:[%s5 + $0x50] sm:$0xff] %v472
  %697 = vst [vmem:[%s5 + $0x58] sm:$0xff] %v475
  %698 = vst [vmem:[%s5 + $0x60] sm:$0xff] %v480
  %699 = vst [vmem:[%s5 + $0x68] sm:$0xff] %v483
  %700 = vst [vmem:[%s5 + $0x70] sm:$0xff] %v488
  %701 = vst [vmem:[%s5 + $0x78] sm:$0xff] %v491
  %702 = vst [vmem:[%s5 + $0x80] sm:$0xff] %v496
  %703 = vst [vmem:[%s5 + $0x88] sm:$0xff] %v499
  %704 = vst [vmem:[%s5 + $0x90] sm:$0xff] %v504
  %705 = vst [vmem:[%s5 + $0x98] sm:$0xff] %v507
  %706 = vst [vmem:[%s5 + $0xa0] sm:$0xff] %v512
  %707 = vst [vmem:[%s5 + $0xa8] sm:$0xff] %v515
  %708 = vst [vmem:[%s5 + $0xb0] sm:$0xff] %v520
  %709 = vst [vmem:[%s5 + $0xb8] sm:$0xff] %v523
  %710 = vst [vmem:[%s5 + $0xc0] sm:$0xff] %v528
  %711 = vst [vmem:[%s5 + $0xc8] sm:$0xff] %v531
  %712 = vst [vmem:[%s5 + $0xd0] sm:$0xff] %v536
  %713 = vst [vmem:[%s5 + $0xd8] sm:$0xff] %v539
  %714 = vst [vmem:[%s5 + $0xe0] sm:$0xff] %v544
  %715 = vst [vmem:[%s5 + $0xe8] sm:$0xff] %v547
  %716 = vst [vmem:[%s5 + $0xf0] sm:$0xff] %v552
  %717 = vst [vmem:[%s5 + $0xf8] sm:$0xff] %v555
  %718 = vst [vmem:[%s5 + $0x100] sm:$0xff] %v560
  %719 = vst [vmem:[%s5 + $0x108] sm:$0xff] %v563
  %720 = vst [vmem:[%s5 + $0x110] sm:$0xff] %v568
  %721 = vst [vmem:[%s5 + $0x118] sm:$0xff] %v571
  %722 = vst [vmem:[%s5 + $0x120] sm:$0xff] %v576
  %723 = vst [vmem:[%s5 + $0x128] sm:$0xff] %v579
  %724 = vst [vmem:[%s5 + $0x130] sm:$0xff] %v584
  %725 = vst [vmem:[%s5 + $0x138] sm:$0xff] %v587
  %726 = vst [vmem:[%s5 + $0x140] sm:$0xff] %v592
  %727 = vst [vmem:[%s5 + $0x148] sm:$0xff] %v595
  %728 = vst [vmem:[%s5 + $0x150] sm:$0xff] %v600
  %729 = vst [vmem:[%s5 + $0x158] sm:$0xff] %v603
  %730 = vst [vmem:[%s5 + $0x160] sm:$0xff] %v608
  %731 = vst [vmem:[%s5 + $0x168] sm:$0xff] %v611
  %732 = vst [vmem:[%s5 + $0x170] sm:$0xff] %v616
  %733 = vst [vmem:[%s5 + $0x178] sm:$0xff] %v619
  %734 = vst [vmem:[%s5 + $0x180] sm:$0xff] %v624
  %735 = vst [vmem:[%s5 + $0x188] sm:$0xff] %v627
  %736 = vst [vmem:[%s5 + $0x190] sm:$0xff] %v632
  %737 = vst [vmem:[%s5 + $0x198] sm:$0xff] %v635
  %738 = vst [vmem:[%s5 + $0x1a0] sm:$0xff] %v640
  %739 = vst [vmem:[%s5 + $0x1a8] sm:$0xff] %v643
  %740 = vst [vmem:[%s5 + $0x1b0] sm:$0xff] %v648
  %741 = vst [vmem:[%s5 + $0x1b8] sm:$0xff] %v651
  %742 = vst [vmem:[%s5 + $0x1c0] sm:$0xff] %v656
  %743 = vst [vmem:[%s5 + $0x1c8] sm:$0xff] %v659
  %744 = vst [vmem:[%s5 + $0x1d0] sm:$0xff] %v664
  %745 = vst [vmem:[%s5 + $0x1d8] sm:$0xff] %v667
  %746 = vst [vmem:[%s5 + $0x1e0] sm:$0xff] %v672
  %747 = vst [vmem:[%s5 + $0x1e8] sm:$0xff] %v675
  %748 = vst [vmem:[%s5 + $0x1f0] sm:$0xff] %v680
  %749 = vst [vmem:[%s5 + $0x1f8] sm:$0xff] %v683
  %v750 = vadd.f32 %v432, %v435
  %v751 = vadd.f32 %v750, %v440
  %v752 = vadd.f32 %v751, %v443
  %v753 = vadd.f32 %v752, %v448
  %v754 = vadd.f32 %v753, %v451
  %v755 = vadd.f32 %v754, %v456
  %v756 = vadd.f32 %v755, %v459
  %v757 = vadd.f32 %v756, %v464
  %v758 = vadd.f32 %v757, %v467
  %v759 = vadd.f32 %v758, %v472
  %v760 = vadd.f32 %v759, %v475
  %v761 = vadd.f32 %v760, %v480
  %v762 = vadd.f32 %v761, %v483
  %v763 = vadd.f32 %v762, %v488
  %v764 = vadd.f32 %v763, %v491
  %v765 = vadd.f32 %v764, %v496
  %v766 = vadd.f32 %v765, %v499
  %v767 = vadd.f32 %v766, %v504
  %v768 = vadd.f32 %v767, %v507
  %v769 = vadd.f32 %v768, %v512
  %v770 = vadd.f32 %v769, %v515
  %v771 = vadd.f32 %v770, %v520
  %v772 = vadd.f32 %v771, %v523
  %v773 = vadd.f32 %v772, %v528
  %v774 = vadd.f32 %v773, %v531
  %v775 = vadd.f32 %v774, %v536
  %v776 = vadd.f32 %v775, %v539
  %v777 = vadd.f32 %v776, %v544
  %v778 = vadd.f32 %v777, %v547
  %v779 = vadd.f32 %v778, %v552
  %v780 = vadd.f32 %v779, %v555
  %v781 = vadd.f32 %v780, %v560
  %v782 = vadd.f32 %v781, %v563
  %v783 = vadd.f32 %v782, %v568
  %v784 = vadd.f32 %v783, %v571
  %v785 = vadd.f32 %v784, %v576
  %v786 = vadd.f32 %v785, %v579
  %v787 = vadd.f32 %v786, %v584
  %v788 = vadd.f32 %v787, %v587
  %v789 = vadd.f32 %v788, %v592
  %v790 = vadd.f32 %v789, %v595
  %v791 = vadd.f32 %v790, %v600
  %v792 = vadd.f32 %v791, %v603
  %v793 = vadd.f32 %v792, %v608
  %v794 = vadd.f32 %v793, %v611
  %v795 = vadd.f32 %v794, %v616
  %v796 = vadd.f32 %v795, %v619
  %v797 = vadd.f32 %v796, %v624
  %v798 = vadd.f32 %v797, %v627
  %v799 = vadd.f32 %v798, %v632
  %v800 = vadd.f32 %v799, %v635
  %v801 = vadd.f32 %v800, %v640
  %v802 = vadd.f32 %v801, %v643
  %v803 = vadd.f32 %v802, %v648
  %v804 = vadd.f32 %v803, %v651
  %v805 = vadd.f32 %v804, %v656
  %v806 = vadd.f32 %v805, %v659
  %v807 = vadd.f32 %v806, %v664
  %v808 = vadd.f32 %v807, %v667
  %v809 = vadd.f32 %v808, %v672
  %v810 = vadd.f32 %v809, %v675
  %v811 = vadd.f32 %v810, %v680
  %v812 = vadd.f32 %v811, %v683
  %813 = vst [vmem:[%s6] sm:$0xff] %v812
  %v814 = vmul.f32 %v432, %v432
  %v815 = vmul.f32 %v435, %v435
  %v816 = vmul.f32 %v440, %v440
  %v817 = vmul.f32 %v443, %v443
  %v818 = vmul.f32 %v448, %v448
  %v819 = vmul.f32 %v451, %v451
  %v820 = vmul.f32 %v456, %v456
  %v821 = vmul.f32 %v459, %v459
  %v822 = vmul.f32 %v464, %v464
  %v823 = vmul.f32 %v467, %v467
  %v824 = vmul.f32 %v472, %v472
  %v825 = vmul.f32 %v475, %v475
  %v826 = vmul.f32 %v480, %v480
  %v827 = vmul.f32 %v483, %v483
  %v828 = vmul.f32 %v488, %v488
  %v829 = vmul.f32 %v491, %v491
  %v830 = vmul.f32 %v496, %v496
  %v831 = vmul.f32 %v499, %v499
  %v832 = vmul.f32 %v504, %v504
  %v833 = vmul.f32 %v507, %v507
  %v834 = vmul.f32 %v512, %v512
  %v835 = vmul.f32 %v515, %v515
  %v836 = vmul.f32 %v520, %v520
  %v837 = vmul.f32 %v523, %v523
  %v838 = vmul.f32 %v528, %v528
  %v839 = vmul.f32 %v531, %v531
  %v840 = vmul.f32 %v536, %v536
  %v841 = vmul.f32 %v539, %v539
  %v842 = vmul.f32 %v544, %v544
  %v843 = vmul.f32 %v547, %v547
  %v844 = vmul.f32 %v552, %v552
  %v845 = vmul.f32 %v555, %v555
  %v846 = vmul.f32 %v560, %v560
  %v847 = vmul.f32 %v563, %v563
  %v848 = vmul.f32 %v568, %v568
  %v849 = vmul.f32 %v571, %v571
  %v850 = vmul.f32 %v576, %v576
  %v851 = vmul.f32 %v579, %v579
  %v852 = vmul.f32 %v584, %v584
  %v853 = vmul.f32 %v587, %v587
  %v854 = vmul.f32 %v592, %v592
  %v855 = vmul.f32 %v595, %v595
  %v856 = vmul.f32 %v600, %v600
  %v857 = vmul.f32 %v603, %v603
  %v858 = vmul.f32 %v608, %v608
  %v859 = vmul.f32 %v611, %v611
  %v860 = vmul.f32 %v616, %v616
  %v861 = vmul.f32 %v619, %v619
  %v862 = vmul.f32 %v624, %v624
  %v863 = vmul.f32 %v627, %v627
  %v864 = vmul.f32 %v632, %v632
  %v865 = vmul.f32 %v635, %v635
  %v866 = vmul.f32 %v640, %v640
  %v867 = vmul.f32 %v643, %v643
  %v868 = vmul.f32 %v648, %v648
  %v869 = vmul.f32 %v651, %v651
  %v870 = vmul.f32 %v656, %v656
  %v871 = vmul.f32 %v659, %v659
  %v872 = vmul.f32 %v664, %v664
  %v873 = vmul.f32 %v667, %v667
  %v874 = vmul.f32 %v672, %v672
  %v875 = vmul.f32 %v675, %v675
  %v876 = vmul.f32 %v680, %v680
  %v877 = vmul.f32 %v683, %v683
  %v878 = vadd.f32 %v814, %v815
  %v879 = vadd.f32 %v878, %v816
  %v880 = vadd.f32 %v879, %v817
  %v881 = vadd.f32 %v880, %v818
  %v882 = vadd.f32 %v881, %v819
  %v883 = vadd.f32 %v882, %v820
  %v884 = vadd.f32 %v883, %v821
  %v885 = vadd.f32 %v884, %v822
  %v886 = vadd.f32 %v885, %v823
  %v887 = vadd.f32 %v886, %v824
  %v888 = vadd.f32 %v887, %v825
  %v889 = vadd.f32 %v888, %v826
  %v890 = vadd.f32 %v889, %v827
  %v891 = vadd.f32 %v890, %v828
  %v892 = vadd.f32 %v891, %v829
  %v893 = vadd.f32 %v892, %v830
  %v894 = vadd.f32 %v893, %v831
  %v895 = vadd.f32 %v894, %v832
  %v896 = vadd.f32 %v895, %v833
  %v897 = vadd.f32 %v896, %v834
  %v898 = vadd.f32 %v897, %v835
  %v899 = vadd.f32 %v898, %v836
  %v900 = vadd.f32 %v899, %v837
  %v901 = vadd.f32 %v900, %v838
  %v902 = vadd.f32 %v901, %v839
  %v903 = vadd.f32 %v902, %v840
  %v904 = vadd.f32 %v903, %v841
  %v905 = vadd.f32 %v904, %v842
  %v906 = vadd.f32 %v905, %v843
  %v907 = vadd.f32 %v906, %v844
  %v908 = vadd.f32 %v907, %v845
  %v909 = vadd.f32 %v908, %v846
  %v910 = vadd.f32 %v909, %v847
  %v911 = vadd.f32 %v910, %v848
  %v912 = vadd.f32 %v911, %v849
  %v913 = vadd.f32 %v912, %v850
  %v914 = vadd.f32 %v913, %v851
  %v915 = vadd.f32 %v914, %v852
  %v916 = vadd.f32 %v915, %v853
  %v917 = vadd.f32 %v916, %v854
  %v918 = vadd.f32 %v917, %v855
  %v919 = vadd.f32 %v918, %v856
  %v920 = vadd.f32 %v919, %v857
  %v921 = vadd.f32 %v920, %v858
  %v922 = vadd.f32 %v921, %v859
  %v923 = vadd.f32 %v922, %v860
  %v924 = vadd.f32 %v923, %v861
  %v925 = vadd.f32 %v924, %v862
  %v926 = vadd.f32 %v925, %v863
  %v927 = vadd.f32 %v926, %v864
  %v928 = vadd.f32 %v927, %v865
  %v929 = vadd.f32 %v928, %v866
  %v930 = vadd.f32 %v929, %v867
  %v931 = vadd.f32 %v930, %v868
  %v932 = vadd.f32 %v931, %v869
  %v933 = vadd.f32 %v932, %v870
  %v934 = vadd.f32 %v933, %v871
  %v935 = vadd.f32 %v934, %v872
  %v936 = vadd.f32 %v935, %v873
  %v937 = vadd.f32 %v936, %v874
  %v938 = vadd.f32 %v937, %v875
  %v939 = vadd.f32 %v938, %v876
  %v940 = vadd.f32 %v939, %v877
  %941 = vst [vmem:[%s7] sm:$0xff] %v940
  // Predicated region
  $region22: #{dense_block_forward.4} parent=0 // pred_check
    _
  $region23: #{dense_block_forward.4} parent=0 // pred_check_branch
    %943 = sbr.rel (0) target = $region25
  $region24: #{dense_block_forward.4} parent=0 // pred_region
    _
  $region25: #{dense_block_forward.4} parent=0 // pred_fallthru
    _
  // Predicated region
  $region26: #{dense_block_forward.4} parent=0 // pred_check
    _
  $region27: #{dense_block_forward.4} parent=0 // pred_check_branch
    %945 = sbr.rel (0) target = $region29
  $region28: #{dense_block_forward.4} parent=0 // pred_region
    _
  $region29: #{dense_block_forward.4} parent=0 // pred_fallthru
    _
  // Predicated region
  $region30: #{dense_block_forward.4} parent=0 // pred_check
    _
  $region31: #{dense_block_forward.4} parent=0 // pred_check_branch
    %947 = sbr.rel (0) target = $region33
  $region32: #{dense_block_forward.4} parent=0 // pred_region
    _
  $region33: #{dense_block_forward.4} parent=0 // pred_fallthru
    _
  // Predicated region
  $region34: #{dense_block_forward.4} parent=0 // pred_check
    _
  $region35: #{dense_block_forward.4} parent=0 // pred_check_branch
    %949 = sbr.rel (0) target = $region37
  $region36: #{dense_block_forward.4} parent=0 // pred_region
    _
  $region37: #{dense_block_forward.4} parent=0 // pred_fallthru
    _
  // Predicated region
  $region38: #{dense_block_forward.4} parent=0 // pred_check
    _
  $region39: #{dense_block_forward.4} parent=0 // pred_check_branch
    %951 = sbr.rel (0) target = $region41
  $region40: #{dense_block_forward.4} parent=0 // pred_region
    _
  $region41: #{dense_block_forward.4} parent=0 // pred_fallthru
    _
  // Predicated region
  $region42: #{dense_block_forward.4} parent=0 // pred_check
    _
  $region43: #{dense_block_forward.4} parent=0 // pred_check_branch
    %953 = sbr.rel (0) target = $region45
  $region44: #{dense_block_forward.4} parent=0 // pred_region
    _
  $region45: #{dense_block_forward.4} parent=0 // pred_fallthru
    _

// kernel: dense_block_forward.5
$region0: #{dense_block_forward.5}
  #allocation0 [shape = 'u32[]', space=smem, size = 0x4, offset = 0x4, fixed_abs, tag = 'smem constant byte address 0x4 - core index']
  #allocation1 [shape = 'u32[144,128]{1,0:T(1,128)}', space=vmem, size = 0x12000, scoped, tag = 'internal scratch']
  %s0 = inlined_call_operand.vmem [shape: f32[2,256,128], index: 0, kind: input, shape index: {}]
  %s1 = inlined_call_operand.vmem [shape: f32[1,128], index: 1, kind: input, shape index: {}]
  %s2 = inlined_call_operand.vmem [shape: f32[1,128], index: 2, kind: input, shape index: {}]
  %s3 = inlined_call_operand.vmem [shape: bf16[1152,128], index: 3, kind: input, shape index: {}]
  %s4 = inlined_call_operand.vmem [shape: f32[1,128], index: 4, kind: input, shape index: {}]
  %s5 = inlined_call_operand.vmem [shape: f32[2,256,128], index: 5, kind: output, shape index: {0}]
  %s6 = inlined_call_operand.vmem [shape: f32[16,128], index: 6, kind: output, shape index: {1}]
  %s7 = inlined_call_operand.vmem [shape: f32[16,128], index: 7, kind: output, shape index: {2}]
  %8 = xla_tuple %s5, %s6, %s7
  %s9 = sld [smem:[#allocation0]]
  $region69: #{dense_block_forward.5} parent=0
    _
  %s11 = ssub.s32 1, %s9
  %s12 = scalar_select 0, %s11, %s9
  loop: start=0, step=1, limit=4
  $region2: #{dense_block_forward.5} parent=0 // loop_pre_header
    _
  $region3: #{dense_block_forward.5} parent=0 // loop_header
    %s14 = sphi 0, %s18
    %p15 = scmp.ge.s32.totalorder %s14, 4
    %s24 = sphi 0, %s26
    %s27 = sphi 0, %s24
    %s28 = sphi 0, %s27
    %s44 = sphi 0, %s28
    %s48 = sphi 0, %s48
    %s50 = sphi 0, %s48
    %s51 = sphi 0, %s50
    %s65 = sphi 0, %s51
    %s69 = sphi 0, %s69
    %s71 = sphi 0, %s69
    %s72 = sphi 0, %s71
    %s86 = sphi 0, %s72
    %s90 = sphi 0, %s90
    %s92 = sphi 0, %s90
    %s93 = sphi 0, %s92
    %s107 = sphi 0, %s93
    %s111 = sphi 0, %s111
    %s113 = sphi 0, %s111
    %s114 = sphi 0, %s113
    %s128 = sphi 0, %s114
    %s134 = sphi 0, %s136
    %s137 = sphi 0, %s134
    %s138 = sphi 0, %s137
    %s154 = sphi 0, %s138
    %s160 = sphi 0, %s162
    %s163 = sphi 0, %s160
    %s164 = sphi 0, %s163
    %s180 = sphi 0, %s164
    %s186 = sphi 0, %s188
    %s189 = sphi 0, %s186
    %s190 = sphi 0, %s189
    %s206 = sphi 0, %s190
  $region4: #{dense_block_forward.5} parent=0 // loop_header_branch
    %17 = sbr.rel (%p15) target = $region8
  $region5: #{dense_block_forward.5} parent=0 // loop_body
    %s19 = ssub.s32 %s14, 1
    %s20 = ssub.s32 %s14, 2
    %s21 = sadd.s32 %s14, 1
    %s22 = ssub.s32 %s14, %s21
    %p23 = scmp.eq.s32.totalorder %s22, 0
    %s25 = sadd.s32 %s24, 1
    %s26 = scalar_select %p23, %s24, %s25
    %p29 = pneg %p23
    %p30 = scmp.eq.s32.totalorder %s14, 1
    %p31 = por %p29, %p30
    %p32 = scmp.ne.s32.totalorder %s24, %s27
    %p33 = scmp.eq.s32.totalorder %s14, 0
    %p34 = por %p32, %p33
    %p35 = scmp.ne.s32.totalorder %s24, %s27
    %p36 = scmp.eq.s32.totalorder %s19, 1
    %p37 = por %p35, %p36
    %p38 = scmp.ne.s32.totalorder %s27, %s28
    %p39 = scmp.eq.s32.totalorder %s19, 0
    %p40 = por %p38, %p39
    %p41 = scmp.ne.s32.totalorder %s27, %s28
    %p42 = scmp.eq.s32.totalorder %s20, 1
    %p43 = por %p41, %p42
    %p45 = scmp.ne.s32.totalorder %s28, %s44
    %p46 = scmp.eq.s32.totalorder %s20, 0
    %p47 = por %p45, %p46
    %s49 = sadd.s32 %s48, 1
    %p52 = scmp.eq.s32.totalorder %s14, 1
    %p53 = scmp.ne.s32.totalorder %s48, %s50
    %p54 = scmp.eq.s32.totalorder %s14, 0
    %p55 = por %p53, %p54
    %p56 = scmp.ne.s32.totalorder %s48, %s50
    %p57 = scmp.eq.s32.totalorder %s19, 1
    %p58 = por %p56, %p57
    %p59 = scmp.ne.s32.totalorder %s50, %s51
    %p60 = scmp.eq.s32.totalorder %s19, 0
    %p61 = por %p59, %p60
    %p62 = scmp.ne.s32.totalorder %s50, %s51
    %p63 = scmp.eq.s32.totalorder %s20, 1
    %p64 = por %p62, %p63
    %p66 = scmp.ne.s32.totalorder %s51, %s65
    %p67 = scmp.eq.s32.totalorder %s20, 0
    %p68 = por %p66, %p67
    %s70 = sadd.s32 %s69, 1
    %p73 = scmp.eq.s32.totalorder %s14, 1
    %p74 = scmp.ne.s32.totalorder %s69, %s71
    %p75 = scmp.eq.s32.totalorder %s14, 0
    %p76 = por %p74, %p75
    %p77 = scmp.ne.s32.totalorder %s69, %s71
    %p78 = scmp.eq.s32.totalorder %s19, 1
    %p79 = por %p77, %p78
    %p80 = scmp.ne.s32.totalorder %s71, %s72
    %p81 = scmp.eq.s32.totalorder %s19, 0
    %p82 = por %p80, %p81
    %p83 = scmp.ne.s32.totalorder %s71, %s72
    %p84 = scmp.eq.s32.totalorder %s20, 1
    %p85 = por %p83, %p84
    %p87 = scmp.ne.s32.totalorder %s72, %s86
    %p88 = scmp.eq.s32.totalorder %s20, 0
    %p89 = por %p87, %p88
    %s91 = sadd.s32 %s90, 1
    %p94 = scmp.eq.s32.totalorder %s14, 1
    %p95 = scmp.ne.s32.totalorder %s90, %s92
    %p96 = scmp.eq.s32.totalorder %s14, 0
    %p97 = por %p95, %p96
    %p98 = scmp.ne.s32.totalorder %s90, %s92
    %p99 = scmp.eq.s32.totalorder %s19, 1
    %p100 = por %p98, %p99
    %p101 = scmp.ne.s32.totalorder %s92, %s93
    %p102 = scmp.eq.s32.totalorder %s19, 0
    %p103 = por %p101, %p102
    %p104 = scmp.ne.s32.totalorder %s92, %s93
    %p105 = scmp.eq.s32.totalorder %s20, 1
    %p106 = por %p104, %p105
    %p108 = scmp.ne.s32.totalorder %s93, %s107
    %p109 = scmp.eq.s32.totalorder %s20, 0
    %p110 = por %p108, %p109
    %s112 = sadd.s32 %s111, 1
    %p115 = scmp.eq.s32.totalorder %s14, 1
    %p116 = scmp.ne.s32.totalorder %s111, %s113
    %p117 = scmp.eq.s32.totalorder %s14, 0
    %p118 = por %p116, %p117
    %p119 = scmp.ne.s32.totalorder %s111, %s113
    %p120 = scmp.eq.s32.totalorder %s19, 1
    %p121 = por %p119, %p120
    %p122 = scmp.ne.s32.totalorder %s113, %s114
    %p123 = scmp.eq.s32.totalorder %s19, 0
    %p124 = por %p122, %p123
    %p125 = scmp.ne.s32.totalorder %s113, %s114
    %p126 = scmp.eq.s32.totalorder %s20, 1
    %p127 = por %p125, %p126
    %p129 = scmp.ne.s32.totalorder %s114, %s128
    %p130 = scmp.eq.s32.totalorder %s20, 0
    %p131 = por %p129, %p130
    %s132 = ssub.s32 %s14, %s21
    %p133 = scmp.eq.s32.totalorder %s132, 0
    %s135 = sadd.s32 %s134, 1
    %s136 = scalar_select %p133, %s134, %s135
    %p139 = pneg %p133
    %p140 = scmp.eq.s32.totalorder %s14, 1
    %p141 = por %p139, %p140
    %p142 = scmp.ne.s32.totalorder %s134, %s137
    %p143 = scmp.eq.s32.totalorder %s14, 0
    %p144 = por %p142, %p143
    %p145 = scmp.ne.s32.totalorder %s134, %s137
    %p146 = scmp.eq.s32.totalorder %s19, 1
    %p147 = por %p145, %p146
    %p148 = scmp.ne.s32.totalorder %s137, %s138
    %p149 = scmp.eq.s32.totalorder %s19, 0
    %p150 = por %p148, %p149
    %p151 = scmp.ne.s32.totalorder %s137, %s138
    %p152 = scmp.eq.s32.totalorder %s20, 1
    %p153 = por %p151, %p152
    %p155 = scmp.ne.s32.totalorder %s138, %s154
    %p156 = scmp.eq.s32.totalorder %s20, 0
    %p157 = por %p155, %p156
    %s158 = ssub.s32 %s14, %s21
    %p159 = scmp.eq.s32.totalorder %s158, 0
    %s161 = sadd.s32 %s160, 1
    %s162 = scalar_select %p159, %s160, %s161
    %p165 = pneg %p159
    %p166 = scmp.eq.s32.totalorder %s14, 1
    %p167 = por %p165, %p166
    %p168 = scmp.ne.s32.totalorder %s160, %s163
    %p169 = scmp.eq.s32.totalorder %s14, 0
    %p170 = por %p168, %p169
    %p171 = scmp.ne.s32.totalorder %s160, %s163
    %p172 = scmp.eq.s32.totalorder %s19, 1
    %p173 = por %p171, %p172
    %p174 = scmp.ne.s32.totalorder %s163, %s164
    %p175 = scmp.eq.s32.totalorder %s19, 0
    %p176 = por %p174, %p175
    %p177 = scmp.ne.s32.totalorder %s163, %s164
    %p178 = scmp.eq.s32.totalorder %s20, 1
    %p179 = por %p177, %p178
    %p181 = scmp.ne.s32.totalorder %s164, %s180
    %p182 = scmp.eq.s32.totalorder %s20, 0
    %p183 = por %p181, %p182
    %s184 = ssub.s32 %s14, %s21
    %p185 = scmp.eq.s32.totalorder %s184, 0
    %s187 = sadd.s32 %s186, 1
    %s188 = scalar_select %p185, %s186, %s187
    %p191 = pneg %p185
    %p192 = scmp.eq.s32.totalorder %s14, 1
    %p193 = por %p191, %p192
    %p194 = scmp.ne.s32.totalorder %s186, %s189
    %p195 = scmp.eq.s32.totalorder %s14, 0
    %p196 = por %p194, %p195
    %p197 = scmp.ne.s32.totalorder %s186, %s189
    %p198 = scmp.eq.s32.totalorder %s19, 1
    %p199 = por %p197, %p198
    %p200 = scmp.ne.s32.totalorder %s189, %s190
    %p201 = scmp.eq.s32.totalorder %s19, 0
    %p202 = por %p200, %p201
    %p203 = scmp.ne.s32.totalorder %s189, %s190
    %p204 = scmp.eq.s32.totalorder %s20, 1
    %p205 = por %p203, %p204
    %p207 = scmp.ne.s32.totalorder %s190, %s206
    %p208 = scmp.eq.s32.totalorder %s20, 0
    %p209 = por %p207, %p208
    %p210 = scmp.le.s32.totalorder 1, %s14
    %p211 = scmp.lt.s32.totalorder %s14, 3
    %p212 = pnand %p210, %p211
    %p213 = pneg %p212
    // Predicated region
    $region9: #{dense_block_forward.5} parent=5 // pred_check
      _
    $region10: #{dense_block_forward.5} parent=5 // pred_check_branch
      %215 = sbr.rel (%p212) target = $region12
    $region11: #{dense_block_forward.5} parent=5 // pred_region
      %s216 = ssub.s32 %s14, 1
      // Predicated region
      $region13: #{dense_block_forward.5} parent=11 // pred_check
        %p217 = pneg %p61
      $region14: #{dense_block_forward.5} parent=11 // pred_check_branch
        %219 = sbr.rel (%p217) target = $region16
      $region15: #{dense_block_forward.5} parent=11 // pred_region
        _
      $region16: #{dense_block_forward.5} parent=11 // pred_fallthru
        _
      // Predicated region
      $region17: #{dense_block_forward.5} parent=11 // pred_check
        %p220 = pneg %p82
      $region18: #{dense_block_forward.5} parent=11 // pred_check_branch
        %222 = sbr.rel (%p220) target = $region20
      $region19: #{dense_block_forward.5} parent=11 // pred_region
        _
      $region20: #{dense_block_forward.5} parent=11 // pred_fallthru
        _
      // Predicated region
      $region21: #{dense_block_forward.5} parent=11 // pred_check
        %p223 = pneg %p103
      $region22: #{dense_block_forward.5} parent=11 // pred_check_branch
        %225 = sbr.rel (%p223) target = $region24
      $region23: #{dense_block_forward.5} parent=11 // pred_region
        _
      $region24: #{dense_block_forward.5} parent=11 // pred_fallthru
        _
      // Predicated region
      $region25: #{dense_block_forward.5} parent=11 // pred_check
        %p226 = pneg %p124
      $region26: #{dense_block_forward.5} parent=11 // pred_check_branch
        %228 = sbr.rel (%p226) target = $region28
      $region27: #{dense_block_forward.5} parent=11 // pred_region
        _
      $region28: #{dense_block_forward.5} parent=11 // pred_fallthru
        _
    $region12: #{dense_block_forward.5} parent=5 // pred_fallthru
      _
    %p229 = scmp.lt.s32.totalorder %s14, 2
    // Predicated region
    $region29: #{dense_block_forward.5} parent=5 // pred_check
      %p230 = pneg %p229
    $region30: #{dense_block_forward.5} parent=5 // pred_check_branch
      %232 = sbr.rel (%p230) target = $region32
    $region31: #{dense_block_forward.5} parent=5 // pred_region
      // Predicated region
      $region33: #{dense_block_forward.5} parent=31 // pred_check
        %p233 = pneg %p34
      $region34: #{dense_block_forward.5} parent=31 // pred_check_branch
        %235 = sbr.rel (%p233) target = $region36
      $region35: #{dense_block_forward.5} parent=31 // pred_region
        %p236 = scmp.lt.s32.totalorder %s14, 1
        %s237 = scalar_select %p236, %s14, 1
        %s238 = smul.addr %s237, 32
        %s239 = smul.addr %s238, 8
        %s240 = scalar_lea.vmem %s0, %s239
      $region36: #{dense_block_forward.5} parent=31 // pred_fallthru
        _
    $region32: #{dense_block_forward.5} parent=5 // pred_fallthru
      _
    %p241 = scmp.le.s32.totalorder 1, %s14
    %p242 = scmp.lt.s32.totalorder %s14, 3
    %p243 = pnand %p241, %p242
    %p244 = pneg %p243
    // Predicated region
    $region37: #{dense_block_forward.5} parent=5 // pred_check
      _
    $region38: #{dense_block_forward.5} parent=5 // pred_check_branch
      %246 = sbr.rel (%p243) target = $region40
    $region39: #{dense_block_forward.5} parent=5 // pred_region
      %s247 = ssub.s32 %s14, 1
      %p248 = scmp.lt.s32.totalorder %s19, 1
      %s249 = scalar_select %p248, %s19, 1
      %s250 = smul.addr %s249, 32
      %s251 = smul.addr %s250, 8
      %s252 = scalar_lea.vmem %s0, %s251
      %p253 = pneg %p40
      %p254 = pneg %p37
      %p255 = pneg %p61
      %p256 = pneg %p58
      %p257 = pneg %p82
      %p258 = pneg %p79
      %p259 = pneg %p103
      %p260 = pneg %p100
      %p261 = pneg %p124
      %p262 = pneg %p121
      %p263 = pneg %p150
      %p264 = pneg %p147
      %p265 = scmp.lt.s32.totalorder %s19, 1
      %s266 = scalar_select %p265, %s19, 1
      %s267 = smul.addr %s266, 32
      %s268 = smul.addr %s267, 8
      %s269 = scalar_lea.vmem %s5, %s268
      %p270 = pneg %p176
      %p271 = pneg %p173
      %p272 = scmp.lt.s32.totalorder %s19, 1
      %s273 = scalar_select %p272, %s19, 1
      %s274 = smul.addr %s273, 8
      %s275 = scalar_lea.vmem %s6, %s274
      %p276 = pneg %p202
      %p277 = pneg %p199
      %p278 = scmp.lt.s32.totalorder %s19, 1
      %s279 = scalar_select %p278, %s19, 1
      %s280 = smul.addr %s279, 8
      %s281 = scalar_lea.vmem %s7, %s280
      %p282 = scmp.lt.s32.totalorder %s19, 1
      %s283 = scalar_select %p282, %s19, 1
      %s284 = smul.addr %s283, 32
      %s285 = smul.addr %s284, 8
      %s286 = scalar_lea.vmem %s0, %s285
      %p287 = scmp.lt.s32.totalorder %s19, 1
      %s288 = scalar_select %p287, %s19, 1
      %s289 = smul.addr %s288, 32
      %s290 = smul.addr %s289, 8
      %s291 = scalar_lea.vmem %s5, %s290
      %p292 = scmp.lt.s32.totalorder %s19, 1
      %s293 = scalar_select %p292, %s19, 1
      %s294 = smul.addr %s293, 8
      %s295 = scalar_lea.vmem %s6, %s294
      %p296 = scmp.lt.s32.totalorder %s19, 1
      %s297 = scalar_select %p296, %s19, 1
      %s298 = smul.addr %s297, 8
      %s299 = scalar_lea.vmem %s7, %s298
      %v301 = vld [vmem:[%s286] sm:$0xff]
      %v302 = vld [vmem:[%s286 + $0x8] sm:$0xff]
      %v303 = vld [vmem:[%s286 + $0x10] sm:$0xff]
      %v304 = vld [vmem:[%s286 + $0x18] sm:$0xff]
      %v305 = vld [vmem:[%s286 + $0x20] sm:$0xff]
      %v306 = vld [vmem:[%s286 + $0x28] sm:$0xff]
      %v307 = vld [vmem:[%s286 + $0x30] sm:$0xff]
      %v308 = vld [vmem:[%s286 + $0x38] sm:$0xff]
      %v309 = vld [vmem:[%s286 + $0x40] sm:$0xff]
      %v310 = vld [vmem:[%s286 + $0x48] sm:$0xff]
      %v311 = vld [vmem:[%s286 + $0x50] sm:$0xff]
      %v312 = vld [vmem:[%s286 + $0x58] sm:$0xff]
      %v313 = vld [vmem:[%s286 + $0x60] sm:$0xff]
      %v314 = vld [vmem:[%s286 + $0x68] sm:$0xff]
      %v315 = vld [vmem:[%s286 + $0x70] sm:$0xff]
      %v316 = vld [vmem:[%s286 + $0x78] sm:$0xff]
      %v317 = vld [vmem:[%s286 + $0x80] sm:$0xff]
      %v318 = vld [vmem:[%s286 + $0x88] sm:$0xff]
      %v319 = vld [vmem:[%s286 + $0x90] sm:$0xff]
      %v320 = vld [vmem:[%s286 + $0x98] sm:$0xff]
      %v321 = vld [vmem:[%s286 + $0xa0] sm:$0xff]
      %v322 = vld [vmem:[%s286 + $0xa8] sm:$0xff]
      %v323 = vld [vmem:[%s286 + $0xb0] sm:$0xff]
      %v324 = vld [vmem:[%s286 + $0xb8] sm:$0xff]
      %v325 = vld [vmem:[%s286 + $0xc0] sm:$0xff]
      %v326 = vld [vmem:[%s286 + $0xc8] sm:$0xff]
      %v327 = vld [vmem:[%s286 + $0xd0] sm:$0xff]
      %v328 = vld [vmem:[%s286 + $0xd8] sm:$0xff]
      %v329 = vld [vmem:[%s286 + $0xe0] sm:$0xff]
      %v330 = vld [vmem:[%s286 + $0xe8] sm:$0xff]
      %v331 = vld [vmem:[%s286 + $0xf0] sm:$0xff]
      %v332 = vld [vmem:[%s286 + $0xf8] sm:$0xff]
      %v333 = vld [vmem:[%s1] sm:$0x1]
      %v335 = vlaneseq
      %v336 = vshrl.u32 %v335, 7
      %v337 = vsub.s32 0, %v336
      %v338 = vrot.slane %v333, %v337
      %v340 = vmul.f32 %v301, %v338
      %v341 = vmul.f32 %v302, %v338
      %v342 = vmul.f32 %v303, %v338
      %v343 = vmul.f32 %v304, %v338
      %v344 = vmul.f32 %v305, %v338
      %v345 = vmul.f32 %v306, %v338
      %v346 = vmul.f32 %v307, %v338
      %v347 = vmul.f32 %v308, %v338
      %v348 = vmul.f32 %v309, %v338
      %v349 = vmul.f32 %v310, %v338
      %v350 = vmul.f32 %v311, %v338
      %v351 = vmul.f32 %v312, %v338
      %v352 = vmul.f32 %v313, %v338
      %v353 = vmul.f32 %v314, %v338
      %v354 = vmul.f32 %v315, %v338
      %v355 = vmul.f32 %v316, %v338
      %v356 = vmul.f32 %v317, %v338
      %v357 = vmul.f32 %v318, %v338
      %v358 = vmul.f32 %v319, %v338
      %v359 = vmul.f32 %v320, %v338
      %v360 = vmul.f32 %v321, %v338
      %v361 = vmul.f32 %v322, %v338
      %v362 = vmul.f32 %v323, %v338
      %v363 = vmul.f32 %v324, %v338
      %v364 = vmul.f32 %v325, %v338
      %v365 = vmul.f32 %v326, %v338
      %v366 = vmul.f32 %v327, %v338
      %v367 = vmul.f32 %v328, %v338
      %v368 = vmul.f32 %v329, %v338
      %v369 = vmul.f32 %v330, %v338
      %v370 = vmul.f32 %v331, %v338
      %v371 = vmul.f32 %v332, %v338
      %v372 = vld [vmem:[%s2] sm:$0x1]
      %v374 = vlaneseq
      %v375 = vshrl.u32 %v374, 7
      %v376 = vsub.s32 0, %v375
      %v377 = vrot.slane %v372, %v376
      %v379 = vadd.f32 %v340, %v377
      %v380 = vadd.f32 %v341, %v377
      %v381 = vadd.f32 %v342, %v377
      %v382 = vadd.f32 %v343, %v377
      %v383 = vadd.f32 %v344, %v377
      %v384 = vadd.f32 %v345, %v377
      %v385 = vadd.f32 %v346, %v377
      %v386 = vadd.f32 %v347, %v377
      %v387 = vadd.f32 %v348, %v377
      %v388 = vadd.f32 %v349, %v377
      %v389 = vadd.f32 %v350, %v377
      %v390 = vadd.f32 %v351, %v377
      %v391 = vadd.f32 %v352, %v377
      %v392 = vadd.f32 %v353, %v377
      %v393 = vadd.f32 %v354, %v377
      %v394 = vadd.f32 %v355, %v377
      %v395 = vadd.f32 %v356, %v377
      %v396 = vadd.f32 %v357, %v377
      %v397 = vadd.f32 %v358, %v377
      %v398 = vadd.f32 %v359, %v377
      %v399 = vadd.f32 %v360, %v377
      %v400 = vadd.f32 %v361, %v377
      %v401 = vadd.f32 %v362, %v377
      %v402 = vadd.f32 %v363, %v377
      %v403 = vadd.f32 %v364, %v377
      %v404 = vadd.f32 %v365, %v377
      %v405 = vadd.f32 %v366, %v377
      %v406 = vadd.f32 %v367, %v377
      %v407 = vadd.f32 %v368, %v377
      %v408 = vadd.f32 %v369, %v377
      %v409 = vadd.f32 %v370, %v377
      %v410 = vadd.f32 %v371, %v377
      %v411 = vmax.f32 %v379, 0.0
      %v412 = vmax.f32 %v380, 0.0
      %v413 = vmax.f32 %v381, 0.0
      %v414 = vmax.f32 %v382, 0.0
      %v415 = vmax.f32 %v383, 0.0
      %v416 = vmax.f32 %v384, 0.0
      %v417 = vmax.f32 %v385, 0.0
      %v418 = vmax.f32 %v386, 0.0
      %v419 = vmax.f32 %v387, 0.0
      %v420 = vmax.f32 %v388, 0.0
      %v421 = vmax.f32 %v389, 0.0
      %v422 = vmax.f32 %v390, 0.0
      %v423 = vmax.f32 %v391, 0.0
      %v424 = vmax.f32 %v392, 0.0
      %v425 = vmax.f32 %v393, 0.0
      %v426 = vmax.f32 %v394, 0.0
      %v427 = vmax.f32 %v395, 0.0
      %v428 = vmax.f32 %v396, 0.0
      %v429 = vmax.f32 %v397, 0.0
      %v430 = vmax.f32 %v398, 0.0
      %v431 = vmax.f32 %v399, 0.0
      %v432 = vmax.f32 %v400, 0.0
      %v433 = vmax.f32 %v401, 0.0
      %v434 = vmax.f32 %v402, 0.0
      %v435 = vmax.f32 %v403, 0.0
      %v436 = vmax.f32 %v404, 0.0
      %v437 = vmax.f32 %v405, 0.0
      %v438 = vmax.f32 %v406, 0.0
      %v439 = vmax.f32 %v407, 0.0
      %v440 = vmax.f32 %v408, 0.0
      %v441 = vmax.f32 %v409, 0.0
      %v442 = vmax.f32 %v410, 0.0
      %v443 = vlaneseq
      %v444 = vshrl.u32 %v443, 7
      %v445 = vadd.s32 %v444, 8
      %v446 = vrot.slane %v411, 7
      %v447 = vrot.slane %v412, 7
      %v448 = vrot.slane %v413, 7
      %v449 = vrot.slane %v414, 7
      %v450 = vrot.slane %v415, 7
      %v451 = vrot.slane %v416, 7
      %v452 = vrot.slane %v417, 7
      %v453 = vrot.slane %v418, 7
      %v454 = vrot.slane %v419, 7
      %v455 = vrot.slane %v420, 7
      %v456 = vrot.slane %v421, 7
      %v457 = vrot.slane %v422, 7
      %v458 = vrot.slane %v423, 7
      %v459 = vrot.slane %v424, 7
      %v460 = vrot.slane %v425, 7
      %v461 = vrot.slane %v426, 7
      %v462 = vrot.slane %v427, 7
      %v463 = vrot.slane %v428, 7
      %v464 = vrot.slane %v429, 7
      %v465 = vrot.slane %v430, 7
      %v466 = vrot.slane %v431, 7
      %v467 = vrot.slane %v432, 7
      %v468 = vrot.slane %v433, 7
      %v469 = vrot.slane %v434, 7
      %v470 = vrot.slane %v435, 7
      %v471 = vrot.slane %v436, 7
      %v472 = vrot.slane %v437, 7
      %v473 = vrot.slane %v438, 7
      %v474 = vrot.slane %v439, 7
      %v475 = vrot.slane %v440, 7
      %v476 = vrot.slane %v441, 7
      %v477 = vrot.slane %v442, 7
      %vm478 = vcmp.lt.s32.totalorder %v444, 1
      %v479 = vsel %vm478, %v476, %v477
      %v480 = vsel %vm478, %v475, %v476
      %v481 = vsel %vm478, %v474, %v475
      %v482 = vsel %vm478, %v473, %v474
      %v483 = vsel %vm478, %v472, %v473
      %v484 = vsel %vm478, %v471, %v472
      %v485 = vsel %vm478, %v470, %v471
      %v486 = vsel %vm478, %v469, %v470
      %v487 = vsel %vm478, %v468, %v469
      %v488 = vsel %vm478, %v467, %v468
      %v489 = vsel %vm478, %v466, %v467
      %v490 = vsel %vm478, %v465, %v466
      %v491 = vsel %vm478, %v464, %v465
      %v492 = vsel %vm478, %v463, %v464
      %v493 = vsel %vm478, %v462, %v463
      %v494 = vsel %vm478, %v461, %v462
      %v495 = vsel %vm478, %v460, %v461
      %v496 = vsel %vm478, %v459, %v460
      %v497 = vsel %vm478, %v458, %v459
      %v498 = vsel %vm478, %v457, %v458
      %v499 = vsel %vm478, %v456, %v457
      %v500 = vsel %vm478, %v455, %v456
      %v501 = vsel %vm478, %v454, %v455
      %v502 = vsel %vm478, %v453, %v454
      %v503 = vsel %vm478, %v452, %v453
      %v504 = vsel %vm478, %v451, %v452
      %v505 = vsel %vm478, %v450, %v451
      %v506 = vsel %vm478, %v449, %v450
      %v507 = vsel %vm478, %v448, %v449
      %v508 = vsel %vm478, %v447, %v448
      %v509 = vsel %vm478, %v446, %v447
      %v510 = vsel %vm478, %v477, %v446
      %vm511 = vcmp.eq.s32.totalorder %v444, 0
      %vm512 = vcmp.eq.s32.totalorder %v445, 0
      %v513 = vsel %vm511, 0.0, %v510
      %v514 = vsel %vm512, 0.0, %v509
      %v515 = vsel %vm511, 0.0, %v508
      %v516 = vsel %vm512, 0.0, %v507
      %v517 = vsel %vm511, 0.0, %v506
      %v518 = vsel %vm512, 0.0, %v505
      %v519 = vsel %vm511, 0.0, %v504
      %v520 = vsel %vm512, 0.0, %v503
      %v521 = vsel %vm511, 0.0, %v502
      %v522 = vsel %vm512, 0.0, %v501
      %v523 = vsel %vm511, 0.0, %v500
      %v524 = vsel %vm512, 0.0, %v499
      %v525 = vsel %vm511, 0.0, %v498
      %v526 = vsel %vm512, 0.0, %v497
      %v527 = vsel %vm511, 0.0, %v496
      %v528 = vsel %vm512, 0.0, %v495
      %v529 = vsel %vm511, 0.0, %v494
      %v530 = vsel %vm512, 0.0, %v493
      %v531 = vsel %vm511, 0.0, %v492
      %v532 = vsel %vm512, 0.0, %v491
      %v533 = vsel %vm511, 0.0, %v490
      %v534 = vsel %vm512, 0.0, %v489
      %v535 = vsel %vm511, 0.0, %v488
      %v536 = vsel %vm512, 0.0, %v487
      %v537 = vsel %vm511, 0.0, %v486
      %v538 = vsel %vm512, 0.0, %v485
      %v539 = vsel %vm511, 0.0, %v484
      %v540 = vsel %vm512, 0.0, %v483
      %v541 = vsel %vm511, 0.0, %v482
      %v542 = vsel %vm512, 0.0, %v481
      %v543 = vsel %vm511, 0.0, %v480
      %v544 = vsel %vm512, 0.0, %v479
      %v545 = vrot.slane %v411, 1
      %v546 = vrot.slane %v412, 1
      %v547 = vrot.slane %v413, 1
      %v548 = vrot.slane %v414, 1
      %v549 = vrot.slane %v415, 1
      %v550 = vrot.slane %v416, 1
      %v551 = vrot.slane %v417, 1
      %v552 = vrot.slane %v418, 1
      %v553 = vrot.slane %v419, 1
      %v554 = vrot.slane %v420, 1
      %v555 = vrot.slane %v421, 1
      %v556 = vrot.slane %v422, 1
      %v557 = vrot.slane %v423, 1
      %v558 = vrot.slane %v424, 1
      %v559 = vrot.slane %v425, 1
      %v560 = vrot.slane %v426, 1
      %v561 = vrot.slane %v427, 1
      %v562 = vrot.slane %v428, 1
      %v563 = vrot.slane %v429, 1
      %v564 = vrot.slane %v430, 1
      %v565 = vrot.slane %v431, 1
      %v566 = vrot.slane %v432, 1
      %v567 = vrot.slane %v433, 1
      %v568 = vrot.slane %v434, 1
      %v569 = vrot.slane %v435, 1
      %v570 = vrot.slane %v436, 1
      %v571 = vrot.slane %v437, 1
      %v572 = vrot.slane %v438, 1
      %v573 = vrot.slane %v439, 1
      %v574 = vrot.slane %v440, 1
      %v575 = vrot.slane %v441, 1
      %v576 = vrot.slane %v442, 1
      %vm577 = vcmp.lt.s32.totalorder %v444, 7
      %v578 = vsel %vm577, %v575, %v576
      %v579 = vsel %vm577, %v574, %v575
      %v580 = vsel %vm577, %v573, %v574
      %v581 = vsel %vm577, %v572, %v573
      %v582 = vsel %vm577, %v571, %v572
      %v583 = vsel %vm577, %v570, %v571
      %v584 = vsel %vm577, %v569, %v570
      %v585 = vsel %vm577, %v568, %v569
      %v586 = vsel %vm577, %v567, %v568
      %v587 = vsel %vm577, %v566, %v567
      %v588 = vsel %vm577, %v565, %v566
      %v589 = vsel %vm577, %v564, %v565
      %v590 = vsel %vm577, %v563, %v564
      %v591 = vsel %vm577, %v562, %v563
      %v592 = vsel %vm577, %v561, %v562
      %v593 = vsel %vm577, %v560, %v561
      %v594 = vsel %vm577, %v559, %v560
      %v595 = vsel %vm577, %v558, %v559
      %v596 = vsel %vm577, %v557, %v558
      %v597 = vsel %vm577, %v556, %v557
      %v598 = vsel %vm577, %v555, %v556
      %v599 = vsel %vm577, %v554, %v555
      %v600 = vsel %vm577, %v553, %v554
      %v601 = vsel %vm577, %v552, %v553
      %v602 = vsel %vm577, %v551, %v552
      %v603 = vsel %vm577, %v550, %v551
      %v604 = vsel %vm577, %v549, %v550
      %v605 = vsel %vm577, %v548, %v549
      %v606 = vsel %vm577, %v547, %v548
      %v607 = vsel %vm577, %v546, %v547
      %v608 = vsel %vm577, %v545, %v546
      %v609 = vsel %vm577, %v576, %v545
      %vm610 = vcmp.eq.s32.totalorder %v444, 15
      %vm611 = vcmp.eq.s32.totalorder %v445, 15
      %v612 = vsel %vm610, 0.0, %v608
      %v613 = vsel %vm611, 0.0, %v607
      %v614 = vsel %vm610, 0.0, %v606
      %v615 = vsel %vm611, 0.0, %v605
      %v616 = vsel %vm610, 0.0, %v604
      %v617 = vsel %vm611, 0.0, %v603
      %v618 = vsel %vm610, 0.0, %v602
      %v619 = vsel %vm611, 0.0, %v601
      %v620 = vsel %vm610, 0.0, %v600
      %v621 = vsel %vm611, 0.0, %v599
      %v622 = vsel %vm610, 0.0, %v598
      %v623 = vsel %vm611, 0.0, %v597
      %v624 = vsel %vm610, 0.0, %v596
      %v625 = vsel %vm611, 0.0, %v595
      %v626 = vsel %vm610, 0.0, %v594
      %v627 = vsel %vm611, 0.0, %v593
      %v628 = vsel %vm610, 0.0, %v592
      %v629 = vsel %vm611, 0.0, %v591
      %v630 = vsel %vm610, 0.0, %v590
      %v631 = vsel %vm611, 0.0, %v589
      %v632 = vsel %vm610, 0.0, %v588
      %v633 = vsel %vm611, 0.0, %v587
      %v634 = vsel %vm610, 0.0, %v586
      %v635 = vsel %vm611, 0.0, %v585
      %v636 = vsel %vm610, 0.0, %v584
      %v637 = vsel %vm611, 0.0, %v583
      %v638 = vsel %vm610, 0.0, %v582
      %v639 = vsel %vm611, 0.0, %v581
      %v640 = vsel %vm610, 0.0, %v580
      %v641 = vsel %vm611, 0.0, %v579
      %v642 = vsel %vm610, 0.0, %v578
      %v643 = vsel %vm611, 0.0, %v609
      %v644 = vpack.c.bf16 0.0, 0.0
      %v645 = vpack.c.bf16 %v514, %v513
      %v646 = vpack.c.bf16 %v412, %v411
      %v647 = vpack.c.bf16 %v613, %v612
      %v648 = vpack.c.bf16 %v516, %v515
      %v649 = vpack.c.bf16 %v414, %v413
      %v650 = vpack.c.bf16 %v615, %v614
      %v651 = vpack.c.bf16 %v518, %v517
      %v652 = vpack.c.bf16 %v416, %v415
      %v653 = vpack.c.bf16 %v617, %v616
      %v654 = vpack.c.bf16 %v520, %v519
      %v655 = vpack.c.bf16 %v418, %v417
      %v656 = vpack.c.bf16 %v619, %v618
      %v657 = vpack.c.bf16 %v522, %v521
      %v658 = vpack.c.bf16 %v420, %v419
      %v659 = vpack.c.bf16 %v621, %v620
      %v660 = vpack.c.bf16 %v524, %v523
      %v661 = vpack.c.bf16 %v422, %v421
      %v662 = vpack.c.bf16 %v623, %v622
      %v663 = vpack.c.bf16 %v526, %v525
      %v664 = vpack.c.bf16 %v424, %v423
      %v665 = vpack.c.bf16 %v625, %v624
      %v666 = vpack.c.bf16 %v528, %v527
      %v667 = vpack.c.bf16 %v426, %v425
      %v668 = vpack.c.bf16 %v627, %v626
      %v669 = vpack.c.bf16 %v530, %v529
      %v670 = vpack.c.bf16 %v428, %v427
      %v671 = vpack.c.bf16 %v629, %v628
      %v672 = vpack.c.bf16 %v532, %v531
      %v673 = vpack.c.bf16 %v430, %v429
      %v674 = vpack.c.bf16 %v631, %v630
      %v675 = vpack.c.bf16 %v534, %v533
      %v676 = vpack.c.bf16 %v432, %v431
      %v677 = vpack.c.bf16 %v633, %v632
      %v678 = vpack.c.bf16 %v536, %v535
      %v679 = vpack.c.bf16 %v434, %v433
      %v680 = vpack.c.bf16 %v635, %v634
      %v681 = vpack.c.bf16 %v538, %v537
      %v682 = vpack.c.bf16 %v436, %v435
      %v683 = vpack.c.bf16 %v637, %v636
      %v684 = vpack.c.bf16 %v540, %v539
      %v685 = vpack.c.bf16 %v438, %v437
      %v686 = vpack.c.bf16 %v639, %v638
      %v687 = vpack.c.bf16 %v542, %v541
      %v688 = vpack.c.bf16 %v440, %v439
      %v689 = vpack.c.bf16 %v641, %v640
      %v690 = vpack.c.bf16 %v544, %v543
      %v691 = vpack.c.bf16 %v442, %v441
      %v692 = vpack.c.bf16 %v643, %v642
      %v693 = vld [vmem:[%s3] sm:$0xf]
      %v694 = vld [vmem:[%s3 + $0x4] sm:$0xf]
      %v695 = vld [vmem:[%s3 + $0x8] sm:$0xf]
      %v696 = vld [vmem:[%s3 + $0xc] sm:$0xf]
      %v697 = vld [vmem:[%s3 + $0x10] sm:$0xf]
      %v698 = vld [vmem:[%s3 + $0x14] sm:$0xf]
      %v699 = vld [vmem:[%s3 + $0x18] sm:$0xf]
      %v700 = vld [vmem:[%s3 + $0x1c] sm:$0xf]
      %v701 = vld [vmem:[%s3 + $0x20] sm:$0xf]
      %v702 = vld [vmem:[%s3 + $0x24] sm:$0xf]
      %v703 = vld [vmem:[%s3 + $0x28] sm:$0xf]
      %v704 = vld [vmem:[%s3 + $0x2c] sm:$0xf]
      %v705 = vld [vmem:[%s3 + $0x30] sm:$0xf]
      %v706 = vld [vmem:[%s3 + $0x34] sm:$0xf]
      %v707 = vld [vmem:[%s3 + $0x38] sm:$0xf]
      %v708 = vld [vmem:[%s3 + $0x3c] sm:$0xf]
      %v709 = vld [vmem:[%s3 + $0x40] sm:$0xf]
      %v710 = vld [vmem:[%s3 + $0x44] sm:$0xf]
      %v711 = vld [vmem:[%s3 + $0x48] sm:$0xf]
      %v712 = vld [vmem:[%s3 + $0x4c] sm:$0xf]
      %v713 = vld [vmem:[%s3 + $0x50] sm:$0xf]
      %v714 = vld [vmem:[%s3 + $0x54] sm:$0xf]
      %v715 = vld [vmem:[%s3 + $0x58] sm:$0xf]
      %v716 = vld [vmem:[%s3 + $0x5c] sm:$0xf]
      %v717 = vld [vmem:[%s3 + $0x60] sm:$0xf]
      %v718 = vld [vmem:[%s3 + $0x64] sm:$0xf]
      %v719 = vld [vmem:[%s3 + $0x68] sm:$0xf]
      %v720 = vld [vmem:[%s3 + $0x6c] sm:$0xf]
      %v721 = vld [vmem:[%s3 + $0x70] sm:$0xf]
      %v722 = vld [vmem:[%s3 + $0x74] sm:$0xf]
      %v723 = vld [vmem:[%s3 + $0x78] sm:$0xf]
      %v724 = vld [vmem:[%s3 + $0x7c] sm:$0xf]
      %v725 = vld [vmem:[%s3 + $0x80] sm:$0xf]
      %v726 = vld [vmem:[%s3 + $0x84] sm:$0xf]
      %v727 = vld [vmem:[%s3 + $0x88] sm:$0xf]
      %v728 = vld [vmem:[%s3 + $0x8c] sm:$0xf]
      %v729 = vld [vmem:[%s3 + $0x90] sm:$0xf]
      %v730 = vld [vmem:[%s3 + $0x94] sm:$0xf]
      %v731 = vld [vmem:[%s3 + $0x98] sm:$0xf]
      %v732 = vld [vmem:[%s3 + $0x9c] sm:$0xf]
      %v733 = vld [vmem:[%s3 + $0xa0] sm:$0xf]
      %v734 = vld [vmem:[%s3 + $0xa4] sm:$0xf]
      %v735 = vld [vmem:[%s3 + $0xa8] sm:$0xf]
      %v736 = vld [vmem:[%s3 + $0xac] sm:$0xf]
      %v737 = vld [vmem:[%s3 + $0xb0] sm:$0xf]
      %v738 = vld [vmem:[%s3 + $0xb4] sm:$0xf]
      %v739 = vld [vmem:[%s3 + $0xb8] sm:$0xf]
      %v740 = vld [vmem:[%s3 + $0xbc] sm:$0xf]
      %v741 = vld [vmem:[%s3 + $0xc0] sm:$0xf]
      %v742 = vld [vmem:[%s3 + $0xc4] sm:$0xf]
      %v743 = vld [vmem:[%s3 + $0xc8] sm:$0xf]
      %v744 = vld [vmem:[%s3 + $0xcc] sm:$0xf]
      %v745 = vld [vmem:[%s3 + $0xd0] sm:$0xf]
      %v746 = vld [vmem:[%s3 + $0xd4] sm:$0xf]
      %v747 = vld [vmem:[%s3 + $0xd8] sm:$0xf]
      %v748 = vld [vmem:[%s3 + $0xdc] sm:$0xf]
      %v749 = vld [vmem:[%s3 + $0xe0] sm:$0xf]
      %v750 = vld [vmem:[%s3 + $0xe4] sm:$0xf]
      %v751 = vld [vmem:[%s3 + $0xe8] sm:$0xf]
      %v752 = vld [vmem:[%s3 + $0xec] sm:$0xf]
      %v753 = vld [vmem:[%s3 + $0xf0] sm:$0xf]
      %v754 = vld [vmem:[%s3 + $0xf4] sm:$0xf]
      %v755 = vld [vmem:[%s3 + $0xf8] sm:$0xf]
      %v756 = vld [vmem:[%s3 + $0xfc] sm:$0xf]
      %v757 = vld [vmem:[%s3 + $0x100] sm:$0xf]
      %v758 = vld [vmem:[%s3 + $0x104] sm:$0xf]
      %v759 = vld [vmem:[%s3 + $0x108] sm:$0xf]
      %v760 = vld [vmem:[%s3 + $0x10c] sm:$0xf]
      %v761 = vld [vmem:[%s3 + $0x110] sm:$0xf]
      %v762 = vld [vmem:[%s3 + $0x114] sm:$0xf]
      %v763 = vld [vmem:[%s3 + $0x118] sm:$0xf]
      %v764 = vld [vmem:[%s3 + $0x11c] sm:$0xf]
      %v765 = vld [vmem:[%s3 + $0x120] sm:$0xf]
      %v766 = vld [vmem:[%s3 + $0x124] sm:$0xf]
      %v767 = vld [vmem:[%s3 + $0x128] sm:$0xf]
      %v768 = vld [vmem:[%s3 + $0x12c] sm:$0xf]
      %v769 = vld [vmem:[%s3 + $0x130] sm:$0xf]
      %v770 = vld [vmem:[%s3 + $0x134] sm:$0xf]
      %v771 = vld [vmem:[%s3 + $0x138] sm:$0xf]
      %v772 = vld [vmem:[%s3 + $0x13c] sm:$0xf]
      %v773 = vld [vmem:[%s3 + $0x140] sm:$0xf]
      %v774 = vld [vmem:[%s3 + $0x144] sm:$0xf]
      %v775 = vld [vmem:[%s3 + $0x148] sm:$0xf]
      %v776 = vld [vmem:[%s3 + $0x14c] sm:$0xf]
      %v777 = vld [vmem:[%s3 + $0x150] sm:$0xf]
      %v778 = vld [vmem:[%s3 + $0x154] sm:$0xf]
      %v779 = vld [vmem:[%s3 + $0x158] sm:$0xf]
      %v780 = vld [vmem:[%s3 + $0x15c] sm:$0xf]
      %v781 = vld [vmem:[%s3 + $0x160] sm:$0xf]
      %v782 = vld [vmem:[%s3 + $0x164] sm:$0xf]
      %v783 = vld [vmem:[%s3 + $0x168] sm:$0xf]
      %v784 = vld [vmem:[%s3 + $0x16c] sm:$0xf]
      %v785 = vld [vmem:[%s3 + $0x170] sm:$0xf]
      %v786 = vld [vmem:[%s3 + $0x174] sm:$0xf]
      %v787 = vld [vmem:[%s3 + $0x178] sm:$0xf]
      %v788 = vld [vmem:[%s3 + $0x17c] sm:$0xf]
      %v789 = vld [vmem:[%s3 + $0x180] sm:$0xf]
      %v790 = vld [vmem:[%s3 + $0x184] sm:$0xf]
      %v791 = vld [vmem:[%s3 + $0x188] sm:$0xf]
      %v792 = vld [vmem:[%s3 + $0x18c] sm:$0xf]
      %v793 = vld [vmem:[%s3 + $0x190] sm:$0xf]
      %v794 = vld [vmem:[%s3 + $0x194] sm:$0xf]
      %v795 = vld [vmem:[%s3 + $0x198] sm:$0xf]
      %v796 = vld [vmem:[%s3 + $0x19c] sm:$0xf]
      %v797 = vld [vmem:[%s3 + $0x1a0] sm:$0xf]
      %v798 = vld [vmem:[%s3 + $0x1a4] sm:$0xf]
      %v799 = vld [vmem:[%s3 + $0x1a8] sm:$0xf]
      %v800 = vld [vmem:[%s3 + $0x1ac] sm:$0xf]
      %v801 = vld [vmem:[%s3 + $0x1b0] sm:$0xf]
      %v802 = vld [vmem:[%s3 + $0x1b4] sm:$0xf]
      %v803 = vld [vmem:[%s3 + $0x1b8] sm:$0xf]
      %v804 = vld [vmem:[%s3 + $0x1bc] sm:$0xf]
      %v805 = vld [vmem:[%s3 + $0x1c0] sm:$0xf]
      %v806 = vld [vmem:[%s3 + $0x1c4] sm:$0xf]
      %v807 = vld [vmem:[%s3 + $0x1c8] sm:$0xf]
      %v808 = vld [vmem:[%s3 + $0x1cc] sm:$0xf]
      %v809 = vld [vmem:[%s3 + $0x1d0] sm:$0xf]
      %v810 = vld [vmem:[%s3 + $0x1d4] sm:$0xf]
      %v811 = vld [vmem:[%s3 + $0x1d8] sm:$0xf]
      %v812 = vld [vmem:[%s3 + $0x1dc] sm:$0xf]
      %v813 = vld [vmem:[%s3 + $0x1e0] sm:$0xf]
      %v814 = vld [vmem:[%s3 + $0x1e4] sm:$0xf]
      %v815 = vld [vmem:[%s3 + $0x1e8] sm:$0xf]
      %v816 = vld [vmem:[%s3 + $0x1ec] sm:$0xf]
      %v817 = vld [vmem:[%s3 + $0x1f0] sm:$0xf]
      %v818 = vld [vmem:[%s3 + $0x1f4] sm:$0xf]
      %v819 = vld [vmem:[%s3 + $0x1f8] sm:$0xf]
      %v820 = vld [vmem:[%s3 + $0x1fc] sm:$0xf]
      %v821 = vld [vmem:[%s3 + $0x200] sm:$0xf]
      %v822 = vld [vmem:[%s3 + $0x204] sm:$0xf]
      %v823 = vld [vmem:[%s3 + $0x208] sm:$0xf]
      %v824 = vld [vmem:[%s3 + $0x20c] sm:$0xf]
      %v825 = vld [vmem:[%s3 + $0x210] sm:$0xf]
      %v826 = vld [vmem:[%s3 + $0x214] sm:$0xf]
      %v827 = vld [vmem:[%s3 + $0x218] sm:$0xf]
      %v828 = vld [vmem:[%s3 + $0x21c] sm:$0xf]
      %v829 = vld [vmem:[%s3 + $0x220] sm:$0xf]
      %v830 = vld [vmem:[%s3 + $0x224] sm:$0xf]
      %v831 = vld [vmem:[%s3 + $0x228] sm:$0xf]
      %v832 = vld [vmem:[%s3 + $0x22c] sm:$0xf]
      %v833 = vld [vmem:[%s3 + $0x230] sm:$0xf]
      %v834 = vld [vmem:[%s3 + $0x234] sm:$0xf]
      %v835 = vld [vmem:[%s3 + $0x238] sm:$0xf]
      %v836 = vld [vmem:[%s3 + $0x23c] sm:$0xf]
      %v837 = vld [vmem:[%s4] sm:$0x1]
      %v839 = vlaneseq
      %v840 = vshrl.u32 %v839, 7
      %v841 = vsub.s32 0, %v840
      %v842 = vrot.slane %v837, %v841
      %v988 = vunpack.c.l.b16 %v693
      %v989 = vunpack.c.l.b16 %v694
      %v990 = vunpack.c.l.b16 %v695
      %v991 = vunpack.c.l.b16 %v696
      %v992 = vunpack.c.l.b16 %v697
      %v993 = vunpack.c.l.b16 %v698
      %v994 = vunpack.c.l.b16 %v699
      %v995 = vunpack.c.l.b16 %v700
      %v996 = vunpack.c.l.b16 %v701
      %v997 = vunpack.c.l.b16 %v702
      %v998 = vunpack.c.l.b16 %v703
      %v999 = vunpack.c.l.b16 %v704
      %v1000 = vunpack.c.l.b16 %v705
      %v1001 = vunpack.c.l.b16 %v706
      %v1002 = vunpack.c.l.b16 %v707
      %v1003 = vunpack.c.l.b16 %v708
      %v1004 = vunpack.c.l.b16 %v709
      %v1005 = vunpack.c.l.b16 %v710
      %v1006 = vunpack.c.l.b16 %v711
      %v1007 = vunpack.c.l.b16 %v712
      %v1008 = vunpack.c.l.b16 %v713
      %v1009 = vunpack.c.l.b16 %v714
      %v1010 = vunpack.c.l.b16 %v715
      %v1011 = vunpack.c.l.b16 %v716
      %v1012 = vunpack.c.l.b16 %v717
      %v1013 = vunpack.c.l.b16 %v718
      %v1014 = vunpack.c.l.b16 %v719
      %v1015 = vunpack.c.l.b16 %v720
      %v1016 = vunpack.c.l.b16 %v721
      %v1017 = vunpack.c.l.b16 %v722
      %v1018 = vunpack.c.l.b16 %v723
      %v1019 = vunpack.c.l.b16 %v724
      %v1020 = vunpack.c.l.b16 %v725
      %v1021 = vunpack.c.l.b16 %v726
      %v1022 = vunpack.c.l.b16 %v727
      %v1023 = vunpack.c.l.b16 %v728
      %v1024 = vunpack.c.l.b16 %v729
      %v1025 = vunpack.c.l.b16 %v730
      %v1026 = vunpack.c.l.b16 %v731
      %v1027 = vunpack.c.l.b16 %v732
      %v1028 = vunpack.c.l.b16 %v733
      %v1029 = vunpack.c.l.b16 %v734
      %v1030 = vunpack.c.l.b16 %v735
      %v1031 = vunpack.c.l.b16 %v736
      %v1032 = vunpack.c.l.b16 %v737
      %v1033 = vunpack.c.l.b16 %v738
      %v1034 = vunpack.c.l.b16 %v739
      %v1035 = vunpack.c.l.b16 %v740
      %v1036 = vunpack.c.l.b16 %v741
      %v1037 = vunpack.c.l.b16 %v742
      %v1038 = vunpack.c.l.b16 %v743
      %v1039 = vunpack.c.l.b16 %v744
      %v1040 = vunpack.c.l.b16 %v745
      %v1041 = vunpack.c.l.b16 %v746
      %v1042 = vunpack.c.l.b16 %v747
      %v1043 = vunpack.c.l.b16 %v748
      %v1044 = vunpack.c.l.b16 %v749
      %v1045 = vunpack.c.l.b16 %v750
      %v1046 = vunpack.c.l.b16 %v751
      %v1047 = vunpack.c.l.b16 %v752
      %v1048 = vunpack.c.l.b16 %v753
      %v1049 = vunpack.c.l.b16 %v754
      %v1050 = vunpack.c.l.b16 %v755
      %v1051 = vunpack.c.l.b16 %v756
      %v1052 = vunpack.c.l.b16 %v757
      %v1053 = vunpack.c.l.b16 %v758
      %v1054 = vunpack.c.l.b16 %v759
      %v1055 = vunpack.c.l.b16 %v760
      %v1056 = vunpack.c.l.b16 %v761
      %v1057 = vunpack.c.l.b16 %v762
      %v1058 = vunpack.c.l.b16 %v763
      %v1059 = vunpack.c.l.b16 %v764
      %v1060 = vunpack.c.l.b16 %v765
      %v1061 = vunpack.c.l.b16 %v766
      %v1062 = vunpack.c.l.b16 %v767
      %v1063 = vunpack.c.l.b16 %v768
      %v1064 = vunpack.c.l.b16 %v769
      %v1065 = vunpack.c.l.b16 %v770
      %v1066 = vunpack.c.l.b16 %v771
      %v1067 = vunpack.c.l.b16 %v772
      %v1068 = vunpack.c.l.b16 %v773
      %v1069 = vunpack.c.l.b16 %v774
      %v1070 = vunpack.c.l.b16 %v775
      %v1071 = vunpack.c.l.b16 %v776
      %v1072 = vunpack.c.l.b16 %v777
      %v1073 = vunpack.c.l.b16 %v778
      %v1074 = vunpack.c.l.b16 %v779
      %v1075 = vunpack.c.l.b16 %v780
      %v1076 = vunpack.c.l.b16 %v781
      %v1077 = vunpack.c.l.b16 %v782
      %v1078 = vunpack.c.l.b16 %v783
      %v1079 = vunpack.c.l.b16 %v784
      %v1080 = vunpack.c.l.b16 %v785
      %v1081 = vunpack.c.l.b16 %v786
      %v1082 = vunpack.c.l.b16 %v787
      %v1083 = vunpack.c.l.b16 %v788
      %v1084 = vunpack.c.l.b16 %v789
      %v1085 = vunpack.c.l.b16 %v790
      %v1086 = vunpack.c.l.b16 %v791
      %v1087 = vunpack.c.l.b16 %v792
      %v1088 = vunpack.c.l.b16 %v793
      %v1089 = vunpack.c.l.b16 %v794
      %v1090 = vunpack.c.l.b16 %v795
      %v1091 = vunpack.c.l.b16 %v796
      %v1092 = vunpack.c.l.b16 %v797
      %v1093 = vunpack.c.l.b16 %v798
      %v1094 = vunpack.c.l.b16 %v799
      %v1095 = vunpack.c.l.b16 %v800
      %v1096 = vunpack.c.l.b16 %v801
      %v1097 = vunpack.c.l.b16 %v802
      %v1098 = vunpack.c.l.b16 %v803
      %v1099 = vunpack.c.l.b16 %v804
      %v1100 = vunpack.c.l.b16 %v805
      %v1101 = vunpack.c.l.b16 %v806
      %v1102 = vunpack.c.l.b16 %v807
      %v1103 = vunpack.c.l.b16 %v808
      %v1104 = vunpack.c.l.b16 %v809
      %v1105 = vunpack.c.l.b16 %v810
      %v1106 = vunpack.c.l.b16 %v811
      %v1107 = vunpack.c.l.b16 %v812
      %v1108 = vunpack.c.l.b16 %v813
      %v1109 = vunpack.c.l.b16 %v814
      %v1110 = vunpack.c.l.b16 %v815
      %v1111 = vunpack.c.l.b16 %v816
      %v1112 = vunpack.c.l.b16 %v817
      %v1113 = vunpack.c.l.b16 %v818
      %v1114 = vunpack.c.l.b16 %v819
      %v1115 = vunpack.c.l.b16 %v820
      %v1116 = vunpack.c.l.b16 %v821
      %v1117 = vunpack.c.l.b16 %v822
      %v1118 = vunpack.c.l.b16 %v823
      %v1119 = vunpack.c.l.b16 %v824
      %v1120 = vunpack.c.l.b16 %v825
      %v1121 = vunpack.c.l.b16 %v826
      %v1122 = vunpack.c.l.b16 %v827
      %v1123 = vunpack.c.l.b16 %v828
      %v1124 = vunpack.c.l.b16 %v829
      %v1125 = vunpack.c.l.b16 %v830
      %v1126 = vunpack.c.l.b16 %v831
      %v1127 = vunpack.c.l.b16 %v832
      %v1128 = vunpack.c.l.b16 %v833
      %v1129 = vunpack.c.l.b16 %v834
      %v1130 = vunpack.c.l.b16 %v835
      %v1131 = vunpack.c.l.b16 %v836
      %v1132 = vpack.c.b16 %v989, %v988
      %v1133 = vpack.c.b16 %v991, %v990
      %v1134 = vpack.c.b16 %v993, %v992
      %v1135 = vpack.c.b16 %v995, %v994
      %v1136 = vpack.c.b16 %v997, %v996
      %v1137 = vpack.c.b16 %v999, %v998
      %v1138 = vpack.c.b16 %v1001, %v1000
      %v1139 = vpack.c.b16 %v1003, %v1002
      %v1140 = vpack.c.b16 %v1005, %v1004
      %v1141 = vpack.c.b16 %v1007, %v1006
      %v1142 = vpack.c.b16 %v1009, %v1008
      %v1143 = vpack.c.b16 %v1011, %v1010
      %v1144 = vpack.c.b16 %v1013, %v1012
      %v1145 = vpack.c.b16 %v1015, %v1014
      %v1146 = vpack.c.b16 %v1017, %v1016
      %v1147 = vpack.c.b16 %v1019, %v1018
      %v1148 = vpack.c.b16 %v1021, %v1020
      %v1149 = vpack.c.b16 %v1023, %v1022
      %v1150 = vpack.c.b16 %v1025, %v1024
      %v1151 = vpack.c.b16 %v1027, %v1026
      %v1152 = vpack.c.b16 %v1029, %v1028
      %v1153 = vpack.c.b16 %v1031, %v1030
      %v1154 = vpack.c.b16 %v1033, %v1032
      %v1155 = vpack.c.b16 %v1035, %v1034
      %v1156 = vpack.c.b16 %v1037, %v1036
      %v1157 = vpack.c.b16 %v1039, %v1038
      %v1158 = vpack.c.b16 %v1041, %v1040
      %v1159 = vpack.c.b16 %v1043, %v1042
      %v1160 = vpack.c.b16 %v1045, %v1044
      %v1161 = vpack.c.b16 %v1047, %v1046
      %v1162 = vpack.c.b16 %v1049, %v1048
      %v1163 = vpack.c.b16 %v1051, %v1050
      %v1164 = vpack.c.b16 %v1053, %v1052
      %v1165 = vpack.c.b16 %v1055, %v1054
      %v1166 = vpack.c.b16 %v1057, %v1056
      %v1167 = vpack.c.b16 %v1059, %v1058
      %v1168 = vpack.c.b16 %v1061, %v1060
      %v1169 = vpack.c.b16 %v1063, %v1062
      %v1170 = vpack.c.b16 %v1065, %v1064
      %v1171 = vpack.c.b16 %v1067, %v1066
      %v1172 = vpack.c.b16 %v1069, %v1068
      %v1173 = vpack.c.b16 %v1071, %v1070
      %v1174 = vpack.c.b16 %v1073, %v1072
      %v1175 = vpack.c.b16 %v1075, %v1074
      %v1176 = vpack.c.b16 %v1077, %v1076
      %v1177 = vpack.c.b16 %v1079, %v1078
      %v1178 = vpack.c.b16 %v1081, %v1080
      %v1179 = vpack.c.b16 %v1083, %v1082
      %v1180 = vpack.c.b16 %v1085, %v1084
      %v1181 = vpack.c.b16 %v1087, %v1086
      %v1182 = vpack.c.b16 %v1089, %v1088
      %v1183 = vpack.c.b16 %v1091, %v1090
      %v1184 = vpack.c.b16 %v1093, %v1092
      %v1185 = vpack.c.b16 %v1095, %v1094
      %v1186 = vpack.c.b16 %v1097, %v1096
      %v1187 = vpack.c.b16 %v1099, %v1098
      %v1188 = vpack.c.b16 %v1101, %v1100
      %v1189 = vpack.c.b16 %v1103, %v1102
      %v1190 = vpack.c.b16 %v1105, %v1104
      %v1191 = vpack.c.b16 %v1107, %v1106
      %v1192 = vpack.c.b16 %v1109, %v1108
      %v1193 = vpack.c.b16 %v1111, %v1110
      %v1194 = vpack.c.b16 %v1113, %v1112
      %v1195 = vpack.c.b16 %v1115, %v1114
      %v1196 = vpack.c.b16 %v1117, %v1116
      %v1197 = vpack.c.b16 %v1119, %v1118
      %v1198 = vpack.c.b16 %v1121, %v1120
      %v1199 = vpack.c.b16 %v1123, %v1122
      %v1200 = vpack.c.b16 %v1125, %v1124
      %v1201 = vpack.c.b16 %v1127, %v1126
      %v1202 = vpack.c.b16 %v1129, %v1128
      %v1203 = vpack.c.b16 %v1131, %v1130
      %1276 = vmatprep.subr.bf16.mxu0 0
      %1277 = vmatpush1.bf16.msra.mxu0 %v1132
      %1278 = vmatprep.subr.bf16.mxu0 0
      %1279 = vmatpush1.bf16.msra.mxu0 %v1133
      %1280 = vmatprep.subr.bf16.mxu0 0
      %1281 = vmatpush1.bf16.msra.mxu0 %v1134
      %1282 = vmatprep.subr.bf16.mxu0 0
      %1283 = vmatpush1.bf16.msra.mxu0 %v1135
      %1284 = vmatprep.subr.bf16.mxu0 0
      %1285 = vmatpush1.bf16.msra.mxu0 %v1136
      %1286 = vmatprep.subr.bf16.mxu0 0
      %1287 = vmatpush1.bf16.msra.mxu0 %v1137
      %1288 = vmatprep.subr.bf16.mxu0 0
      %1289 = vmatpush1.bf16.msra.mxu0 %v1138
      %1290 = vmatprep.subr.bf16.mxu0 0
      %1291 = vmatpush1.bf16.msra.mxu0 %v1139
      %1292 = vmatprep.subr.bf16.mxu0 0
      %1293 = vmatpush1.bf16.msra.mxu0 %v1140
      %1294 = vmatprep.subr.bf16.mxu0 0
      %1295 = vmatpush1.bf16.msra.mxu0 %v1141
      %1296 = vmatprep.subr.bf16.mxu0 0
      %1297 = vmatpush1.bf16.msra.mxu0 %v1142
      %1298 = vmatprep.subr.bf16.mxu0 0
      %1299 = vmatpush1.bf16.msra.mxu0 %v1143
      %1300 = vmatprep.subr.bf16.mxu0 0
      %1301 = vmatpush1.bf16.msra.mxu0 %v1144
      %1302 = vmatprep.subr.bf16.mxu0 0
      %1303 = vmatpush1.bf16.msra.mxu0 %v1145
      %1304 = vmatprep.subr.bf16.mxu0 0
      %1305 = vmatpush1.bf16.msra.mxu0 %v1146
      %1306 = vmatprep.subr.bf16.mxu0 0
      %1307 = vmatpush1.bf16.msra.mxu0 %v1147
      %1308 = vmatprep.mubr.bf16.mxu0 %v644
      %1309 = vmatmul.mubr.bf16.gmra.mrb[0].mxu0 %v644
      %v1310 = vpop.f32.mrb[0].mxu0
      %v1311 = vadd.f32 %v842, %v1310
      %v1312 = vpop.f32.mrb[0].mxu0
      %v1313 = vpop.f32.mrb[0].mxu0
      %v1314 = vadd.f32 %v842, %v1313
      %v1315 = vpop.f32.mrb[0].mxu0
      %1316 = vmatprep.mubr.bf16.mxu0 %v646
      %1317 = vmatmul.mubr.bf16.gmra.mrb[0].mxu0 %v645
      %v1318 = vpop.f32.mrb[0].mxu0
      %v1319 = vadd.f32 %v842, %v1318
      %v1320 = vpop.f32.mrb[0].mxu0
      %v1321 = vpop.f32.mrb[0].mxu0
      %v1322 = vadd.f32 %v842, %v1321
      %v1323 = vpop.f32.mrb[0].mxu0
      %1324 = vmatprep.mubr.bf16.mxu0 %v649
      %1325 = vmatmul.mubr.bf16.gmra.mrb[0].mxu0 %v648
      %v1326 = vpop.f32.mrb[0].mxu0
      %v1327 = vadd.f32 %v842, %v1326
      %v1328 = vpop.f32.mrb[0].mxu0
      %v1329 = vpop.f32.mrb[0].mxu0
      %v1330 = vadd.f32 %v842, %v1329
      %v1331 = vpop.f32.mrb[0].mxu0
      %1332 = vmatprep.mubr.bf16.mxu0 %v652
      %1333 = vmatmul.mubr.bf16.gmra.mrb[0].mxu0 %v651
      %v1334 = vpop.f32.mrb[0].mxu0
      %v1335 = vadd.f32 %v842, %v1334
      %v1336 = vpop.f32.mrb[0].mxu0
      %v1337 = vpop.f32.mrb[0].mxu0
      %v1338 = vadd.f32 %v842, %v1337
      %v1339 = vpop.f32.mrb[0].mxu0
      %1340 = vmatprep.mubr.bf16.mxu0 %v655
      %1341 = vmatmul.mubr.bf16.gmra.mrb[0].mxu0 %v654
      %v1342 = vpop.f32.mrb[0].mxu0
      %v1343 = vadd.f32 %v842, %v1342
      %v1344 = vpop.f32.mrb[0].mxu0
      %v1345 = vpop.f32.mrb[0].mxu0
      %v1346 = vadd.f32 %v842, %v1345
      %v1347 = vpop.f32.mrb[0].mxu0
      %1348 = vmatprep.mubr.bf16.mxu0 %v658
      %1349 = vmatmul.mubr.bf16.gmra.mrb[0].mxu0 %v657
      %v1350 = vpop.f32.mrb[0].mxu0
      %v1351 = vadd.f32 %v842, %v1350
      %v1352 = vpop.f32.mrb[0].mxu0
      %v1353 = vpop.f32.mrb[0].mxu0
      %v1354 = vadd.f32 %v842, %v1353
      %v1355 = vpop.f32.mrb[0].mxu0
      %1356 = vmatprep.mubr.bf16.mxu0 %v661
      %1357 = vmatmul.mubr.bf16.gmra.mrb[0].mxu0 %v660
      %v1358 = vpop.f32.mrb[0].mxu0
      %v1359 = vadd.f32 %v842, %v1358
      %v1360 = vpop.f32.mrb[0].mxu0
      %v1361 = vpop.f32.mrb[0].mxu0
      %v1362 = vadd.f32 %v842, %v1361
      %v1363 = vpop.f32.mrb[0].mxu0
      %1364 = vmatprep.mubr.bf16.mxu0 %v664
      %1365 = vmatmul.mubr.bf16.gmra.mrb[0].mxu0 %v663
      %v1366 = vpop.f32.mrb[0].mxu0
      %v1367 = vadd.f32 %v842, %v1366
      %v1368 = vpop.f32.mrb[0].mxu0
      %v1369 = vpop.f32.mrb[0].mxu0
      %v1370 = vadd.f32 %v842, %v1369
      %v1371 = vpop.f32.mrb[0].mxu0
      %1372 = vmatprep.mubr.bf16.mxu0 %v667
      %1373 = vmatmul.mubr.bf16.gmra.mrb[0].mxu0 %v666
      %v1374 = vpop.f32.mrb[0].mxu0
      %v1375 = vadd.f32 %v842, %v1374
      %v1376 = vpop.f32.mrb[0].mxu0
      %v1377 = vpop.f32.mrb[0].mxu0
      %v1378 = vadd.f32 %v842, %v1377
      %v1379 = vpop.f32.mrb[0].mxu0
      %1380 = vmatprep.mubr.bf16.mxu0 %v670
      %1381 = vmatmul.mubr.bf16.gmra.mrb[0].mxu0 %v669
      %v1382 = vpop.f32.mrb[0].mxu0
      %v1383 = vadd.f32 %v842, %v1382
      %v1384 = vpop.f32.mrb[0].mxu0
      %v1385 = vpop.f32.mrb[0].mxu0
      %v1386 = vadd.f32 %v842, %v1385
      %v1387 = vpop.f32.mrb[0].mxu0
      %1388 = vmatprep.mubr.bf16.mxu0 %v673
      %1389 = vmatmul.mubr.bf16.gmra.mrb[0].mxu0 %v672
      %v1390 = vpop.f32.mrb[0].mxu0
      %v1391 = vadd.f32 %v842, %v1390
      %v1392 = vpop.f32.mrb[0].mxu0
      %v1393 = vpop.f32.mrb[0].mxu0
      %v1394 = vadd.f32 %v842, %v1393
      %v1395 = vpop.f32.mrb[0].mxu0
      %1396 = vmatprep.mubr.bf16.mxu0 %v676
      %1397 = vmatmul.mubr.bf16.gmra.mrb[0].mxu0 %v675
      %v1398 = vpop.f32.mrb[0].mxu0
      %v1399 = vadd.f32 %v842, %v1398
      %v1400 = vpop.f32.mrb[0].mxu0
      %v1401 = vpop.f32.mrb[0].mxu0
      %v1402 = vadd.f32 %v842, %v1401
      %v1403 = vpop.f32.mrb[0].mxu0
      %1404 = vmatprep.mubr.bf16.mxu0 %v679
      %1405 = vmatmul.mubr.bf16.gmra.mrb[0].mxu0 %v678
      %v1406 = vpop.f32.mrb[0].mxu0
      %v1407 = vadd.f32 %v842, %v1406
      %v1408 = vpop.f32.mrb[0].mxu0
      %v1409 = vpop.f32.mrb[0].mxu0
      %v1410 = vadd.f32 %v842, %v1409
      %v1411 = vpop.f32.mrb[0].mxu0
      %1412 = vmatprep.mubr.bf16.mxu0 %v682
      %1413 = vmatmul.mubr.bf16.gmra.mrb[0].mxu0 %v681
      %v1414 = vpop.f32.mrb[0].mxu0
      %v1415 = vadd.f32 %v842, %v1414
      %v1416 = vpop.f32.mrb[0].mxu0
      %v1417 = vpop.f32.mrb[0].mxu0
      %v1418 = vadd.f32 %v842, %v1417
      %v1419 = vpop.f32.mrb[0].mxu0
      %1420 = vmatprep.mubr.bf16.mxu0 %v685
      %1421 = vmatmul.mubr.bf16.gmra.mrb[0].mxu0 %v684
      %v1422 = vpop.f32.mrb[0].mxu0
      %v1423 = vadd.f32 %v842, %v1422
      %v1424 = vpop.f32.mrb[0].mxu0
      %v1425 = vpop.f32.mrb[0].mxu0
      %v1426 = vadd.f32 %v842, %v1425
      %v1427 = vpop.f32.mrb[0].mxu0
      %1428 = vmatprep.mubr.bf16.mxu0 %v688
      %1429 = vmatmul.mubr.bf16.gmra.mrb[0].mxu0 %v687
      %v1430 = vpop.f32.mrb[0].mxu0
      %v1431 = vadd.f32 %v842, %v1430
      %v1432 = vpop.f32.mrb[0].mxu0
      %v1433 = vpop.f32.mrb[0].mxu0
      %v1434 = vadd.f32 %v842, %v1433
      %v1435 = vpop.f32.mrb[0].mxu0
      %1436 = vdwg.mxu0
      %1437 = vmatprep.subr.bf16.mxu0 0
      %1438 = vmatpush1.bf16.msra.mxu0 %v1148
      %1439 = vmatprep.subr.bf16.mxu0 0
      %1440 = vmatpush1.bf16.msra.mxu0 %v1149
      %1441 = vmatprep.subr.bf16.mxu0 0
      %1442 = vmatpush1.bf16.msra.mxu0 %v1150
      %1443 = vmatprep.subr.bf16.mxu0 0
      %1444 = vmatpush1.bf16.msra.mxu0 %v1151
      %1445 = vmatprep.subr.bf16.mxu0 0
      %1446 = vmatpush1.bf16.msra.mxu0 %v1152
      %1447 = vmatprep.subr.bf16.mxu0 0
      %1448 = vmatpush1.bf16.msra.mxu0 %v1153
      %1449 = vmatprep.subr.bf16.mxu0 0
      %1450 = vmatpush1.bf16.msra.mxu0 %v1154
      %1451 = vmatprep.subr.bf16.mxu0 0
      %1452 = vmatpush1.bf16.msra.mxu0 %v1155
      %1453 = vmatprep.subr.bf16.mxu0 0
      %1454 = vmatpush1.bf16.msra.mxu0 %v1156
      %1455 = vmatprep.subr.bf16.mxu0 0
      %1456 = vmatpush1.bf16.msra.mxu0 %v1157
      %1457 = vmatprep.subr.bf16.mxu0 0
      %1458 = vmatpush1.bf16.msra.mxu0 %v1158
      %1459 = vmatprep.subr.bf16.mxu0 0
      %1460 = vmatpush1.bf16.msra.mxu0 %v1159
      %1461 = vmatprep.subr.bf16.mxu0 0
      %1462 = vmatpush1.bf16.msra.mxu0 %v1160
      %1463 = vmatprep.subr.bf16.mxu0 0
      %1464 = vmatpush1.bf16.msra.mxu0 %v1161
      %1465 = vmatprep.subr.bf16.mxu0 0
      %1466 = vmatpush1.bf16.msra.mxu0 %v1162
      %1467 = vmatprep.subr.bf16.mxu0 0
      %1468 = vmatpush1.bf16.msra.mxu0 %v1163
      %1469 = vmatprep.mubr.bf16.mxu0 %v645
      %1470 = vmatmul.mubr.bf16.gmra.mrb[0].mxu0 %v644
      %v1471 = vpop.f32.mrb[0].mxu0
      %v1472 = vadd.f32 %v1311, %v1471
      %v1473 = vpop.f32.mrb[0].mxu0
      %v1474 = vpop.f32.mrb[0].mxu0
      %v1475 = vadd.f32 %v1314, %v1474
      %v1476 = vpop.f32.mrb[0].mxu0
      %1477 = vmatprep.mubr.bf16.mxu0 %v648
      %1478 = vmatmul.mubr.bf16.gmra.mrb[0].mxu0 %v647
      %v1479 = vpop.f32.mrb[0].mxu0
      %v1480 = vadd.f32 %v1319, %v1479
      %v1481 = vpop.f32.mrb[0].mxu0
      %v1482 = vpop.f32.mrb[0].mxu0
      %v1483 = vadd.f32 %v1322, %v1482
      %v1484 = vpop.f32.mrb[0].mxu0
      %1485 = vmatprep.mubr.bf16.mxu0 %v651
      %1486 = vmatmul.mubr.bf16.gmra.mrb[0].mxu0 %v650
      %v1487 = vpop.f32.mrb[0].mxu0
      %v1488 = vadd.f32 %v1327, %v1487
      %v1489 = vpop.f32.mrb[0].mxu0
      %v1490 = vpop.f32.mrb[0].mxu0
      %v1491 = vadd.f32 %v1330, %v1490
      %v1492 = vpop.f32.mrb[0].mxu0
      %1493 = vmatprep.mubr.bf16.mxu0 %v654
      %1494 = vmatmul.mubr.bf16.gmra.mrb[0].mxu0 %v653
      %v1495 = vpop.f32.mrb[0].mxu0
      %v1496 = vadd.f32 %v1335, %v1495
      %v1497 = vpop.f32.mrb[0].mxu0
      %v1498 = vpop.f32.mrb[0].mxu0
      %v1499 = vadd.f32 %v1338, %v1498
      %v1500 = vpop.f32.mrb[0].mxu0
      %1501 = vmatprep.mubr.bf16.mxu0 %v657
      %1502 = vmatmul.mubr.bf16.gmra.mrb[0].mxu0 %v656
      %v1503 = vpop.f32.mrb[0].mxu0
      %v1504 = vadd.f32 %v1343, %v1503
      %v1505 = vpop.f32.mrb[0].mxu0
      %v1506 = vpop.f32.mrb[0].mxu0
      %v1507 = vadd.f32 %v1346, %v1506
      %v1508 = vpop.f32.mrb[0].mxu0
      %1509 = vmatprep.mubr.bf16.mxu0 %v660
      %1510 = vmatmul.mubr.bf16.gmra.mrb[0].mxu0 %v659
      %v1511 = vpop.f32.mrb[0].mxu0
      %v1512 = vadd.f32 %v1351, %v1511
      %v1513 = vpop.f32.mrb[0].mxu0
      %v1514 = vpop.f32.mrb[0].mxu0
      %v1515 = vadd.f32 %v1354, %v1514
      %v1516 = vpop.f32.mrb[0].mxu0
      %1517 = vmatprep.mubr.bf16.mxu0 %v663
      %1518 = vmatmul.mubr.bf16.gmra.mrb[0].mxu0 %v662
      %v1519 = vpop.f32.mrb[0].mxu0
      %v1520 = vadd.f32 %v1359, %v1519
      %v1521 = vpop.f32.mrb[0].mxu0
      %v1522 = vpop.f32.mrb[0].mxu0
      %v1523 = vadd.f32 %v1362, %v1522
      %v1524 = vpop.f32.mrb[0].mxu0
      %1525 = vmatprep.mubr.bf16.mxu0 %v666
      %1526 = vmatmul.mubr.bf16.gmra.mrb[0].mxu0 %v665
      %v1527 = vpop.f32.mrb[0].mxu0
      %v1528 = vadd.f32 %v1367, %v1527
      %v1529 = vpop.f32.mrb[0].mxu0
      %v1530 = vpop.f32.mrb[0].mxu0
      %v1531 = vadd.f32 %v1370, %v1530
      %v1532 = vpop.f32.mrb[0].mxu0
      %1533 = vmatprep.mubr.bf16.mxu0 %v669
      %1534 = vmatmul.mubr.bf16.gmra.mrb[0].mxu0 %v668
      %v1535 = vpop.f32.mrb[0].mxu0
      %v1536 = vadd.f32 %v1375, %v1535
      %v1537 = vpop.f32.mrb[0].mxu0
      %v1538 = vpop.f32.mrb[0].mxu0
      %v1539 = vadd.f32 %v1378, %v1538
      %v1540 = vpop.f32.mrb[0].mxu0
      %1541 = vmatprep.mubr.bf16.mxu0 %v672
      %1542 = vmatmul.mubr.bf16.gmra.mrb[0].mxu0 %v671
      %v1543 = vpop.f32.mrb[0].mxu0
      %v1544 = vadd.f32 %v1383, %v1543
      %v1545 = vpop.f32.mrb[0].mxu0
      %v1546 = vpop.f32.mrb[0].mxu0
      %v1547 = vadd.f32 %v1386, %v1546
      %v1548 = vpop.f32.mrb[0].mxu0
      %1549 = vmatprep.mubr.bf16.mxu0 %v675
      %1550 = vmatmul.mubr.bf16.gmra.mrb[0].mxu0 %v674
      %v1551 = vpop.f32.mrb[0].mxu0
      %v1552 = vadd.f32 %v1391, %v1551
      %v1553 = vpop.f32.mrb[0].mxu0
      %v1554 = vpop.f32.mrb[0].mxu0
      %v1555 = vadd.f32 %v1394, %v1554
      %v1556 = vpop.f32.mrb[0].mxu0
      %1557 = vmatprep.mubr.bf16.mxu0 %v678
      %1558 = vmatmul.mubr.bf16.gmra.mrb[0].mxu0 %v677
      %v1559 = vpop.f32.mrb[0].mxu0
      %v1560 = vadd.f32 %v1399, %v1559
      %v1561 = vpop.f32.mrb[0].mxu0
      %v1562 = vpop.f32.mrb[0].mxu0
      %v1563 = vadd.f32 %v1402, %v1562
      %v1564 = vpop.f32.mrb[0].mxu0
      %1565 = vmatprep.mubr.bf16.mxu0 %v681
      %1566 = vmatmul.mubr.bf16.gmra.mrb[0].mxu0 %v680
      %v1567 = vpop.f32.mrb[0].mxu0
      %v1568 = vadd.f32 %v1407, %v1567
      %v1569 = vpop.f32.mrb[0].mxu0
      %v1570 = vpop.f32.mrb[0].mxu0
      %v1571 = vadd.f32 %v1410, %v1570
      %v1572 = vpop.f32.mrb[0].mxu0
      %1573 = vmatprep.mubr.bf16.mxu0 %v684
      %1574 = vmatmul.mubr.bf16.gmra.mrb[0].mxu0 %v683
      %v1575 = vpop.f32.mrb[0].mxu0
      %v1576 = vadd.f32 %v1415, %v1575
      %v1577 = vpop.f32.mrb[0].mxu0
      %v1578 = vpop.f32.mrb[0].mxu0
      %v1579 = vadd.f32 %v1418, %v1578
      %v1580 = vpop.f32.mrb[0].mxu0
      %1581 = vmatprep.mubr.bf16.mxu0 %v687
      %1582 = vmatmul.mubr.bf16.gmra.mrb[0].mxu0 %v686
      %v1583 = vpop.f32.mrb[0].mxu0
      %v1584 = vadd.f32 %v1423, %v1583
      %v1585 = vpop.f32.mrb[0].mxu0
      %v1586 = vpop.f32.mrb[0].mxu0
      %v1587 = vadd.f32 %v1426, %v1586
      %v1588 = vpop.f32.mrb[0].mxu0
      %1589 = vmatprep.mubr.bf16.mxu0 %v690
      %1590 = vmatmul.mubr.bf16.gmra.mrb[0].mxu0 %v689
      %v1591 = vpop.f32.mrb[0].mxu0
      %v1592 = vadd.f32 %v1431, %v1591
      %v1593 = vpop.f32.mrb[0].mxu0
      %v1594 = vpop.f32.mrb[0].mxu0
      %v1595 = vadd.f32 %v1434, %v1594
      %v1596 = vpop.f32.mrb[0].mxu0
      %1597 = vdwg.mxu0
      %1598 = vmatprep.subr.bf16.mxu0 0
      %1599 = vmatpush1.bf16.msra.mxu0 %v1164
      %1600 = vmatprep.subr.bf16.mxu0 0
      %1601 = vmatpush1.bf16.msra.mxu0 %v1165
      %1602 = vmatprep.subr.bf16.mxu0 0
      %1603 = vmatpush1.bf16.msra.mxu0 %v1166
      %1604 = vmatprep.subr.bf16.mxu0 0
      %1605 = vmatpush1.bf16.msra.mxu0 %v1167
      %1606 = vmatprep.subr.bf16.mxu0 0
      %1607 = vmatpush1.bf16.msra.mxu0 %v1168
      %1608 = vmatprep.subr.bf16.mxu0 0
      %1609 = vmatpush1.bf16.msra.mxu0 %v1169
      %1610 = vmatprep.subr.bf16.mxu0 0
      %1611 = vmatpush1.bf16.msra.mxu0 %v1170
      %1612 = vmatprep.subr.bf16.mxu0 0
      %1613 = vmatpush1.bf16.msra.mxu0 %v1171
      %1614 = vmatprep.subr.bf16.mxu0 0
      %1615 = vmatpush1.bf16.msra.mxu0 %v1172
      %1616 = vmatprep.subr.bf16.mxu0 0
      %1617 = vmatpush1.bf16.msra.mxu0 %v1173
      %1618 = vmatprep.subr.bf16.mxu0 0
      %1619 = vmatpush1.bf16.msra.mxu0 %v1174
      %1620 = vmatprep.subr.bf16.mxu0 0
      %1621 = vmatpush1.bf16.msra.mxu0 %v1175
      %1622 = vmatprep.subr.bf16.mxu0 0
      %1623 = vmatpush1.bf16.msra.mxu0 %v1176
      %1624 = vmatprep.subr.bf16.mxu0 0
      %1625 = vmatpush1.bf16.msra.mxu0 %v1177
      %1626 = vmatprep.subr.bf16.mxu0 0
      %1627 = vmatpush1.bf16.msra.mxu0 %v1178
      %1628 = vmatprep.subr.bf16.mxu0 0
      %1629 = vmatpush1.bf16.msra.mxu0 %v1179
      %1630 = vmatprep.mubr.bf16.mxu0 %v647
      %1631 = vmatmul.mubr.bf16.gmra.mrb[0].mxu0 %v646
      %v1632 = vpop.f32.mrb[0].mxu0
      %v1633 = vadd.f32 %v1472, %v1632
      %v1634 = vpop.f32.mrb[0].mxu0
      %v1635 = vpop.f32.mrb[0].mxu0
      %v1636 = vadd.f32 %v1475, %v1635
      %v1637 = vpop.f32.mrb[0].mxu0
      %1638 = vmatprep.mubr.bf16.mxu0 %v650
      %1639 = vmatmul.mubr.bf16.gmra.mrb[0].mxu0 %v649
      %v1640 = vpop.f32.mrb[0].mxu0
      %v1641 = vadd.f32 %v1480, %v1640
      %v1642 = vpop.f32.mrb[0].mxu0
      %v1643 = vpop.f32.mrb[0].mxu0
      %v1644 = vadd.f32 %v1483, %v1643
      %v1645 = vpop.f32.mrb[0].mxu0
      %1646 = vmatprep.mubr.bf16.mxu0 %v653
      %1647 = vmatmul.mubr.bf16.gmra.mrb[0].mxu0 %v652
      %v1648 = vpop.f32.mrb[0].mxu0
      %v1649 = vadd.f32 %v1488, %v1648
      %v1650 = vpop.f32.mrb[0].mxu0
      %v1651 = vpop.f32.mrb[0].mxu0
      %v1652 = vadd.f32 %v1491, %v1651
      %v1653 = vpop.f32.mrb[0].mxu0
      %1654 = vmatprep.mubr.bf16.mxu0 %v656
      %1655 = vmatmul.mubr.bf16.gmra.mrb[0].mxu0 %v655
      %v1656 = vpop.f32.mrb[0].mxu0
      %v1657 = vadd.f32 %v1496, %v1656
      %v1658 = vpop.f32.mrb[0].mxu0
      %v1659 = vpop.f32.mrb[0].mxu0
      %v1660 = vadd.f32 %v1499, %v1659
      %v1661 = vpop.f32.mrb[0].mxu0
      %1662 = vmatprep.mubr.bf16.mxu0 %v659
      %1663 = vmatmul.mubr.bf16.gmra.mrb[0].mxu0 %v658
      %v1664 = vpop.f32.mrb[0].mxu0
      %v1665 = vadd.f32 %v1504, %v1664
      %v1666 = vpop.f32.mrb[0].mxu0
      %v1667 = vpop.f32.mrb[0].mxu0
      %v1668 = vadd.f32 %v1507, %v1667
      %v1669 = vpop.f32.mrb[0].mxu0
      %1670 = vmatprep.mubr.bf16.mxu0 %v662
      %1671 = vmatmul.mubr.bf16.gmra.mrb[0].mxu0 %v661
      %v1672 = vpop.f32.mrb[0].mxu0
      %v1673 = vadd.f32 %v1512, %v1672
      %v1674 = vpop.f32.mrb[0].mxu0
      %v1675 = vpop.f32.mrb[0].mxu0
      %v1676 = vadd.f32 %v1515, %v1675
      %v1677 = vpop.f32.mrb[0].mxu0
      %1678 = vmatprep.mubr.bf16.mxu0 %v665
      %1679 = vmatmul.mubr.bf16.gmra.mrb[0].mxu0 %v664
      %v1680 = vpop.f32.mrb[0].mxu0
      %v1681 = vadd.f32 %v1520, %v1680
      %v1682 = vpop.f32.mrb[0].mxu0
      %v1683 = vpop.f32.mrb[0].mxu0
      %v1684 = vadd.f32 %v1523, %v1683
      %v1685 = vpop.f32.mrb[0].mxu0
      %1686 = vmatprep.mubr.bf16.mxu0 %v668
      %1687 = vmatmul.mubr.bf16.gmra.mrb[0].mxu0 %v667
      %v1688 = vpop.f32.mrb[0].mxu0
      %v1689 = vadd.f32 %v1528, %v1688
      %v1690 = vpop.f32.mrb[0].mxu0
      %v1691 = vpop.f32.mrb[0].mxu0
      %v1692 = vadd.f32 %v1531, %v1691
      %v1693 = vpop.f32.mrb[0].mxu0
      %1694 = vmatprep.mubr.bf16.mxu0 %v671
      %1695 = vmatmul.mubr.bf16.gmra.mrb[0].mxu0 %v670
      %v1696 = vpop.f32.mrb[0].mxu0
      %v1697 = vadd.f32 %v1536, %v1696
      %v1698 = vpop.f32.mrb[0].mxu0
      %v1699 = vpop.f32.mrb[0].mxu0
      %v1700 = vadd.f32 %v1539, %v1699
      %v1701 = vpop.f32.mrb[0].mxu0
      %1702 = vmatprep.mubr.bf16.mxu0 %v674
      %1703 = vmatmul.mubr.bf16.gmra.mrb[0].mxu0 %v673
      %v1704 = vpop.f32.mrb[0].mxu0
      %v1705 = vadd.f32 %v1544, %v1704
      %v1706 = vpop.f32.mrb[0].mxu0
      %v1707 = vpop.f32.mrb[0].mxu0
      %v1708 = vadd.f32 %v1547, %v1707
      %v1709 = vpop.f32.mrb[0].mxu0
      %1710 = vmatprep.mubr.bf16.mxu0 %v677
      %1711 = vmatmul.mubr.bf16.gmra.mrb[0].mxu0 %v676
      %v1712 = vpop.f32.mrb[0].mxu0
      %v1713 = vadd.f32 %v1552, %v1712
      %v1714 = vpop.f32.mrb[0].mxu0
      %v1715 = vpop.f32.mrb[0].mxu0
      %v1716 = vadd.f32 %v1555, %v1715
      %v1717 = vpop.f32.mrb[0].mxu0
      %1718 = vmatprep.mubr.bf16.mxu0 %v680
      %1719 = vmatmul.mubr.bf16.gmra.mrb[0].mxu0 %v679
      %v1720 = vpop.f32.mrb[0].mxu0
      %v1721 = vadd.f32 %v1560, %v1720
      %v1722 = vpop.f32.mrb[0].mxu0
      %v1723 = vpop.f32.mrb[0].mxu0
      %v1724 = vadd.f32 %v1563, %v1723
      %v1725 = vpop.f32.mrb[0].mxu0
      %1726 = vmatprep.mubr.bf16.mxu0 %v683
      %1727 = vmatmul.mubr.bf16.gmra.mrb[0].mxu0 %v682
      %v1728 = vpop.f32.mrb[0].mxu0
      %v1729 = vadd.f32 %v1568, %v1728
      %v1730 = vpop.f32.mrb[0].mxu0
      %v1731 = vpop.f32.mrb[0].mxu0
      %v1732 = vadd.f32 %v1571, %v1731
      %v1733 = vpop.f32.mrb[0].mxu0
      %1734 = vmatprep.mubr.bf16.mxu0 %v686
      %1735 = vmatmul.mubr.bf16.gmra.mrb[0].mxu0 %v685
      %v1736 = vpop.f32.mrb[0].mxu0
      %v1737 = vadd.f32 %v1576, %v1736
      %v1738 = vpop.f32.mrb[0].mxu0
      %v1739 = vpop.f32.mrb[0].mxu0
      %v1740 = vadd.f32 %v1579, %v1739
      %v1741 = vpop.f32.mrb[0].mxu0
      %1742 = vmatprep.mubr.bf16.mxu0 %v689
      %1743 = vmatmul.mubr.bf16.gmra.mrb[0].mxu0 %v688
      %v1744 = vpop.f32.mrb[0].mxu0
      %v1745 = vadd.f32 %v1584, %v1744
      %v1746 = vpop.f32.mrb[0].mxu0
      %v1747 = vpop.f32.mrb[0].mxu0
      %v1748 = vadd.f32 %v1587, %v1747
      %v1749 = vpop.f32.mrb[0].mxu0
      %1750 = vmatprep.mubr.bf16.mxu0 %v692
      %1751 = vmatmul.mubr.bf16.gmra.mrb[0].mxu0 %v691
      %v1752 = vpop.f32.mrb[0].mxu0
      %v1753 = vadd.f32 %v1592, %v1752
      %v1754 = vpop.f32.mrb[0].mxu0
      %v1755 = vpop.f32.mrb[0].mxu0
      %v1756 = vadd.f32 %v1595, %v1755
      %v1757 = vpop.f32.mrb[0].mxu0
      %1758 = vdwg.mxu0
      %1759 = vmatprep.subr.bf16.mxu0 0
      %1760 = vmatpush1.bf16.msra.mxu0 %v1180
      %1761 = vmatprep.subr.bf16.mxu0 0
      %1762 = vmatpush1.bf16.msra.mxu0 %v1181
      %1763 = vmatprep.subr.bf16.mxu0 0
      %1764 = vmatpush1.bf16.msra.mxu0 %v1182
      %1765 = vmatprep.subr.bf16.mxu0 0
      %1766 = vmatpush1.bf16.msra.mxu0 %v1183
      %1767 = vmatprep.subr.bf16.mxu0 0
      %1768 = vmatpush1.bf16.msra.mxu0 %v1184
      %1769 = vmatprep.subr.bf16.mxu0 0
      %1770 = vmatpush1.bf16.msra.mxu0 %v1185
      %1771 = vmatprep.subr.bf16.mxu0 0
      %1772 = vmatpush1.bf16.msra.mxu0 %v1186
      %1773 = vmatprep.subr.bf16.mxu0 0
      %1774 = vmatpush1.bf16.msra.mxu0 %v1187
      %1775 = vmatprep.subr.bf16.mxu0 0
      %1776 = vmatpush1.bf16.msra.mxu0 %v1188
      %1777 = vmatprep.subr.bf16.mxu0 0
      %1778 = vmatpush1.bf16.msra.mxu0 %v1189
      %1779 = vmatprep.subr.bf16.mxu0 0
      %1780 = vmatpush1.bf16.msra.mxu0 %v1190
      %1781 = vmatprep.subr.bf16.mxu0 0
      %1782 = vmatpush1.bf16.msra.mxu0 %v1191
      %1783 = vmatprep.subr.bf16.mxu0 0
      %1784 = vmatpush1.bf16.msra.mxu0 %v1192
      %1785 = vmatprep.subr.bf16.mxu0 0
      %1786 = vmatpush1.bf16.msra.mxu0 %v1193
      %1787 = vmatprep.subr.bf16.mxu0 0
      %1788 = vmatpush1.bf16.msra.mxu0 %v1194
      %1789 = vmatprep.subr.bf16.mxu0 0
      %1790 = vmatpush1.bf16.msra.mxu0 %v1195
      %1791 = vmatprep.mubr.bf16.mxu0 %v649
      %1792 = vmatmul.mubr.bf16.gmra.mrb[0].mxu0 %v648
      %v1793 = vpop.f32.mrb[0].mxu0
      %v1794 = vadd.f32 %v1633, %v1793
      %v1795 = vpop.f32.mrb[0].mxu0
      %v1796 = vpop.f32.mrb[0].mxu0
      %v1797 = vadd.f32 %v1636, %v1796
      %v1798 = vpop.f32.mrb[0].mxu0
      %1799 = vmatprep.mubr.bf16.mxu0 %v652
      %1800 = vmatmul.mubr.bf16.gmra.mrb[0].mxu0 %v651
      %v1801 = vpop.f32.mrb[0].mxu0
      %v1802 = vadd.f32 %v1641, %v1801
      %v1803 = vpop.f32.mrb[0].mxu0
      %v1804 = vpop.f32.mrb[0].mxu0
      %v1805 = vadd.f32 %v1644, %v1804
      %v1806 = vpop.f32.mrb[0].mxu0
      %1807 = vmatprep.mubr.bf16.mxu0 %v655
      %1808 = vmatmul.mubr.bf16.gmra.mrb[0].mxu0 %v654
      %v1809 = vpop.f32.mrb[0].mxu0
      %v1810 = vadd.f32 %v1649, %v1809
      %v1811 = vpop.f32.mrb[0].mxu0
      %v1812 = vpop.f32.mrb[0].mxu0
      %v1813 = vadd.f32 %v1652, %v1812
      %v1814 = vpop.f32.mrb[0].mxu0
      %1815 = vmatprep.mubr.bf16.mxu0 %v658
      %1816 = vmatmul.mubr.bf16.gmra.mrb[0].mxu0 %v657
      %v1817 = vpop.f32.mrb[0].mxu0
      %v1818 = vadd.f32 %v1657, %v1817
      %v1819 = vpop.f32.mrb[0].mxu0
      %v1820 = vpop.f32.mrb[0].mxu0
      %v1821 = vadd.f32 %v1660, %v1820
      %v1822 = vpop.f32.mrb[0].mxu0
      %1823 = vmatprep.mubr.bf16.mxu0 %v661
      %1824 = vmatmul.mubr.bf16.gmra.mrb[0].mxu0 %v660
      %v1825 = vpop.f32.mrb[0].mxu0
      %v1826 = vadd.f32 %v1665, %v1825
      %v1827 = vpop.f32.mrb[0].mxu0
      %v1828 = vpop.f32.mrb[0].mxu0
      %v1829 = vadd.f32 %v1668, %v1828
      %v1830 = vpop.f32.mrb[0].mxu0
      %1831 = vmatprep.mubr.bf16.mxu0 %v664
      %1832 = vmatmul.mubr.bf16.gmra.mrb[0].mxu0 %v663
      %v1833 = vpop.f32.mrb[0].mxu0
      %v1834 = vadd.f32 %v1673, %v1833
      %v1835 = vpop.f32.mrb[0].mxu0
      %v1836 = vpop.f32.mrb[0].mxu0
      %v1837 = vadd.f32 %v1676, %v1836
      %v1838 = vpop.f32.mrb[0].mxu0
      %1839 = vmatprep.mubr.bf16.mxu0 %v667
      %1840 = vmatmul.mubr.bf16.gmra.mrb[0].mxu0 %v666
      %v1841 = vpop.f32.mrb[0].mxu0
      %v1842 = vadd.f32 %v1681, %v1841
      %v1843 = vpop.f32.mrb[0].mxu0
      %v1844 = vpop.f32.mrb[0].mxu0
      %v1845 = vadd.f32 %v1684, %v1844
      %v1846 = vpop.f32.mrb[0].mxu0
      %1847 = vmatprep.mubr.bf16.mxu0 %v670
      %1848 = vmatmul.mubr.bf16.gmra.mrb[0].mxu0 %v669
      %v1849 = vpop.f32.mrb[0].mxu0
      %v1850 = vadd.f32 %v1689, %v1849
      %v1851 = vpop.f32.mrb[0].mxu0
      %v1852 = vpop.f32.mrb[0].mxu0
      %v1853 = vadd.f32 %v1692, %v1852
      %v1854 = vpop.f32.mrb[0].mxu0
      %1855 = vmatprep.mubr.bf16.mxu0 %v673
      %1856 = vmatmul.mubr.bf16.gmra.mrb[0].mxu0 %v672
      %v1857 = vpop.f32.mrb[0].mxu0
      %v1858 = vadd.f32 %v1697, %v1857
      %v1859 = vpop.f32.mrb[0].mxu0
      %v1860 = vpop.f32.mrb[0].mxu0
      %v1861 = vadd.f32 %v1700, %v1860
      %v1862 = vpop.f32.mrb[0].mxu0
      %1863 = vmatprep.mubr.bf16.mxu0 %v676
      %1864 = vmatmul.mubr.bf16.gmra.mrb[0].mxu0 %v675
      %v1865 = vpop.f32.mrb[0].mxu0
      %v1866 = vadd.f32 %v1705, %v1865
      %v1867 = vpop.f32.mrb[0].mxu0
      %v1868 = vpop.f32.mrb[0].mxu0
      %v1869 = vadd.f32 %v1708, %v1868
      %v1870 = vpop.f32.mrb[0].mxu0
      %1871 = vmatprep.mubr.bf16.mxu0 %v679
      %1872 = vmatmul.mubr.bf16.gmra.mrb[0].mxu0 %v678
      %v1873 = vpop.f32.mrb[0].mxu0
      %v1874 = vadd.f32 %v1713, %v1873
      %v1875 = vpop.f32.mrb[0].mxu0
      %v1876 = vpop.f32.mrb[0].mxu0
      %v1877 = vadd.f32 %v1716, %v1876
      %v1878 = vpop.f32.mrb[0].mxu0
      %1879 = vmatprep.mubr.bf16.mxu0 %v682
      %1880 = vmatmul.mubr.bf16.gmra.mrb[0].mxu0 %v681
      %v1881 = vpop.f32.mrb[0].mxu0
      %v1882 = vadd.f32 %v1721, %v1881
      %v1883 = vpop.f32.mrb[0].mxu0
      %v1884 = vpop.f32.mrb[0].mxu0
      %v1885 = vadd.f32 %v1724, %v1884
      %v1886 = vpop.f32.mrb[0].mxu0
      %1887 = vmatprep.mubr.bf16.mxu0 %v685
      %1888 = vmatmul.mubr.bf16.gmra.mrb[0].mxu0 %v684
      %v1889 = vpop.f32.mrb[0].mxu0
      %v1890 = vadd.f32 %v1729, %v1889
      %v1891 = vpop.f32.mrb[0].mxu0
      %v1892 = vpop.f32.mrb[0].mxu0
      %v1893 = vadd.f32 %v1732, %v1892
      %v1894 = vpop.f32.mrb[0].mxu0
      %1895 = vmatprep.mubr.bf16.mxu0 %v688
      %1896 = vmatmul.mubr.bf16.gmra.mrb[0].mxu0 %v687
      %v1897 = vpop.f32.mrb[0].mxu0
      %v1898 = vadd.f32 %v1737, %v1897
      %v1899 = vpop.f32.mrb[0].mxu0
      %v1900 = vpop.f32.mrb[0].mxu0
      %v1901 = vadd.f32 %v1740, %v1900
      %v1902 = vpop.f32.mrb[0].mxu0
      %1903 = vmatprep.mubr.bf16.mxu0 %v691
      %1904 = vmatmul.mubr.bf16.gmra.mrb[0].mxu0 %v690
      %v1905 = vpop.f32.mrb[0].mxu0
      %v1906 = vadd.f32 %v1745, %v1905
      %v1907 = vpop.f32.mrb[0].mxu0
      %v1908 = vpop.f32.mrb[0].mxu0
      %v1909 = vadd.f32 %v1748, %v1908
      %v1910 = vpop.f32.mrb[0].mxu0
      %1911 = vmatprep.mubr.bf16.mxu0 %v644
      %1912 = vmatmul.mubr.bf16.gmra.mrb[0].mxu0 %v644
      %v1913 = vpop.f32.mrb[0].mxu0
      %v1914 = vadd.f32 %v1753, %v1913
      %v1915 = vpop.f32.mrb[0].mxu0
      %v1916 = vpop.f32.mrb[0].mxu0
      %v1917 = vadd.f32 %v1756, %v1916
      %v1918 = vpop.f32.mrb[0].mxu0
      %1919 = vdwg.mxu0
      %1920 = vmatprep.subr.bf16.mxu0 0
      %1921 = vmatpush1.bf16.msra.mxu0 %v1196
      %1922 = vmatprep.subr.bf16.mxu0 0
      %1923 = vmatpush1.bf16.msra.mxu0 %v1197
      %1924 = vmatprep.subr.bf16.mxu0 0
      %1925 = vmatpush1.bf16.msra.mxu0 %v1198
      %1926 = vmatprep.subr.bf16.mxu0 0
      %1927 = vmatpush1.bf16.msra.mxu0 %v1199
      %1928 = vmatprep.subr.bf16.mxu0 0
      %1929 = vmatpush1.bf16.msra.mxu0 %v1200
      %1930 = vmatprep.subr.bf16.mxu0 0
      %1931 = vmatpush1.bf16.msra.mxu0 %v1201
      %1932 = vmatprep.subr.bf16.mxu0 0
      %1933 = vmatpush1.bf16.msra.mxu0 %v1202
      %1934 = vmatprep.subr.bf16.mxu0 0
      %1935 = vmatpush1.bf16.msra.mxu0 %v1203
      %1936 = vmatprep.subr.bf16.mxu0 0
      %1937 = vmatpush1.bf16.msra.mxu0 0
      %1938 = vmatprep.subr.bf16.mxu0 0
      %1939 = vmatpush1.bf16.msra.mxu0 0
      %1940 = vmatprep.subr.bf16.mxu0 0
      %1941 = vmatpush1.bf16.msra.mxu0 0
      %1942 = vmatprep.subr.bf16.mxu0 0
      %1943 = vmatpush1.bf16.msra.mxu0 0
      %1944 = vmatprep.subr.bf16.mxu0 0
      %1945 = vmatpush1.bf16.msra.mxu0 0
      %1946 = vmatprep.subr.bf16.mxu0 0
      %1947 = vmatpush1.bf16.msra.mxu0 0
      %1948 = vmatprep.subr.bf16.mxu0 0
      %1949 = vmatpush1.bf16.msra.mxu0 0
      %1950 = vmatprep.subr.bf16.mxu0 0
      %1951 = vmatpush1.bf16.msra.mxu0 0
      %1952 = vmatprep.mubr.bf16.mxu0 0
      %1953 = vmatmul.mubr.bf16.gmra.mrb[0].mxu0 %v650
      %v1954 = vpop.f32.mrb[0].mxu0
      %v1955 = vadd.f32 %v1794, %v1954
      %v1956 = vpop.f32.mrb[0].mxu0
      %v1957 = vpop.f32.mrb[0].mxu0
      %v1958 = vadd.f32 %v1797, %v1957
      %v1959 = vpop.f32.mrb[0].mxu0
      %1960 = vmatprep.mubr.bf16.mxu0 0
      %1961 = vmatmul.mubr.bf16.gmra.mrb[0].mxu0 %v653
      %v1962 = vpop.f32.mrb[0].mxu0
      %v1963 = vadd.f32 %v1802, %v1962
      %v1964 = vpop.f32.mrb[0].mxu0
      %v1965 = vpop.f32.mrb[0].mxu0
      %v1966 = vadd.f32 %v1805, %v1965
      %v1967 = vpop.f32.mrb[0].mxu0
      %1968 = vmatprep.mubr.bf16.mxu0 0
      %1969 = vmatmul.mubr.bf16.gmra.mrb[0].mxu0 %v656
      %v1970 = vpop.f32.mrb[0].mxu0
      %v1971 = vadd.f32 %v1810, %v1970
      %v1972 = vpop.f32.mrb[0].mxu0
      %v1973 = vpop.f32.mrb[0].mxu0
      %v1974 = vadd.f32 %v1813, %v1973
      %v1975 = vpop.f32.mrb[0].mxu0
      %1976 = vmatprep.mubr.bf16.mxu0 0
      %1977 = vmatmul.mubr.bf16.gmra.mrb[0].mxu0 %v659
      %v1978 = vpop.f32.mrb[0].mxu0
      %v1979 = vadd.f32 %v1818, %v1978
      %v1980 = vpop.f32.mrb[0].mxu0
      %v1981 = vpop.f32.mrb[0].mxu0
      %v1982 = vadd.f32 %v1821, %v1981
      %v1983 = vpop.f32.mrb[0].mxu0
      %1984 = vmatprep.mubr.bf16.mxu0 0
      %1985 = vmatmul.mubr.bf16.gmra.mrb[0].mxu0 %v662
      %v1986 = vpop.f32.mrb[0].mxu0
      %v1987 = vadd.f32 %v1826, %v1986
      %v1988 = vpop.f32.mrb[0].mxu0
      %v1989 = vpop.f32.mrb[0].mxu0
      %v1990 = vadd.f32 %v1829, %v1989
      %v1991 = vpop.f32.mrb[0].mxu0
      %1992 = vmatprep.mubr.bf16.mxu0 0
      %1993 = vmatmul.mubr.bf16.gmra.mrb[0].mxu0 %v665
      %v1994 = vpop.f32.mrb[0].mxu0
      %v1995 = vadd.f32 %v1834, %v1994
      %v1996 = vpop.f32.mrb[0].mxu0
      %v1997 = vpop.f32.mrb[0].mxu0
      %v1998 = vadd.f32 %v1837, %v1997
      %v1999 = vpop.f32.mrb[0].mxu0
      %2000 = vmatprep.mubr.bf16.mxu0 0
      %2001 = vmatmul.mubr.bf16.gmra.mrb[0].mxu0 %v668
      %v2002 = vpop.f32.mrb[0].mxu0
      %v2003 = vadd.f32 %v1842, %v2002
      %v2004 = vpop.f32.mrb[0].mxu0
      %v2005 = vpop.f32.mrb[0].mxu0
      %v2006 = vadd.f32 %v1845, %v2005
      %v2007 = vpop.f32.mrb[0].mxu0
      %2008 = vmatprep.mubr.bf16.mxu0 0
      %2009 = vmatmul.mubr.bf16.gmra.mrb[0].mxu0 %v671
      %v2010 = vpop.f32.mrb[0].mxu0
      %v2011 = vadd.f32 %v1850, %v2010
      %v2012 = vpop.f32.mrb[0].mxu0
      %v2013 = vpop.f32.mrb[0].mxu0
      %v2014 = vadd.f32 %v1853, %v2013
      %v2015 = vpop.f32.mrb[0].mxu0
      %2016 = vmatprep.mubr.bf16.mxu0 0
      %2017 = vmatmul.mubr.bf16.gmra.mrb[0].mxu0 %v674
      %v2018 = vpop.f32.mrb[0].mxu0
      %v2019 = vadd.f32 %v1858, %v2018
      %v2020 = vpop.f32.mrb[0].mxu0
      %v2021 = vpop.f32.mrb[0].mxu0
      %v2022 = vadd.f32 %v1861, %v2021
      %v2023 = vpop.f32.mrb[0].mxu0
      %2024 = vmatprep.mubr.bf16.mxu0 0
      %2025 = vmatmul.mubr.bf16.gmra.mrb[0].mxu0 %v677
      %v2026 = vpop.f32.mrb[0].mxu0
      %v2027 = vadd.f32 %v1866, %v2026
      %v2028 = vpop.f32.mrb[0].mxu0
      %v2029 = vpop.f32.mrb[0].mxu0
      %v2030 = vadd.f32 %v1869, %v2029
      %v2031 = vpop.f32.mrb[0].mxu0
      %2032 = vmatprep.mubr.bf16.mxu0 0
      %2033 = vmatmul.mubr.bf16.gmra.mrb[0].mxu0 %v680
      %v2034 = vpop.f32.mrb[0].mxu0
      %v2035 = vadd.f32 %v1874, %v2034
      %v2036 = vpop.f32.mrb[0].mxu0
      %v2037 = vpop.f32.mrb[0].mxu0
      %v2038 = vadd.f32 %v1877, %v2037
      %v2039 = vpop.f32.mrb[0].mxu0
      %2040 = vmatprep.mubr.bf16.mxu0 0
      %2041 = vmatmul.mubr.bf16.gmra.mrb[0].mxu0 %v683
      %v2042 = vpop.f32.mrb[0].mxu0
      %v2043 = vadd.f32 %v1882, %v2042
      %v2044 = vpop.f32.mrb[0].mxu0
      %v2045 = vpop.f32.mrb[0].mxu0
      %v2046 = vadd.f32 %v1885, %v2045
      %v2047 = vpop.f32.mrb[0].mxu0
      %2048 = vmatprep.mubr.bf16.mxu0 0
      %2049 = vmatmul.mubr.bf16.gmra.mrb[0].mxu0 %v686
      %v2050 = vpop.f32.mrb[0].mxu0
      %v2051 = vadd.f32 %v1890, %v2050
      %v2052 = vpop.f32.mrb[0].mxu0
      %v2053 = vpop.f32.mrb[0].mxu0
      %v2054 = vadd.f32 %v1893, %v2053
      %v2055 = vpop.f32.mrb[0].mxu0
      %2056 = vmatprep.mubr.bf16.mxu0 0
      %2057 = vmatmul.mubr.bf16.gmra.mrb[0].mxu0 %v689
      %v2058 = vpop.f32.mrb[0].mxu0
      %v2059 = vadd.f32 %v1898, %v2058
      %v2060 = vpop.f32.mrb[0].mxu0
      %v2061 = vpop.f32.mrb[0].mxu0
      %v2062 = vadd.f32 %v1901, %v2061
      %v2063 = vpop.f32.mrb[0].mxu0
      %2064 = vmatprep.mubr.bf16.mxu0 0
      %2065 = vmatmul.mubr.bf16.gmra.mrb[0].mxu0 %v692
      %v2066 = vpop.f32.mrb[0].mxu0
      %v2067 = vadd.f32 %v1906, %v2066
      %v2068 = vpop.f32.mrb[0].mxu0
      %v2069 = vpop.f32.mrb[0].mxu0
      %v2070 = vadd.f32 %v1909, %v2069
      %v2071 = vpop.f32.mrb[0].mxu0
      %2072 = vmatprep.mubr.bf16.mxu0 0
      %2073 = vmatmul.mubr.bf16.gmra.mrb[0].mxu0 %v644
      %v2074 = vpop.f32.mrb[0].mxu0
      %v2075 = vadd.f32 %v1914, %v2074
      %v2076 = vpop.f32.mrb[0].mxu0
      %v2077 = vpop.f32.mrb[0].mxu0
      %v2078 = vadd.f32 %v1917, %v2077
      %v2079 = vpop.f32.mrb[0].mxu0
      %2080 = vdwg.mxu0
      %2081 = vst [vmem:[%s291] sm:$0xff] %v1955
      %2082 = vst [vmem:[%s291 + $0x8] sm:$0xff] %v1958
      %2083 = vst [vmem:[%s291 + $0x10] sm:$0xff] %v1963
      %2084 = vst [vmem:[%s291 + $0x18] sm:$0xff] %v1966
      %2085 = vst [vmem:[%s291 + $0x20] sm:$0xff] %v1971
      %2086 = vst [vmem:[%s291 + $0x28] sm:$0xff] %v1974
      %2087 = vst [vmem:[%s291 + $0x30] sm:$0xff] %v1979
      %2088 = vst [vmem:[%s291 + $0x38] sm:$0xff] %v1982
      %2089 = vst [vmem:[%s291 + $0x40] sm:$0xff] %v1987
      %2090 = vst [vmem:[%s291 + $0x48] sm:$0xff] %v1990
      %2091 = vst [vmem:[%s291 + $0x50] sm:$0xff] %v1995
      %2092 = vst [vmem:[%s291 + $0x58] sm:$0xff] %v1998
      %2093 = vst [vmem:[%s291 + $0x60] sm:$0xff] %v2003
      %2094 = vst [vmem:[%s291 + $0x68] sm:$0xff] %v2006
      %2095 = vst [vmem:[%s291 + $0x70] sm:$0xff] %v2011
      %2096 = vst [vmem:[%s291 + $0x78] sm:$0xff] %v2014
      %2097 = vst [vmem:[%s291 + $0x80] sm:$0xff] %v2019
      %2098 = vst [vmem:[%s291 + $0x88] sm:$0xff] %v2022
      %2099 = vst [vmem:[%s291 + $0x90] sm:$0xff] %v2027
      %2100 = vst [vmem:[%s291 + $0x98] sm:$0xff] %v2030
      %2101 = vst [vmem:[%s291 + $0xa0] sm:$0xff] %v2035
      %2102 = vst [vmem:[%s291 + $0xa8] sm:$0xff] %v2038
      %2103 = vst [vmem:[%s291 + $0xb0] sm:$0xff] %v2043
      %2104 = vst [vmem:[%s291 + $0xb8] sm:$0xff] %v2046
      %2105 = vst [vmem:[%s291 + $0xc0] sm:$0xff] %v2051
      %2106 = vst [vmem:[%s291 + $0xc8] sm:$0xff] %v2054
      %2107 = vst [vmem:[%s291 + $0xd0] sm:$0xff] %v2059
      %2108 = vst [vmem:[%s291 + $0xd8] sm:$0xff] %v2062
      %2109 = vst [vmem:[%s291 + $0xe0] sm:$0xff] %v2067
      %2110 = vst [vmem:[%s291 + $0xe8] sm:$0xff] %v2070
      %2111 = vst [vmem:[%s291 + $0xf0] sm:$0xff] %v2075
      %2112 = vst [vmem:[%s291 + $0xf8] sm:$0xff] %v2078
      %v2113 = vadd.f32 %v1955, %v1958
      %v2114 = vadd.f32 %v2113, %v1963
      %v2115 = vadd.f32 %v2114, %v1966
      %v2116 = vadd.f32 %v2115, %v1971
      %v2117 = vadd.f32 %v2116, %v1974
      %v2118 = vadd.f32 %v2117, %v1979
      %v2119 = vadd.f32 %v2118, %v1982
      %v2120 = vadd.f32 %v2119, %v1987
      %v2121 = vadd.f32 %v2120, %v1990
      %v2122 = vadd.f32 %v2121, %v1995
      %v2123 = vadd.f32 %v2122, %v1998
      %v2124 = vadd.f32 %v2123, %v2003
      %v2125 = vadd.f32 %v2124, %v2006
      %v2126 = vadd.f32 %v2125, %v2011
      %v2127 = vadd.f32 %v2126, %v2014
      %v2128 = vadd.f32 %v2127, %v2019
      %v2129 = vadd.f32 %v2128, %v2022
      %v2130 = vadd.f32 %v2129, %v2027
      %v2131 = vadd.f32 %v2130, %v2030
      %v2132 = vadd.f32 %v2131, %v2035
      %v2133 = vadd.f32 %v2132, %v2038
      %v2134 = vadd.f32 %v2133, %v2043
      %v2135 = vadd.f32 %v2134, %v2046
      %v2136 = vadd.f32 %v2135, %v2051
      %v2137 = vadd.f32 %v2136, %v2054
      %v2138 = vadd.f32 %v2137, %v2059
      %v2139 = vadd.f32 %v2138, %v2062
      %v2140 = vadd.f32 %v2139, %v2067
      %v2141 = vadd.f32 %v2140, %v2070
      %v2142 = vadd.f32 %v2141, %v2075
      %v2143 = vadd.f32 %v2142, %v2078
      %2144 = vst [vmem:[%s295] sm:$0xff] %v2143
      %v2145 = vmul.f32 %v1955, %v1955
      %v2146 = vmul.f32 %v1958, %v1958
      %v2147 = vmul.f32 %v1963, %v1963
      %v2148 = vmul.f32 %v1966, %v1966
      %v2149 = vmul.f32 %v1971, %v1971
      %v2150 = vmul.f32 %v1974, %v1974
      %v2151 = vmul.f32 %v1979, %v1979
      %v2152 = vmul.f32 %v1982, %v1982
      %v2153 = vmul.f32 %v1987, %v1987
      %v2154 = vmul.f32 %v1990, %v1990
      %v2155 = vmul.f32 %v1995, %v1995
      %v2156 = vmul.f32 %v1998, %v1998
      %v2157 = vmul.f32 %v2003, %v2003
      %v2158 = vmul.f32 %v2006, %v2006
      %v2159 = vmul.f32 %v2011, %v2011
      %v2160 = vmul.f32 %v2014, %v2014
      %v2161 = vmul.f32 %v2019, %v2019
      %v2162 = vmul.f32 %v2022, %v2022
      %v2163 = vmul.f32 %v2027, %v2027
      %v2164 = vmul.f32 %v2030, %v2030
      %v2165 = vmul.f32 %v2035, %v2035
      %v2166 = vmul.f32 %v2038, %v2038
      %v2167 = vmul.f32 %v2043, %v2043
      %v2168 = vmul.f32 %v2046, %v2046
      %v2169 = vmul.f32 %v2051, %v2051
      %v2170 = vmul.f32 %v2054, %v2054
      %v2171 = vmul.f32 %v2059, %v2059
      %v2172 = vmul.f32 %v2062, %v2062
      %v2173 = vmul.f32 %v2067, %v2067
      %v2174 = vmul.f32 %v2070, %v2070
      %v2175 = vmul.f32 %v2075, %v2075
      %v2176 = vmul.f32 %v2078, %v2078
      %v2177 = vadd.f32 %v2145, %v2146
      %v2178 = vadd.f32 %v2177, %v2147
      %v2179 = vadd.f32 %v2178, %v2148
      %v2180 = vadd.f32 %v2179, %v2149
      %v2181 = vadd.f32 %v2180, %v2150
      %v2182 = vadd.f32 %v2181, %v2151
      %v2183 = vadd.f32 %v2182, %v2152
      %v2184 = vadd.f32 %v2183, %v2153
      %v2185 = vadd.f32 %v2184, %v2154
      %v2186 = vadd.f32 %v2185, %v2155
      %v2187 = vadd.f32 %v2186, %v2156
      %v2188 = vadd.f32 %v2187, %v2157
      %v2189 = vadd.f32 %v2188, %v2158
      %v2190 = vadd.f32 %v2189, %v2159
      %v2191 = vadd.f32 %v2190, %v2160
      %v2192 = vadd.f32 %v2191, %v2161
      %v2193 = vadd.f32 %v2192, %v2162
      %v2194 = vadd.f32 %v2193, %v2163
      %v2195 = vadd.f32 %v2194, %v2164
      %v2196 = vadd.f32 %v2195, %v2165
      %v2197 = vadd.f32 %v2196, %v2166
      %v2198 = vadd.f32 %v2197, %v2167
      %v2199 = vadd.f32 %v2198, %v2168
      %v2200 = vadd.f32 %v2199, %v2169
      %v2201 = vadd.f32 %v2200, %v2170
      %v2202 = vadd.f32 %v2201, %v2171
      %v2203 = vadd.f32 %v2202, %v2172
      %v2204 = vadd.f32 %v2203, %v2173
      %v2205 = vadd.f32 %v2204, %v2174
      %v2206 = vadd.f32 %v2205, %v2175
      %v2207 = vadd.f32 %v2206, %v2176
      %2208 = vst [vmem:[%s299] sm:$0xff] %v2207
      %p2209 = scmp.lt.s32.totalorder %s19, 1
      %s2210 = scalar_select %p2209, %s19, 1
      %s2211 = smul.addr %s2210, 32
      %s2212 = smul.addr %s2211, 8
      %s2213 = scalar_lea.vmem %s5, %s2212
      %p2214 = scmp.lt.s32.totalorder %s19, 1
      %s2215 = scalar_select %p2214, %s19, 1
      %s2216 = smul.addr %s2215, 8
      %s2217 = scalar_lea.vmem %s6, %s2216
      %p2218 = scmp.lt.s32.totalorder %s19, 1
      %s2219 = scalar_select %p2218, %s19, 1
      %s2220 = smul.addr %s2219, 8
      %s2221 = scalar_lea.vmem %s7, %s2220
      // Predicated region
      $region41: #{dense_block_forward.5} parent=39 // pred_check
        %p2222 = pneg %p147
      $region42: #{dense_block_forward.5} parent=39 // pred_check_branch
        %2224 = sbr.rel (%p2222) target = $region44
      $region43: #{dense_block_forward.5} parent=39 // pred_region
        _
      $region44: #{dense_block_forward.5} parent=39 // pred_fallthru
        _
      // Predicated region
      $region45: #{dense_block_forward.5} parent=39 // pred_check
        %p2225 = pneg %p173
      $region46: #{dense_block_forward.5} parent=39 // pred_check_branch
        %2227 = sbr.rel (%p2225) target = $region48
      $region47: #{dense_block_forward.5} parent=39 // pred_region
        _
      $region48: #{dense_block_forward.5} parent=39 // pred_fallthru
        _
      // Predicated region
      $region49: #{dense_block_forward.5} parent=39 // pred_check
        %p2228 = pneg %p199
      $region50: #{dense_block_forward.5} parent=39 // pred_check_branch
        %2230 = sbr.rel (%p2228) target = $region52
      $region51: #{dense_block_forward.5} parent=39 // pred_region
        _
      $region52: #{dense_block_forward.5} parent=39 // pred_fallthru
        _
    $region40: #{dense_block_forward.5} parent=5 // pred_fallthru
      _
    %p2231 = scmp.le.s32.totalorder 2, %s14
    // Predicated region
    $region53: #{dense_block_forward.5} parent=5 // pred_check
      %p2232 = pneg %p2231
    $region54: #{dense_block_forward.5} parent=5 // pred_check_branch
      %2234 = sbr.rel (%p2232) target = $region56
    $region55: #{dense_block_forward.5} parent=5 // pred_region
      %s2235 = ssub.s32 %s14, 2
      // Predicated region
      $region57: #{dense_block_forward.5} parent=55 // pred_check
        %p2236 = pneg %p153
      $region58: #{dense_block_forward.5} parent=55 // pred_check_branch
        %2238 = sbr.rel (%p2236) target = $region60
      $region59: #{dense_block_forward.5} parent=55 // pred_region
        %p2239 = scmp.lt.s32.totalorder %s20, 1
        %s2240 = scalar_select %p2239, %s20, 1
        %s2241 = smul.addr %s2240, 32
        %s2242 = smul.addr %s2241, 8
        %s2243 = scalar_lea.vmem %s5, %s2242
      $region60: #{dense_block_forward.5} parent=55 // pred_fallthru
        _
      // Predicated region
      $region61: #{dense_block_forward.5} parent=55 // pred_check
        %p2244 = pneg %p179
      $region62: #{dense_block_forward.5} parent=55 // pred_check_branch
        %2246 = sbr.rel (%p2244) target = $region64
      $region63: #{dense_block_forward.5} parent=55 // pred_region
        %p2247 = scmp.lt.s32.totalorder %s20, 1
        %s2248 = scalar_select %p2247, %s20, 1
        %s2249 = smul.addr %s2248, 8
        %s2250 = scalar_lea.vmem %s6, %s2249
      $region64: #{dense_block_forward.5} parent=55 // pred_fallthru
        _
      // Predicated region
      $region65: #{dense_block_forward.5} parent=55 // pred_check
        %p2251 = pneg %p205
      $region66: #{dense_block_forward.5} parent=55 // pred_check_branch
        %2253 = sbr.rel (%p2251) target = $region68
      $region67: #{dense_block_forward.5} parent=55 // pred_region
        %p2254 = scmp.lt.s32.totalorder %s20, 1
        %s2255 = scalar_select %p2254, %s20, 1
        %s2256 = smul.addr %s2255, 8
        %s2257 = scalar_lea.vmem %s7, %s2256
      $region68: #{dense_block_forward.5} parent=55 // pred_fallthru
        _
    $region56: #{dense_block_forward.5} parent=5 // pred_fallthru
      _
  $region6: #{dense_block_forward.5} parent=0 // loop_footer
    %s18 = sadd.s32 1, %s14
  $region7: #{dense_block_forward.5} parent=0 // loop_footer_branch
    %13 = sbr.rel target = $region3
  $region8: #{dense_block_forward.5} parent=0 // loop_exit
    _

// kernel: dense_block_forward.7
$region0: #{dense_block_forward.7}
  #allocation0 [shape = 'u32[]', space=smem, size = 0x4, offset = 0x4, fixed_abs, tag = 'smem constant byte address 0x4 - core index']
  #allocation1 [shape = 'u32[144,128]{1,0:T(1,128)}', space=vmem, size = 0x12000, scoped, tag = 'internal scratch']
  %s0 = inlined_call_operand.vmem [shape: f32[2,256,128], index: 0, kind: input, shape index: {}]
  %s1 = inlined_call_operand.vmem [shape: f32[1,128], index: 1, kind: input, shape index: {}]
  %s2 = inlined_call_operand.vmem [shape: f32[1,128], index: 2, kind: input, shape index: {}]
  %s3 = inlined_call_operand.vmem [shape: bf16[1152,128], index: 3, kind: input, shape index: {}]
  %s4 = inlined_call_operand.vmem [shape: f32[1,128], index: 4, kind: input, shape index: {}]
  %s5 = inlined_call_operand.vmem [shape: f32[2,256,128], index: 5, kind: output, shape index: {0}]
  %s6 = inlined_call_operand.hbm [shape: f32[16,128], index: 6, kind: output, shape index: {1}]
  %s7 = inlined_call_operand.hbm [shape: f32[16,128], index: 7, kind: output, shape index: {2}]
  %8 = xla_tuple %s5, %s6, %s7
  %s9 = sld [smem:[#allocation0]]
  $region69: #{dense_block_forward.7} parent=0
    _
  %s11 = ssub.s32 1, %s9
  %s12 = scalar_select 0, %s11, %s9
  $region1: #{dense_block_forward.7} parent=0
    #allocation2 [shape = 'u8[8192]{0}', space=vmem, size = 0x2000, scoped, tag = 'output window, operand 1']
    #allocation3 [shape = 's32[2]{0}', space=sflag, size = 0x8, scoped, tag = 'scoped memory for dense_block_forward.7']
    #allocation4 [shape = 'u8[8192]{0}', space=vmem, size = 0x2000, scoped, tag = 'output window, operand 2']
    #allocation5 [shape = 's32[2]{0}', space=sflag, size = 0x8, scoped, tag = 'scoped memory for dense_block_forward.7']
    %13 = vsyncpa [#allocation3], 0
    %s14 = scalar_lea.sflag [#allocation3], 1
    %15 = vsyncpa %s14, 0
    %16 = vsyncpa [#allocation5], 0
    %s17 = scalar_lea.sflag [#allocation5], 1
    %18 = vsyncpa %s17, 0
    loop: start=0, step=1, limit=4
    $region2: #{dense_block_forward.7} parent=1 // loop_pre_header
      _
    $region3: #{dense_block_forward.7} parent=1 // loop_header
      %s20 = sphi 0, %s24
      %p21 = scmp.ge.s32.totalorder %s20, 4
      %s30 = sphi 0, %s32
      %s33 = sphi 0, %s30
      %s34 = sphi 0, %s33
      %s50 = sphi 0, %s34
      %s54 = sphi 0, %s54
      %s56 = sphi 0, %s54
      %s57 = sphi 0, %s56
      %s71 = sphi 0, %s57
      %s75 = sphi 0, %s75
      %s77 = sphi 0, %s75
      %s78 = sphi 0, %s77
      %s92 = sphi 0, %s78
      %s96 = sphi 0, %s96
      %s98 = sphi 0, %s96
      %s99 = sphi 0, %s98
      %s113 = sphi 0, %s99
      %s117 = sphi 0, %s117
      %s119 = sphi 0, %s117
      %s120 = sphi 0, %s119
      %s134 = sphi 0, %s120
      %s140 = sphi 0, %s142
      %s143 = sphi 0, %s140
      %s144 = sphi 0, %s143
      %s160 = sphi 0, %s144
      %s166 = sphi 0, %s168
      %s169 = sphi 0, %s166
      %s170 = sphi 0, %s169
      %s186 = sphi 0, %s170
      %s192 = sphi 0, %s194
      %s195 = sphi 0, %s192
      %s196 = sphi 0, %s195
      %s212 = sphi 0, %s196
    $region4: #{dense_block_forward.7} parent=1 // loop_header_branch
      %23 = sbr.rel (%p21) target = $region8
    $region5: #{dense_block_forward.7} parent=1 // loop_body
      %s25 = ssub.s32 %s20, 1
      %s26 = ssub.s32 %s20, 2
      %s27 = sadd.s32 %s20, 1
      %s28 = ssub.s32 %s20, %s27
      %p29 = scmp.eq.s32.totalorder %s28, 0
      %s31 = sadd.s32 %s30, 1
      %s32 = scalar_select %p29, %s30, %s31
      %p35 = pneg %p29
      %p36 = scmp.eq.s32.totalorder %s20, 1
      %p37 = por %p35, %p36
      %p38 = scmp.ne.s32.totalorder %s30, %s33
      %p39 = scmp.eq.s32.totalorder %s20, 0
      %p40 = por %p38, %p39
      %p41 = scmp.ne.s32.totalorder %s30, %s33
      %p42 = scmp.eq.s32.totalorder %s25, 1
      %p43 = por %p41, %p42
      %p44 = scmp.ne.s32.totalorder %s33, %s34
      %p45 = scmp.eq.s32.totalorder %s25, 0
      %p46 = por %p44, %p45
      %p47 = scmp.ne.s32.totalorder %s33, %s34
      %p48 = scmp.eq.s32.totalorder %s26, 1
      %p49 = por %p47, %p48
      %p51 = scmp.ne.s32.totalorder %s34, %s50
      %p52 = scmp.eq.s32.totalorder %s26, 0
      %p53 = por %p51, %p52
      %s55 = sadd.s32 %s54, 1
      %p58 = scmp.eq.s32.totalorder %s20, 1
      %p59 = scmp.ne.s32.totalorder %s54, %s56
      %p60 = scmp.eq.s32.totalorder %s20, 0
      %p61 = por %p59, %p60
      %p62 = scmp.ne.s32.totalorder %s54, %s56
      %p63 = scmp.eq.s32.totalorder %s25, 1
      %p64 = por %p62, %p63
      %p65 = scmp.ne.s32.totalorder %s56, %s57
      %p66 = scmp.eq.s32.totalorder %s25, 0
      %p67 = por %p65, %p66
      %p68 = scmp.ne.s32.totalorder %s56, %s57
      %p69 = scmp.eq.s32.totalorder %s26, 1
      %p70 = por %p68, %p69
      %p72 = scmp.ne.s32.totalorder %s57, %s71
      %p73 = scmp.eq.s32.totalorder %s26, 0
      %p74 = por %p72, %p73
      %s76 = sadd.s32 %s75, 1
      %p79 = scmp.eq.s32.totalorder %s20, 1
      %p80 = scmp.ne.s32.totalorder %s75, %s77
      %p81 = scmp.eq.s32.totalorder %s20, 0
      %p82 = por %p80, %p81
      %p83 = scmp.ne.s32.totalorder %s75, %s77
      %p84 = scmp.eq.s32.totalorder %s25, 1
      %p85 = por %p83, %p84
      %p86 = scmp.ne.s32.totalorder %s77, %s78
      %p87 = scmp.eq.s32.totalorder %s25, 0
      %p88 = por %p86, %p87
      %p89 = scmp.ne.s32.totalorder %s77, %s78
      %p90 = scmp.eq.s32.totalorder %s26, 1
      %p91 = por %p89, %p90
      %p93 = scmp.ne.s32.totalorder %s78, %s92
      %p94 = scmp.eq.s32.totalorder %s26, 0
      %p95 = por %p93, %p94
      %s97 = sadd.s32 %s96, 1
      %p100 = scmp.eq.s32.totalorder %s20, 1
      %p101 = scmp.ne.s32.totalorder %s96, %s98
      %p102 = scmp.eq.s32.totalorder %s20, 0
      %p103 = por %p101, %p102
      %p104 = scmp.ne.s32.totalorder %s96, %s98
      %p105 = scmp.eq.s32.totalorder %s25, 1
      %p106 = por %p104, %p105
      %p107 = scmp.ne.s32.totalorder %s98, %s99
      %p108 = scmp.eq.s32.totalorder %s25, 0
      %p109 = por %p107, %p108
      %p110 = scmp.ne.s32.totalorder %s98, %s99
      %p111 = scmp.eq.s32.totalorder %s26, 1
      %p112 = por %p110, %p111
      %p114 = scmp.ne.s32.totalorder %s99, %s113
      %p115 = scmp.eq.s32.totalorder %s26, 0
      %p116 = por %p114, %p115
      %s118 = sadd.s32 %s117, 1
      %p121 = scmp.eq.s32.totalorder %s20, 1
      %p122 = scmp.ne.s32.totalorder %s117, %s119
      %p123 = scmp.eq.s32.totalorder %s20, 0
      %p124 = por %p122, %p123
      %p125 = scmp.ne.s32.totalorder %s117, %s119
      %p126 = scmp.eq.s32.totalorder %s25, 1
      %p127 = por %p125, %p126
      %p128 = scmp.ne.s32.totalorder %s119, %s120
      %p129 = scmp.eq.s32.totalorder %s25, 0
      %p130 = por %p128, %p129
      %p131 = scmp.ne.s32.totalorder %s119, %s120
      %p132 = scmp.eq.s32.totalorder %s26, 1
      %p133 = por %p131, %p132
      %p135 = scmp.ne.s32.totalorder %s120, %s134
      %p136 = scmp.eq.s32.totalorder %s26, 0
      %p137 = por %p135, %p136
      %s138 = ssub.s32 %s20, %s27
      %p139 = scmp.eq.s32.totalorder %s138, 0
      %s141 = sadd.s32 %s140, 1
      %s142 = scalar_select %p139, %s140, %s141
      %p145 = pneg %p139
      %p146 = scmp.eq.s32.totalorder %s20, 1
      %p147 = por %p145, %p146
      %p148 = scmp.ne.s32.totalorder %s140, %s143
      %p149 = scmp.eq.s32.totalorder %s20, 0
      %p150 = por %p148, %p149
      %p151 = scmp.ne.s32.totalorder %s140, %s143
      %p152 = scmp.eq.s32.totalorder %s25, 1
      %p153 = por %p151, %p152
      %p154 = scmp.ne.s32.totalorder %s143, %s144
      %p155 = scmp.eq.s32.totalorder %s25, 0
      %p156 = por %p154, %p155
      %p157 = scmp.ne.s32.totalorder %s143, %s144
      %p158 = scmp.eq.s32.totalorder %s26, 1
      %p159 = por %p157, %p158
      %p161 = scmp.ne.s32.totalorder %s144, %s160
      %p162 = scmp.eq.s32.totalorder %s26, 0
      %p163 = por %p161, %p162
      %s164 = ssub.s32 %s20, %s27
      %p165 = scmp.eq.s32.totalorder %s164, 0
      %s167 = sadd.s32 %s166, 1
      %s168 = scalar_select %p165, %s166, %s167
      %p171 = pneg %p165
      %p172 = scmp.eq.s32.totalorder %s20, 1
      %p173 = por %p171, %p172
      %p174 = scmp.ne.s32.totalorder %s166, %s169
      %p175 = scmp.eq.s32.totalorder %s20, 0
      %p176 = por %p174, %p175
      %p177 = scmp.ne.s32.totalorder %s166, %s169
      %p178 = scmp.eq.s32.totalorder %s25, 1
      %p179 = por %p177, %p178
      %p180 = scmp.ne.s32.totalorder %s169, %s170
      %p181 = scmp.eq.s32.totalorder %s25, 0
      %p182 = por %p180, %p181
      %p183 = scmp.ne.s32.totalorder %s169, %s170
      %p184 = scmp.eq.s32.totalorder %s26, 1
      %p185 = por %p183, %p184
      %p187 = scmp.ne.s32.totalorder %s170, %s186
      %p188 = scmp.eq.s32.totalorder %s26, 0
      %p189 = por %p187, %p188
      %s190 = ssub.s32 %s20, %s27
      %p191 = scmp.eq.s32.totalorder %s190, 0
      %s193 = sadd.s32 %s192, 1
      %s194 = scalar_select %p191, %s192, %s193
      %p197 = pneg %p191
      %p198 = scmp.eq.s32.totalorder %s20, 1
      %p199 = por %p197, %p198
      %p200 = scmp.ne.s32.totalorder %s192, %s195
      %p201 = scmp.eq.s32.totalorder %s20, 0
      %p202 = por %p200, %p201
      %p203 = scmp.ne.s32.totalorder %s192, %s195
      %p204 = scmp.eq.s32.totalorder %s25, 1
      %p205 = por %p203, %p204
      %p206 = scmp.ne.s32.totalorder %s195, %s196
      %p207 = scmp.eq.s32.totalorder %s25, 0
      %p208 = por %p206, %p207
      %p209 = scmp.ne.s32.totalorder %s195, %s196
      %p210 = scmp.eq.s32.totalorder %s26, 1
      %p211 = por %p209, %p210
      %p213 = scmp.ne.s32.totalorder %s196, %s212
      %p214 = scmp.eq.s32.totalorder %s26, 0
      %p215 = por %p213, %p214
      %p216 = scmp.le.s32.totalorder 1, %s20
      %p217 = scmp.lt.s32.totalorder %s20, 3
      %p218 = pnand %p216, %p217
      %p219 = pneg %p218
      // Predicated region
      $region9: #{dense_block_forward.7} parent=5 // pred_check
        _
      $region10: #{dense_block_forward.7} parent=5 // pred_check_branch
        %221 = sbr.rel (%p218) target = $region12
      $region11: #{dense_block_forward.7} parent=5 // pred_region
        %s222 = ssub.s32 %s20, 1
        // Predicated region
        $region13: #{dense_block_forward.7} parent=11 // pred_check
          %p223 = pneg %p67
        $region14: #{dense_block_forward.7} parent=11 // pred_check_branch
          %225 = sbr.rel (%p223) target = $region16
        $region15: #{dense_block_forward.7} parent=11 // pred_region
          _
        $region16: #{dense_block_forward.7} parent=11 // pred_fallthru
          _
        // Predicated region
        $region17: #{dense_block_forward.7} parent=11 // pred_check
          %p226 = pneg %p88
        $region18: #{dense_block_forward.7} parent=11 // pred_check_branch
          %228 = sbr.rel (%p226) target = $region20
        $region19: #{dense_block_forward.7} parent=11 // pred_region
          _
        $region20: #{dense_block_forward.7} parent=11 // pred_fallthru
          _
        // Predicated region
        $region21: #{dense_block_forward.7} parent=11 // pred_check
          %p229 = pneg %p109
        $region22: #{dense_block_forward.7} parent=11 // pred_check_branch
          %231 = sbr.rel (%p229) target = $region24
        $region23: #{dense_block_forward.7} parent=11 // pred_region
          _
        $region24: #{dense_block_forward.7} parent=11 // pred_fallthru
          _
        // Predicated region
        $region25: #{dense_block_forward.7} parent=11 // pred_check
          %p232 = pneg %p130
        $region26: #{dense_block_forward.7} parent=11 // pred_check_branch
          %234 = sbr.rel (%p232) target = $region28
        $region27: #{dense_block_forward.7} parent=11 // pred_region
          _
        $region28: #{dense_block_forward.7} parent=11 // pred_fallthru
          _
      $region12: #{dense_block_forward.7} parent=5 // pred_fallthru
        _
      %p235 = scmp.lt.s32.totalorder %s20, 2
      // Predicated region
      $region29: #{dense_block_forward.7} parent=5 // pred_check
        %p236 = pneg %p235
      $region30: #{dense_block_forward.7} parent=5 // pred_check_branch
        %238 = sbr.rel (%p236) target = $region32
      $region31: #{dense_block_forward.7} parent=5 // pred_region
        // Predicated region
        $region33: #{dense_block_forward.7} parent=31 // pred_check
          %p239 = pneg %p40
        $region34: #{dense_block_forward.7} parent=31 // pred_check_branch
          %241 = sbr.rel (%p239) target = $region36
        $region35: #{dense_block_forward.7} parent=31 // pred_region
          %p242 = scmp.lt.s32.totalorder %s20, 1
          %s243 = scalar_select %p242, %s20, 1
          %s244 = smul.addr %s243, 32
          %s245 = smul.addr %s244, 8
          %s246 = scalar_lea.vmem %s0, %s245
        $region36: #{dense_block_forward.7} parent=31 // pred_fallthru
          _
      $region32: #{dense_block_forward.7} parent=5 // pred_fallthru
        _
      %p247 = scmp.le.s32.totalorder 1, %s20
      %p248 = scmp.lt.s32.totalorder %s20, 3
      %p249 = pnand %p247, %p248
      %p250 = pneg %p249
      // Predicated region
      $region37: #{dense_block_forward.7} parent=5 // pred_check
        _
      $region38: #{dense_block_forward.7} parent=5 // pred_check_branch
        %252 = sbr.rel (%p249) target = $region40
      $region39: #{dense_block_forward.7} parent=5 // pred_region
        %s253 = ssub.s32 %s20, 1
        %p254 = scmp.lt.s32.totalorder %s25, 1
        %s255 = scalar_select %p254, %s25, 1
        %s256 = smul.addr %s255, 32
        %s257 = smul.addr %s256, 8
        %s258 = scalar_lea.vmem %s0, %s257
        %p259 = pneg %p46
        %p260 = pneg %p43
        %p261 = pneg %p67
        %p262 = pneg %p64
        %p263 = pneg %p88
        %p264 = pneg %p85
        %p265 = pneg %p109
        %p266 = pneg %p106
        %p267 = pneg %p130
        %p268 = pneg %p127
        %p269 = pneg %p156
        %p270 = pneg %p153
        %p271 = scmp.lt.s32.totalorder %s25, 1
        %s272 = scalar_select %p271, %s25, 1
        %s273 = smul.addr %s272, 32
        %s274 = smul.addr %s273, 8
        %s275 = scalar_lea.vmem %s5, %s274
        %p276 = pneg %p182
        %p277 = pneg %p179
        %s278 = sand.u32 %s169, 1
        %s279 = scalar_lea.sflag [#allocation3], %s278
        %s280 = sand.u32 %s169, 1
        %s281 = smul.addr %s280, 8
        %s282 = scalar_lea.vmem [#allocation2], %s281
        %p283 = pneg %p208
        %p284 = pneg %p205
        %s285 = sand.u32 %s195, 1
        %s286 = scalar_lea.sflag [#allocation5], %s285
        %s287 = sand.u32 %s195, 1
        %s288 = smul.addr %s287, 8
        %s289 = scalar_lea.vmem [#allocation4], %s288
        %p290 = scmp.lt.s32.totalorder %s25, 1
        %s291 = scalar_select %p290, %s25, 1
        %s292 = smul.addr %s291, 32
        %s293 = smul.addr %s292, 8
        %s294 = scalar_lea.vmem %s0, %s293
        %p295 = scmp.lt.s32.totalorder %s25, 1
        %s296 = scalar_select %p295, %s25, 1
        %s297 = smul.addr %s296, 32
        %s298 = smul.addr %s297, 8
        %s299 = scalar_lea.vmem %s5, %s298
        %v301 = vld [vmem:[%s294] sm:$0xff]
        %v302 = vld [vmem:[%s294 + $0x8] sm:$0xff]
        %v303 = vld [vmem:[%s294 + $0x10] sm:$0xff]
        %v304 = vld [vmem:[%s294 + $0x18] sm:$0xff]
        %v305 = vld [vmem:[%s294 + $0x20] sm:$0xff]
        %v306 = vld [vmem:[%s294 + $0x28] sm:$0xff]
        %v307 = vld [vmem:[%s294 + $0x30] sm:$0xff]
        %v308 = vld [vmem:[%s294 + $0x38] sm:$0xff]
        %v309 = vld [vmem:[%s294 + $0x40] sm:$0xff]
        %v310 = vld [vmem:[%s294 + $0x48] sm:$0xff]
        %v311 = vld [vmem:[%s294 + $0x50] sm:$0xff]
        %v312 = vld [vmem:[%s294 + $0x58] sm:$0xff]
        %v313 = vld [vmem:[%s294 + $0x60] sm:$0xff]
        %v314 = vld [vmem:[%s294 + $0x68] sm:$0xff]
        %v315 = vld [vmem:[%s294 + $0x70] sm:$0xff]
        %v316 = vld [vmem:[%s294 + $0x78] sm:$0xff]
        %v317 = vld [vmem:[%s294 + $0x80] sm:$0xff]
        %v318 = vld [vmem:[%s294 + $0x88] sm:$0xff]
        %v319 = vld [vmem:[%s294 + $0x90] sm:$0xff]
        %v320 = vld [vmem:[%s294 + $0x98] sm:$0xff]
        %v321 = vld [vmem:[%s294 + $0xa0] sm:$0xff]
        %v322 = vld [vmem:[%s294 + $0xa8] sm:$0xff]
        %v323 = vld [vmem:[%s294 + $0xb0] sm:$0xff]
        %v324 = vld [vmem:[%s294 + $0xb8] sm:$0xff]
        %v325 = vld [vmem:[%s294 + $0xc0] sm:$0xff]
        %v326 = vld [vmem:[%s294 + $0xc8] sm:$0xff]
        %v327 = vld [vmem:[%s294 + $0xd0] sm:$0xff]
        %v328 = vld [vmem:[%s294 + $0xd8] sm:$0xff]
        %v329 = vld [vmem:[%s294 + $0xe0] sm:$0xff]
        %v330 = vld [vmem:[%s294 + $0xe8] sm:$0xff]
        %v331 = vld [vmem:[%s294 + $0xf0] sm:$0xff]
        %v332 = vld [vmem:[%s294 + $0xf8] sm:$0xff]
        %v333 = vld [vmem:[%s1] sm:$0x1]
        %v335 = vlaneseq
        %v336 = vshrl.u32 %v335, 7
        %v337 = vsub.s32 0, %v336
        %v338 = vrot.slane %v333, %v337
        %v340 = vmul.f32 %v301, %v338
        %v341 = vmul.f32 %v302, %v338
        %v342 = vmul.f32 %v303, %v338
        %v343 = vmul.f32 %v304, %v338
        %v344 = vmul.f32 %v305, %v338
        %v345 = vmul.f32 %v306, %v338
        %v346 = vmul.f32 %v307, %v338
        %v347 = vmul.f32 %v308, %v338
        %v348 = vmul.f32 %v309, %v338
        %v349 = vmul.f32 %v310, %v338
        %v350 = vmul.f32 %v311, %v338
        %v351 = vmul.f32 %v312, %v338
        %v352 = vmul.f32 %v313, %v338
        %v353 = vmul.f32 %v314, %v338
        %v354 = vmul.f32 %v315, %v338
        %v355 = vmul.f32 %v316, %v338
        %v356 = vmul.f32 %v317, %v338
        %v357 = vmul.f32 %v318, %v338
        %v358 = vmul.f32 %v319, %v338
        %v359 = vmul.f32 %v320, %v338
        %v360 = vmul.f32 %v321, %v338
        %v361 = vmul.f32 %v322, %v338
        %v362 = vmul.f32 %v323, %v338
        %v363 = vmul.f32 %v324, %v338
        %v364 = vmul.f32 %v325, %v338
        %v365 = vmul.f32 %v326, %v338
        %v366 = vmul.f32 %v327, %v338
        %v367 = vmul.f32 %v328, %v338
        %v368 = vmul.f32 %v329, %v338
        %v369 = vmul.f32 %v330, %v338
        %v370 = vmul.f32 %v331, %v338
        %v371 = vmul.f32 %v332, %v338
        %v372 = vld [vmem:[%s2] sm:$0x1]
        %v374 = vlaneseq
        %v375 = vshrl.u32 %v374, 7
        %v376 = vsub.s32 0, %v375
        %v377 = vrot.slane %v372, %v376
        %v379 = vadd.f32 %v340, %v377
        %v380 = vadd.f32 %v341, %v377
        %v381 = vadd.f32 %v342, %v377
        %v382 = vadd.f32 %v343, %v377
        %v383 = vadd.f32 %v344, %v377
        %v384 = vadd.f32 %v345, %v377
        %v385 = vadd.f32 %v346, %v377
        %v386 = vadd.f32 %v347, %v377
        %v387 = vadd.f32 %v348, %v377
        %v388 = vadd.f32 %v349, %v377
        %v389 = vadd.f32 %v350, %v377
        %v390 = vadd.f32 %v351, %v377
        %v391 = vadd.f32 %v352, %v377
        %v392 = vadd.f32 %v353, %v377
        %v393 = vadd.f32 %v354, %v377
        %v394 = vadd.f32 %v355, %v377
        %v395 = vadd.f32 %v356, %v377
        %v396 = vadd.f32 %v357, %v377
        %v397 = vadd.f32 %v358, %v377
        %v398 = vadd.f32 %v359, %v377
        %v399 = vadd.f32 %v360, %v377
        %v400 = vadd.f32 %v361, %v377
        %v401 = vadd.f32 %v362, %v377
        %v402 = vadd.f32 %v363, %v377
        %v403 = vadd.f32 %v364, %v377
        %v404 = vadd.f32 %v365, %v377
        %v405 = vadd.f32 %v366, %v377
        %v406 = vadd.f32 %v367, %v377
        %v407 = vadd.f32 %v368, %v377
        %v408 = vadd.f32 %v369, %v377
        %v409 = vadd.f32 %v370, %v377
        %v410 = vadd.f32 %v371, %v377
        %v411 = vmax.f32 %v379, 0.0
        %v412 = vmax.f32 %v380, 0.0
        %v413 = vmax.f32 %v381, 0.0
        %v414 = vmax.f32 %v382, 0.0
        %v415 = vmax.f32 %v383, 0.0
        %v416 = vmax.f32 %v384, 0.0
        %v417 = vmax.f32 %v385, 0.0
        %v418 = vmax.f32 %v386, 0.0
        %v419 = vmax.f32 %v387, 0.0
        %v420 = vmax.f32 %v388, 0.0
        %v421 = vmax.f32 %v389, 0.0
        %v422 = vmax.f32 %v390, 0.0
        %v423 = vmax.f32 %v391, 0.0
        %v424 = vmax.f32 %v392, 0.0
        %v425 = vmax.f32 %v393, 0.0
        %v426 = vmax.f32 %v394, 0.0
        %v427 = vmax.f32 %v395, 0.0
        %v428 = vmax.f32 %v396, 0.0
        %v429 = vmax.f32 %v397, 0.0
        %v430 = vmax.f32 %v398, 0.0
        %v431 = vmax.f32 %v399, 0.0
        %v432 = vmax.f32 %v400, 0.0
        %v433 = vmax.f32 %v401, 0.0
        %v434 = vmax.f32 %v402, 0.0
        %v435 = vmax.f32 %v403, 0.0
        %v436 = vmax.f32 %v404, 0.0
        %v437 = vmax.f32 %v405, 0.0
        %v438 = vmax.f32 %v406, 0.0
        %v439 = vmax.f32 %v407, 0.0
        %v440 = vmax.f32 %v408, 0.0
        %v441 = vmax.f32 %v409, 0.0
        %v442 = vmax.f32 %v410, 0.0
        %v443 = vlaneseq
        %v444 = vshrl.u32 %v443, 7
        %v445 = vadd.s32 %v444, 8
        %v446 = vrot.slane %v411, 7
        %v447 = vrot.slane %v412, 7
        %v448 = vrot.slane %v413, 7
        %v449 = vrot.slane %v414, 7
        %v450 = vrot.slane %v415, 7
        %v451 = vrot.slane %v416, 7
        %v452 = vrot.slane %v417, 7
        %v453 = vrot.slane %v418, 7
        %v454 = vrot.slane %v419, 7
        %v455 = vrot.slane %v420, 7
        %v456 = vrot.slane %v421, 7
        %v457 = vrot.slane %v422, 7
        %v458 = vrot.slane %v423, 7
        %v459 = vrot.slane %v424, 7
        %v460 = vrot.slane %v425, 7
        %v461 = vrot.slane %v426, 7
        %v462 = vrot.slane %v427, 7
        %v463 = vrot.slane %v428, 7
        %v464 = vrot.slane %v429, 7
        %v465 = vrot.slane %v430, 7
        %v466 = vrot.slane %v431, 7
        %v467 = vrot.slane %v432, 7
        %v468 = vrot.slane %v433, 7
        %v469 = vrot.slane %v434, 7
        %v470 = vrot.slane %v435, 7
        %v471 = vrot.slane %v436, 7
        %v472 = vrot.slane %v437, 7
        %v473 = vrot.slane %v438, 7
        %v474 = vrot.slane %v439, 7
        %v475 = vrot.slane %v440, 7
        %v476 = vrot.slane %v441, 7
        %v477 = vrot.slane %v442, 7
        %vm478 = vcmp.lt.s32.totalorder %v444, 1
        %v479 = vsel %vm478, %v476, %v477
        %v480 = vsel %vm478, %v475, %v476
        %v481 = vsel %vm478, %v474, %v475
        %v482 = vsel %vm478, %v473, %v474
        %v483 = vsel %vm478, %v472, %v473
        %v484 = vsel %vm478, %v471, %v472
        %v485 = vsel %vm478, %v470, %v471
        %v486 = vsel %vm478, %v469, %v470
        %v487 = vsel %vm478, %v468, %v469
        %v488 = vsel %vm478, %v467, %v468
        %v489 = vsel %vm478, %v466, %v467
        %v490 = vsel %vm478, %v465, %v466
        %v491 = vsel %vm478, %v464, %v465
        %v492 = vsel %vm478, %v463, %v464
        %v493 = vsel %vm478, %v462, %v463
        %v494 = vsel %vm478, %v461, %v462
        %v495 = vsel %vm478, %v460, %v461
        %v496 = vsel %vm478, %v459, %v460
        %v497 = vsel %vm478, %v458, %v459
        %v498 = vsel %vm478, %v457, %v458
        %v499 = vsel %vm478, %v456, %v457
        %v500 = vsel %vm478, %v455, %v456
        %v501 = vsel %vm478, %v454, %v455
        %v502 = vsel %vm478, %v453, %v454
        %v503 = vsel %vm478, %v452, %v453
        %v504 = vsel %vm478, %v451, %v452
        %v505 = vsel %vm478, %v450, %v451
        %v506 = vsel %vm478, %v449, %v450
        %v507 = vsel %vm478, %v448, %v449
        %v508 = vsel %vm478, %v447, %v448
        %v509 = vsel %vm478, %v446, %v447
        %v510 = vsel %vm478, %v477, %v446
        %vm511 = vcmp.eq.s32.totalorder %v444, 0
        %vm512 = vcmp.eq.s32.totalorder %v445, 0
        %v513 = vsel %vm511, 0.0, %v510
        %v514 = vsel %vm512, 0.0, %v509
        %v515 = vsel %vm511, 0.0, %v508
        %v516 = vsel %vm512, 0.0, %v507
        %v517 = vsel %vm511, 0.0, %v506
        %v518 = vsel %vm512, 0.0, %v505
        %v519 = vsel %vm511, 0.0, %v504
        %v520 = vsel %vm512, 0.0, %v503
        %v521 = vsel %vm511, 0.0, %v502
        %v522 = vsel %vm512, 0.0, %v501
        %v523 = vsel %vm511, 0.0, %v500
        %v524 = vsel %vm512, 0.0, %v499
        %v525 = vsel %vm511, 0.0, %v498
        %v526 = vsel %vm512, 0.0, %v497
        %v527 = vsel %vm511, 0.0, %v496
        %v528 = vsel %vm512, 0.0, %v495
        %v529 = vsel %vm511, 0.0, %v494
        %v530 = vsel %vm512, 0.0, %v493
        %v531 = vsel %vm511, 0.0, %v492
        %v532 = vsel %vm512, 0.0, %v491
        %v533 = vsel %vm511, 0.0, %v490
        %v534 = vsel %vm512, 0.0, %v489
        %v535 = vsel %vm511, 0.0, %v488
        %v536 = vsel %vm512, 0.0, %v487
        %v537 = vsel %vm511, 0.0, %v486
        %v538 = vsel %vm512, 0.0, %v485
        %v539 = vsel %vm511, 0.0, %v484
        %v540 = vsel %vm512, 0.0, %v483
        %v541 = vsel %vm511, 0.0, %v482
        %v542 = vsel %vm512, 0.0, %v481
        %v543 = vsel %vm511, 0.0, %v480
        %v544 = vsel %vm512, 0.0, %v479
        %v545 = vrot.slane %v411, 1
        %v546 = vrot.slane %v412, 1
        %v547 = vrot.slane %v413, 1
        %v548 = vrot.slane %v414, 1
        %v549 = vrot.slane %v415, 1
        %v550 = vrot.slane %v416, 1
        %v551 = vrot.slane %v417, 1
        %v552 = vrot.slane %v418, 1
        %v553 = vrot.slane %v419, 1
        %v554 = vrot.slane %v420, 1
        %v555 = vrot.slane %v421, 1
        %v556 = vrot.slane %v422, 1
        %v557 = vrot.slane %v423, 1
        %v558 = vrot.slane %v424, 1
        %v559 = vrot.slane %v425, 1
        %v560 = vrot.slane %v426, 1
        %v561 = vrot.slane %v427, 1
        %v562 = vrot.slane %v428, 1
        %v563 = vrot.slane %v429, 1
        %v564 = vrot.slane %v430, 1
        %v565 = vrot.slane %v431, 1
        %v566 = vrot.slane %v432, 1
        %v567 = vrot.slane %v433, 1
        %v568 = vrot.slane %v434, 1
        %v569 = vrot.slane %v435, 1
        %v570 = vrot.slane %v436, 1
        %v571 = vrot.slane %v437, 1
        %v572 = vrot.slane %v438, 1
        %v573 = vrot.slane %v439, 1
        %v574 = vrot.slane %v440, 1
        %v575 = vrot.slane %v441, 1
        %v576 = vrot.slane %v442, 1
        %vm577 = vcmp.lt.s32.totalorder %v444, 7
        %v578 = vsel %vm577, %v575, %v576
        %v579 = vsel %vm577, %v574, %v575
        %v580 = vsel %vm577, %v573, %v574
        %v581 = vsel %vm577, %v572, %v573
        %v582 = vsel %vm577, %v571, %v572
        %v583 = vsel %vm577, %v570, %v571
        %v584 = vsel %vm577, %v569, %v570
        %v585 = vsel %vm577, %v568, %v569
        %v586 = vsel %vm577, %v567, %v568
        %v587 = vsel %vm577, %v566, %v567
        %v588 = vsel %vm577, %v565, %v566
        %v589 = vsel %vm577, %v564, %v565
        %v590 = vsel %vm577, %v563, %v564
        %v591 = vsel %vm577, %v562, %v563
        %v592 = vsel %vm577, %v561, %v562
        %v593 = vsel %vm577, %v560, %v561
        %v594 = vsel %vm577, %v559, %v560
        %v595 = vsel %vm577, %v558, %v559
        %v596 = vsel %vm577, %v557, %v558
        %v597 = vsel %vm577, %v556, %v557
        %v598 = vsel %vm577, %v555, %v556
        %v599 = vsel %vm577, %v554, %v555
        %v600 = vsel %vm577, %v553, %v554
        %v601 = vsel %vm577, %v552, %v553
        %v602 = vsel %vm577, %v551, %v552
        %v603 = vsel %vm577, %v550, %v551
        %v604 = vsel %vm577, %v549, %v550
        %v605 = vsel %vm577, %v548, %v549
        %v606 = vsel %vm577, %v547, %v548
        %v607 = vsel %vm577, %v546, %v547
        %v608 = vsel %vm577, %v545, %v546
        %v609 = vsel %vm577, %v576, %v545
        %vm610 = vcmp.eq.s32.totalorder %v444, 15
        %vm611 = vcmp.eq.s32.totalorder %v445, 15
        %v612 = vsel %vm610, 0.0, %v608
        %v613 = vsel %vm611, 0.0, %v607
        %v614 = vsel %vm610, 0.0, %v606
        %v615 = vsel %vm611, 0.0, %v605
        %v616 = vsel %vm610, 0.0, %v604
        %v617 = vsel %vm611, 0.0, %v603
        %v618 = vsel %vm610, 0.0, %v602
        %v619 = vsel %vm611, 0.0, %v601
        %v620 = vsel %vm610, 0.0, %v600
        %v621 = vsel %vm611, 0.0, %v599
        %v622 = vsel %vm610, 0.0, %v598
        %v623 = vsel %vm611, 0.0, %v597
        %v624 = vsel %vm610, 0.0, %v596
        %v625 = vsel %vm611, 0.0, %v595
        %v626 = vsel %vm610, 0.0, %v594
        %v627 = vsel %vm611, 0.0, %v593
        %v628 = vsel %vm610, 0.0, %v592
        %v629 = vsel %vm611, 0.0, %v591
        %v630 = vsel %vm610, 0.0, %v590
        %v631 = vsel %vm611, 0.0, %v589
        %v632 = vsel %vm610, 0.0, %v588
        %v633 = vsel %vm611, 0.0, %v587
        %v634 = vsel %vm610, 0.0, %v586
        %v635 = vsel %vm611, 0.0, %v585
        %v636 = vsel %vm610, 0.0, %v584
        %v637 = vsel %vm611, 0.0, %v583
        %v638 = vsel %vm610, 0.0, %v582
        %v639 = vsel %vm611, 0.0, %v581
        %v640 = vsel %vm610, 0.0, %v580
        %v641 = vsel %vm611, 0.0, %v579
        %v642 = vsel %vm610, 0.0, %v578
        %v643 = vsel %vm611, 0.0, %v609
        %v644 = vpack.c.bf16 0.0, 0.0
        %v645 = vpack.c.bf16 %v514, %v513
        %v646 = vpack.c.bf16 %v412, %v411
        %v647 = vpack.c.bf16 %v613, %v612
        %v648 = vpack.c.bf16 %v516, %v515
        %v649 = vpack.c.bf16 %v414, %v413
        %v650 = vpack.c.bf16 %v615, %v614
        %v651 = vpack.c.bf16 %v518, %v517
        %v652 = vpack.c.bf16 %v416, %v415
        %v653 = vpack.c.bf16 %v617, %v616
        %v654 = vpack.c.bf16 %v520, %v519
        %v655 = vpack.c.bf16 %v418, %v417
        %v656 = vpack.c.bf16 %v619, %v618
        %v657 = vpack.c.bf16 %v522, %v521
        %v658 = vpack.c.bf16 %v420, %v419
        %v659 = vpack.c.bf16 %v621, %v620
        %v660 = vpack.c.bf16 %v524, %v523
        %v661 = vpack.c.bf16 %v422, %v421
        %v662 = vpack.c.bf16 %v623, %v622
        %v663 = vpack.c.bf16 %v526, %v525
        %v664 = vpack.c.bf16 %v424, %v423
        %v665 = vpack.c.bf16 %v625, %v624
        %v666 = vpack.c.bf16 %v528, %v527
        %v667 = vpack.c.bf16 %v426, %v425
        %v668 = vpack.c.bf16 %v627, %v626
        %v669 = vpack.c.bf16 %v530, %v529
        %v670 = vpack.c.bf16 %v428, %v427
        %v671 = vpack.c.bf16 %v629, %v628
        %v672 = vpack.c.bf16 %v532, %v531
        %v673 = vpack.c.bf16 %v430, %v429
        %v674 = vpack.c.bf16 %v631, %v630
        %v675 = vpack.c.bf16 %v534, %v533
        %v676 = vpack.c.bf16 %v432, %v431
        %v677 = vpack.c.bf16 %v633, %v632
        %v678 = vpack.c.bf16 %v536, %v535
        %v679 = vpack.c.bf16 %v434, %v433
        %v680 = vpack.c.bf16 %v635, %v634
        %v681 = vpack.c.bf16 %v538, %v537
        %v682 = vpack.c.bf16 %v436, %v435
        %v683 = vpack.c.bf16 %v637, %v636
        %v684 = vpack.c.bf16 %v540, %v539
        %v685 = vpack.c.bf16 %v438, %v437
        %v686 = vpack.c.bf16 %v639, %v638
        %v687 = vpack.c.bf16 %v542, %v541
        %v688 = vpack.c.bf16 %v440, %v439
        %v689 = vpack.c.bf16 %v641, %v640
        %v690 = vpack.c.bf16 %v544, %v543
        %v691 = vpack.c.bf16 %v442, %v441
        %v692 = vpack.c.bf16 %v643, %v642
        %v693 = vld [vmem:[%s3] sm:$0xf]
        %v694 = vld [vmem:[%s3 + $0x4] sm:$0xf]
        %v695 = vld [vmem:[%s3 + $0x8] sm:$0xf]
        %v696 = vld [vmem:[%s3 + $0xc] sm:$0xf]
        %v697 = vld [vmem:[%s3 + $0x10] sm:$0xf]
        %v698 = vld [vmem:[%s3 + $0x14] sm:$0xf]
        %v699 = vld [vmem:[%s3 + $0x18] sm:$0xf]
        %v700 = vld [vmem:[%s3 + $0x1c] sm:$0xf]
        %v701 = vld [vmem:[%s3 + $0x20] sm:$0xf]
        %v702 = vld [vmem:[%s3 + $0x24] sm:$0xf]
        %v703 = vld [vmem:[%s3 + $0x28] sm:$0xf]
        %v704 = vld [vmem:[%s3 + $0x2c] sm:$0xf]
        %v705 = vld [vmem:[%s3 + $0x30] sm:$0xf]
        %v706 = vld [vmem:[%s3 + $0x34] sm:$0xf]
        %v707 = vld [vmem:[%s3 + $0x38] sm:$0xf]
        %v708 = vld [vmem:[%s3 + $0x3c] sm:$0xf]
        %v709 = vld [vmem:[%s3 + $0x40] sm:$0xf]
        %v710 = vld [vmem:[%s3 + $0x44] sm:$0xf]
        %v711 = vld [vmem:[%s3 + $0x48] sm:$0xf]
        %v712 = vld [vmem:[%s3 + $0x4c] sm:$0xf]
        %v713 = vld [vmem:[%s3 + $0x50] sm:$0xf]
        %v714 = vld [vmem:[%s3 + $0x54] sm:$0xf]
        %v715 = vld [vmem:[%s3 + $0x58] sm:$0xf]
        %v716 = vld [vmem:[%s3 + $0x5c] sm:$0xf]
        %v717 = vld [vmem:[%s3 + $0x60] sm:$0xf]
        %v718 = vld [vmem:[%s3 + $0x64] sm:$0xf]
        %v719 = vld [vmem:[%s3 + $0x68] sm:$0xf]
        %v720 = vld [vmem:[%s3 + $0x6c] sm:$0xf]
        %v721 = vld [vmem:[%s3 + $0x70] sm:$0xf]
        %v722 = vld [vmem:[%s3 + $0x74] sm:$0xf]
        %v723 = vld [vmem:[%s3 + $0x78] sm:$0xf]
        %v724 = vld [vmem:[%s3 + $0x7c] sm:$0xf]
        %v725 = vld [vmem:[%s3 + $0x80] sm:$0xf]
        %v726 = vld [vmem:[%s3 + $0x84] sm:$0xf]
        %v727 = vld [vmem:[%s3 + $0x88] sm:$0xf]
        %v728 = vld [vmem:[%s3 + $0x8c] sm:$0xf]
        %v729 = vld [vmem:[%s3 + $0x90] sm:$0xf]
        %v730 = vld [vmem:[%s3 + $0x94] sm:$0xf]
        %v731 = vld [vmem:[%s3 + $0x98] sm:$0xf]
        %v732 = vld [vmem:[%s3 + $0x9c] sm:$0xf]
        %v733 = vld [vmem:[%s3 + $0xa0] sm:$0xf]
        %v734 = vld [vmem:[%s3 + $0xa4] sm:$0xf]
        %v735 = vld [vmem:[%s3 + $0xa8] sm:$0xf]
        %v736 = vld [vmem:[%s3 + $0xac] sm:$0xf]
        %v737 = vld [vmem:[%s3 + $0xb0] sm:$0xf]
        %v738 = vld [vmem:[%s3 + $0xb4] sm:$0xf]
        %v739 = vld [vmem:[%s3 + $0xb8] sm:$0xf]
        %v740 = vld [vmem:[%s3 + $0xbc] sm:$0xf]
        %v741 = vld [vmem:[%s3 + $0xc0] sm:$0xf]
        %v742 = vld [vmem:[%s3 + $0xc4] sm:$0xf]
        %v743 = vld [vmem:[%s3 + $0xc8] sm:$0xf]
        %v744 = vld [vmem:[%s3 + $0xcc] sm:$0xf]
        %v745 = vld [vmem:[%s3 + $0xd0] sm:$0xf]
        %v746 = vld [vmem:[%s3 + $0xd4] sm:$0xf]
        %v747 = vld [vmem:[%s3 + $0xd8] sm:$0xf]
        %v748 = vld [vmem:[%s3 + $0xdc] sm:$0xf]
        %v749 = vld [vmem:[%s3 + $0xe0] sm:$0xf]
        %v750 = vld [vmem:[%s3 + $0xe4] sm:$0xf]
        %v751 = vld [vmem:[%s3 + $0xe8] sm:$0xf]
        %v752 = vld [vmem:[%s3 + $0xec] sm:$0xf]
        %v753 = vld [vmem:[%s3 + $0xf0] sm:$0xf]
        %v754 = vld [vmem:[%s3 + $0xf4] sm:$0xf]
        %v755 = vld [vmem:[%s3 + $0xf8] sm:$0xf]
        %v756 = vld [vmem:[%s3 + $0xfc] sm:$0xf]
        %v757 = vld [vmem:[%s3 + $0x100] sm:$0xf]
        %v758 = vld [vmem:[%s3 + $0x104] sm:$0xf]
        %v759 = vld [vmem:[%s3 + $0x108] sm:$0xf]
        %v760 = vld [vmem:[%s3 + $0x10c] sm:$0xf]
        %v761 = vld [vmem:[%s3 + $0x110] sm:$0xf]
        %v762 = vld [vmem:[%s3 + $0x114] sm:$0xf]
        %v763 = vld [vmem:[%s3 + $0x118] sm:$0xf]
        %v764 = vld [vmem:[%s3 + $0x11c] sm:$0xf]
        %v765 = vld [vmem:[%s3 + $0x120] sm:$0xf]
        %v766 = vld [vmem:[%s3 + $0x124] sm:$0xf]
        %v767 = vld [vmem:[%s3 + $0x128] sm:$0xf]
        %v768 = vld [vmem:[%s3 + $0x12c] sm:$0xf]
        %v769 = vld [vmem:[%s3 + $0x130] sm:$0xf]
        %v770 = vld [vmem:[%s3 + $0x134] sm:$0xf]
        %v771 = vld [vmem:[%s3 + $0x138] sm:$0xf]
        %v772 = vld [vmem:[%s3 + $0x13c] sm:$0xf]
        %v773 = vld [vmem:[%s3 + $0x140] sm:$0xf]
        %v774 = vld [vmem:[%s3 + $0x144] sm:$0xf]
        %v775 = vld [vmem:[%s3 + $0x148] sm:$0xf]
        %v776 = vld [vmem:[%s3 + $0x14c] sm:$0xf]
        %v777 = vld [vmem:[%s3 + $0x150] sm:$0xf]
        %v778 = vld [vmem:[%s3 + $0x154] sm:$0xf]
        %v779 = vld [vmem:[%s3 + $0x158] sm:$0xf]
        %v780 = vld [vmem:[%s3 + $0x15c] sm:$0xf]
        %v781 = vld [vmem:[%s3 + $0x160] sm:$0xf]
        %v782 = vld [vmem:[%s3 + $0x164] sm:$0xf]
        %v783 = vld [vmem:[%s3 + $0x168] sm:$0xf]
        %v784 = vld [vmem:[%s3 + $0x16c] sm:$0xf]
        %v785 = vld [vmem:[%s3 + $0x170] sm:$0xf]
        %v786 = vld [vmem:[%s3 + $0x174] sm:$0xf]
        %v787 = vld [vmem:[%s3 + $0x178] sm:$0xf]
        %v788 = vld [vmem:[%s3 + $0x17c] sm:$0xf]
        %v789 = vld [vmem:[%s3 + $0x180] sm:$0xf]
        %v790 = vld [vmem:[%s3 + $0x184] sm:$0xf]
        %v791 = vld [vmem:[%s3 + $0x188] sm:$0xf]
        %v792 = vld [vmem:[%s3 + $0x18c] sm:$0xf]
        %v793 = vld [vmem:[%s3 + $0x190] sm:$0xf]
        %v794 = vld [vmem:[%s3 + $0x194] sm:$0xf]
        %v795 = vld [vmem:[%s3 + $0x198] sm:$0xf]
        %v796 = vld [vmem:[%s3 + $0x19c] sm:$0xf]
        %v797 = vld [vmem:[%s3 + $0x1a0] sm:$0xf]
        %v798 = vld [vmem:[%s3 + $0x1a4] sm:$0xf]
        %v799 = vld [vmem:[%s3 + $0x1a8] sm:$0xf]
        %v800 = vld [vmem:[%s3 + $0x1ac] sm:$0xf]
        %v801 = vld [vmem:[%s3 + $0x1b0] sm:$0xf]
        %v802 = vld [vmem:[%s3 + $0x1b4] sm:$0xf]
        %v803 = vld [vmem:[%s3 + $0x1b8] sm:$0xf]
        %v804 = vld [vmem:[%s3 + $0x1bc] sm:$0xf]
        %v805 = vld [vmem:[%s3 + $0x1c0] sm:$0xf]
        %v806 = vld [vmem:[%s3 + $0x1c4] sm:$0xf]
        %v807 = vld [vmem:[%s3 + $0x1c8] sm:$0xf]
        %v808 = vld [vmem:[%s3 + $0x1cc] sm:$0xf]
        %v809 = vld [vmem:[%s3 + $0x1d0] sm:$0xf]
        %v810 = vld [vmem:[%s3 + $0x1d4] sm:$0xf]
        %v811 = vld [vmem:[%s3 + $0x1d8] sm:$0xf]
        %v812 = vld [vmem:[%s3 + $0x1dc] sm:$0xf]
        %v813 = vld [vmem:[%s3 + $0x1e0] sm:$0xf]
        %v814 = vld [vmem:[%s3 + $0x1e4] sm:$0xf]
        %v815 = vld [vmem:[%s3 + $0x1e8] sm:$0xf]
        %v816 = vld [vmem:[%s3 + $0x1ec] sm:$0xf]
        %v817 = vld [vmem:[%s3 + $0x1f0] sm:$0xf]
        %v818 = vld [vmem:[%s3 + $0x1f4] sm:$0xf]
        %v819 = vld [vmem:[%s3 + $0x1f8] sm:$0xf]
        %v820 = vld [vmem:[%s3 + $0x1fc] sm:$0xf]
        %v821 = vld [vmem:[%s3 + $0x200] sm:$0xf]
        %v822 = vld [vmem:[%s3 + $0x204] sm:$0xf]
        %v823 = vld [vmem:[%s3 + $0x208] sm:$0xf]
        %v824 = vld [vmem:[%s3 + $0x20c] sm:$0xf]
        %v825 = vld [vmem:[%s3 + $0x210] sm:$0xf]
        %v826 = vld [vmem:[%s3 + $0x214] sm:$0xf]
        %v827 = vld [vmem:[%s3 + $0x218] sm:$0xf]
        %v828 = vld [vmem:[%s3 + $0x21c] sm:$0xf]
        %v829 = vld [vmem:[%s3 + $0x220] sm:$0xf]
        %v830 = vld [vmem:[%s3 + $0x224] sm:$0xf]
        %v831 = vld [vmem:[%s3 + $0x228] sm:$0xf]
        %v832 = vld [vmem:[%s3 + $0x22c] sm:$0xf]
        %v833 = vld [vmem:[%s3 + $0x230] sm:$0xf]
        %v834 = vld [vmem:[%s3 + $0x234] sm:$0xf]
        %v835 = vld [vmem:[%s3 + $0x238] sm:$0xf]
        %v836 = vld [vmem:[%s3 + $0x23c] sm:$0xf]
        %v837 = vld [vmem:[%s4] sm:$0x1]
        %v839 = vlaneseq
        %v840 = vshrl.u32 %v839, 7
        %v841 = vsub.s32 0, %v840
        %v842 = vrot.slane %v837, %v841
        %v988 = vunpack.c.l.b16 %v693
        %v989 = vunpack.c.l.b16 %v694
        %v990 = vunpack.c.l.b16 %v695
        %v991 = vunpack.c.l.b16 %v696
        %v992 = vunpack.c.l.b16 %v697
        %v993 = vunpack.c.l.b16 %v698
        %v994 = vunpack.c.l.b16 %v699
        %v995 = vunpack.c.l.b16 %v700
        %v996 = vunpack.c.l.b16 %v701
        %v997 = vunpack.c.l.b16 %v702
        %v998 = vunpack.c.l.b16 %v703
        %v999 = vunpack.c.l.b16 %v704
        %v1000 = vunpack.c.l.b16 %v705
        %v1001 = vunpack.c.l.b16 %v706
        %v1002 = vunpack.c.l.b16 %v707
        %v1003 = vunpack.c.l.b16 %v708
        %v1004 = vunpack.c.l.b16 %v709
        %v1005 = vunpack.c.l.b16 %v710
        %v1006 = vunpack.c.l.b16 %v711
        %v1007 = vunpack.c.l.b16 %v712
        %v1008 = vunpack.c.l.b16 %v713
        %v1009 = vunpack.c.l.b16 %v714
        %v1010 = vunpack.c.l.b16 %v715
        %v1011 = vunpack.c.l.b16 %v716
        %v1012 = vunpack.c.l.b16 %v717
        %v1013 = vunpack.c.l.b16 %v718
        %v1014 = vunpack.c.l.b16 %v719
        %v1015 = vunpack.c.l.b16 %v720
        %v1016 = vunpack.c.l.b16 %v721
        %v1017 = vunpack.c.l.b16 %v722
        %v1018 = vunpack.c.l.b16 %v723
        %v1019 = vunpack.c.l.b16 %v724
        %v1020 = vunpack.c.l.b16 %v725
        %v1021 = vunpack.c.l.b16 %v726
        %v1022 = vunpack.c.l.b16 %v727
        %v1023 = vunpack.c.l.b16 %v728
        %v1024 = vunpack.c.l.b16 %v729
        %v1025 = vunpack.c.l.b16 %v730
        %v1026 = vunpack.c.l.b16 %v731
        %v1027 = vunpack.c.l.b16 %v732
        %v1028 = vunpack.c.l.b16 %v733
        %v1029 = vunpack.c.l.b16 %v734
        %v1030 = vunpack.c.l.b16 %v735
        %v1031 = vunpack.c.l.b16 %v736
        %v1032 = vunpack.c.l.b16 %v737
        %v1033 = vunpack.c.l.b16 %v738
        %v1034 = vunpack.c.l.b16 %v739
        %v1035 = vunpack.c.l.b16 %v740
        %v1036 = vunpack.c.l.b16 %v741
        %v1037 = vunpack.c.l.b16 %v742
        %v1038 = vunpack.c.l.b16 %v743
        %v1039 = vunpack.c.l.b16 %v744
        %v1040 = vunpack.c.l.b16 %v745
        %v1041 = vunpack.c.l.b16 %v746
        %v1042 = vunpack.c.l.b16 %v747
        %v1043 = vunpack.c.l.b16 %v748
        %v1044 = vunpack.c.l.b16 %v749
        %v1045 = vunpack.c.l.b16 %v750
        %v1046 = vunpack.c.l.b16 %v751
        %v1047 = vunpack.c.l.b16 %v752
        %v1048 = vunpack.c.l.b16 %v753
        %v1049 = vunpack.c.l.b16 %v754
        %v1050 = vunpack.c.l.b16 %v755
        %v1051 = vunpack.c.l.b16 %v756
        %v1052 = vunpack.c.l.b16 %v757
        %v1053 = vunpack.c.l.b16 %v758
        %v1054 = vunpack.c.l.b16 %v759
        %v1055 = vunpack.c.l.b16 %v760
        %v1056 = vunpack.c.l.b16 %v761
        %v1057 = vunpack.c.l.b16 %v762
        %v1058 = vunpack.c.l.b16 %v763
        %v1059 = vunpack.c.l.b16 %v764
        %v1060 = vunpack.c.l.b16 %v765
        %v1061 = vunpack.c.l.b16 %v766
        %v1062 = vunpack.c.l.b16 %v767
        %v1063 = vunpack.c.l.b16 %v768
        %v1064 = vunpack.c.l.b16 %v769
        %v1065 = vunpack.c.l.b16 %v770
        %v1066 = vunpack.c.l.b16 %v771
        %v1067 = vunpack.c.l.b16 %v772
        %v1068 = vunpack.c.l.b16 %v773
        %v1069 = vunpack.c.l.b16 %v774
        %v1070 = vunpack.c.l.b16 %v775
        %v1071 = vunpack.c.l.b16 %v776
        %v1072 = vunpack.c.l.b16 %v777
        %v1073 = vunpack.c.l.b16 %v778
        %v1074 = vunpack.c.l.b16 %v779
        %v1075 = vunpack.c.l.b16 %v780
        %v1076 = vunpack.c.l.b16 %v781
        %v1077 = vunpack.c.l.b16 %v782
        %v1078 = vunpack.c.l.b16 %v783
        %v1079 = vunpack.c.l.b16 %v784
        %v1080 = vunpack.c.l.b16 %v785
        %v1081 = vunpack.c.l.b16 %v786
        %v1082 = vunpack.c.l.b16 %v787
        %v1083 = vunpack.c.l.b16 %v788
        %v1084 = vunpack.c.l.b16 %v789
        %v1085 = vunpack.c.l.b16 %v790
        %v1086 = vunpack.c.l.b16 %v791
        %v1087 = vunpack.c.l.b16 %v792
        %v1088 = vunpack.c.l.b16 %v793
        %v1089 = vunpack.c.l.b16 %v794
        %v1090 = vunpack.c.l.b16 %v795
        %v1091 = vunpack.c.l.b16 %v796
        %v1092 = vunpack.c.l.b16 %v797
        %v1093 = vunpack.c.l.b16 %v798
        %v1094 = vunpack.c.l.b16 %v799
        %v1095 = vunpack.c.l.b16 %v800
        %v1096 = vunpack.c.l.b16 %v801
        %v1097 = vunpack.c.l.b16 %v802
        %v1098 = vunpack.c.l.b16 %v803
        %v1099 = vunpack.c.l.b16 %v804
        %v1100 = vunpack.c.l.b16 %v805
        %v1101 = vunpack.c.l.b16 %v806
        %v1102 = vunpack.c.l.b16 %v807
        %v1103 = vunpack.c.l.b16 %v808
        %v1104 = vunpack.c.l.b16 %v809
        %v1105 = vunpack.c.l.b16 %v810
        %v1106 = vunpack.c.l.b16 %v811
        %v1107 = vunpack.c.l.b16 %v812
        %v1108 = vunpack.c.l.b16 %v813
        %v1109 = vunpack.c.l.b16 %v814
        %v1110 = vunpack.c.l.b16 %v815
        %v1111 = vunpack.c.l.b16 %v816
        %v1112 = vunpack.c.l.b16 %v817
        %v1113 = vunpack.c.l.b16 %v818
        %v1114 = vunpack.c.l.b16 %v819
        %v1115 = vunpack.c.l.b16 %v820
        %v1116 = vunpack.c.l.b16 %v821
        %v1117 = vunpack.c.l.b16 %v822
        %v1118 = vunpack.c.l.b16 %v823
        %v1119 = vunpack.c.l.b16 %v824
        %v1120 = vunpack.c.l.b16 %v825
        %v1121 = vunpack.c.l.b16 %v826
        %v1122 = vunpack.c.l.b16 %v827
        %v1123 = vunpack.c.l.b16 %v828
        %v1124 = vunpack.c.l.b16 %v829
        %v1125 = vunpack.c.l.b16 %v830
        %v1126 = vunpack.c.l.b16 %v831
        %v1127 = vunpack.c.l.b16 %v832
        %v1128 = vunpack.c.l.b16 %v833
        %v1129 = vunpack.c.l.b16 %v834
        %v1130 = vunpack.c.l.b16 %v835
        %v1131 = vunpack.c.l.b16 %v836
        %v1132 = vpack.c.b16 %v989, %v988
        %v1133 = vpack.c.b16 %v991, %v990
        %v1134 = vpack.c.b16 %v993, %v992
        %v1135 = vpack.c.b16 %v995, %v994
        %v1136 = vpack.c.b16 %v997, %v996
        %v1137 = vpack.c.b16 %v999, %v998
        %v1138 = vpack.c.b16 %v1001, %v1000
        %v1139 = vpack.c.b16 %v1003, %v1002
        %v1140 = vpack.c.b16 %v1005, %v1004
        %v1141 = vpack.c.b16 %v1007, %v1006
        %v1142 = vpack.c.b16 %v1009, %v1008
        %v1143 = vpack.c.b16 %v1011, %v1010
        %v1144 = vpack.c.b16 %v1013, %v1012
        %v1145 = vpack.c.b16 %v1015, %v1014
        %v1146 = vpack.c.b16 %v1017, %v1016
        %v1147 = vpack.c.b16 %v1019, %v1018
        %v1148 = vpack.c.b16 %v1021, %v1020
        %v1149 = vpack.c.b16 %v1023, %v1022
        %v1150 = vpack.c.b16 %v1025, %v1024
        %v1151 = vpack.c.b16 %v1027, %v1026
        %v1152 = vpack.c.b16 %v1029, %v1028
        %v1153 = vpack.c.b16 %v1031, %v1030
        %v1154 = vpack.c.b16 %v1033, %v1032
        %v1155 = vpack.c.b16 %v1035, %v1034
        %v1156 = vpack.c.b16 %v1037, %v1036
        %v1157 = vpack.c.b16 %v1039, %v1038
        %v1158 = vpack.c.b16 %v1041, %v1040
        %v1159 = vpack.c.b16 %v1043, %v1042
        %v1160 = vpack.c.b16 %v1045, %v1044
        %v1161 = vpack.c.b16 %v1047, %v1046
        %v1162 = vpack.c.b16 %v1049, %v1048
        %v1163 = vpack.c.b16 %v1051, %v1050
        %v1164 = vpack.c.b16 %v1053, %v1052
        %v1165 = vpack.c.b16 %v1055, %v1054
        %v1166 = vpack.c.b16 %v1057, %v1056
        %v1167 = vpack.c.b16 %v1059, %v1058
        %v1168 = vpack.c.b16 %v1061, %v1060
        %v1169 = vpack.c.b16 %v1063, %v1062
        %v1170 = vpack.c.b16 %v1065, %v1064
        %v1171 = vpack.c.b16 %v1067, %v1066
        %v1172 = vpack.c.b16 %v1069, %v1068
        %v1173 = vpack.c.b16 %v1071, %v1070
        %v1174 = vpack.c.b16 %v1073, %v1072
        %v1175 = vpack.c.b16 %v1075, %v1074
        %v1176 = vpack.c.b16 %v1077, %v1076
        %v1177 = vpack.c.b16 %v1079, %v1078
        %v1178 = vpack.c.b16 %v1081, %v1080
        %v1179 = vpack.c.b16 %v1083, %v1082
        %v1180 = vpack.c.b16 %v1085, %v1084
        %v1181 = vpack.c.b16 %v1087, %v1086
        %v1182 = vpack.c.b16 %v1089, %v1088
        %v1183 = vpack.c.b16 %v1091, %v1090
        %v1184 = vpack.c.b16 %v1093, %v1092
        %v1185 = vpack.c.b16 %v1095, %v1094
        %v1186 = vpack.c.b16 %v1097, %v1096
        %v1187 = vpack.c.b16 %v1099, %v1098
        %v1188 = vpack.c.b16 %v1101, %v1100
        %v1189 = vpack.c.b16 %v1103, %v1102
        %v1190 = vpack.c.b16 %v1105, %v1104
        %v1191 = vpack.c.b16 %v1107, %v1106
        %v1192 = vpack.c.b16 %v1109, %v1108
        %v1193 = vpack.c.b16 %v1111, %v1110
        %v1194 = vpack.c.b16 %v1113, %v1112
        %v1195 = vpack.c.b16 %v1115, %v1114
        %v1196 = vpack.c.b16 %v1117, %v1116
        %v1197 = vpack.c.b16 %v1119, %v1118
        %v1198 = vpack.c.b16 %v1121, %v1120
        %v1199 = vpack.c.b16 %v1123, %v1122
        %v1200 = vpack.c.b16 %v1125, %v1124
        %v1201 = vpack.c.b16 %v1127, %v1126
        %v1202 = vpack.c.b16 %v1129, %v1128
        %v1203 = vpack.c.b16 %v1131, %v1130
        %1276 = vmatprep.subr.bf16.mxu0 0
        %1277 = vmatpush1.bf16.msra.mxu0 %v1132
        %1278 = vmatprep.subr.bf16.mxu0 0
        %1279 = vmatpush1.bf16.msra.mxu0 %v1133
        %1280 = vmatprep.subr.bf16.mxu0 0
        %1281 = vmatpush1.bf16.msra.mxu0 %v1134
        %1282 = vmatprep.subr.bf16.mxu0 0
        %1283 = vmatpush1.bf16.msra.mxu0 %v1135
        %1284 = vmatprep.subr.bf16.mxu0 0
        %1285 = vmatpush1.bf16.msra.mxu0 %v1136
        %1286 = vmatprep.subr.bf16.mxu0 0
        %1287 = vmatpush1.bf16.msra.mxu0 %v1137
        %1288 = vmatprep.subr.bf16.mxu0 0
        %1289 = vmatpush1.bf16.msra.mxu0 %v1138
        %1290 = vmatprep.subr.bf16.mxu0 0
        %1291 = vmatpush1.bf16.msra.mxu0 %v1139
        %1292 = vmatprep.subr.bf16.mxu0 0
        %1293 = vmatpush1.bf16.msra.mxu0 %v1140
        %1294 = vmatprep.subr.bf16.mxu0 0
        %1295 = vmatpush1.bf16.msra.mxu0 %v1141
        %1296 = vmatprep.subr.bf16.mxu0 0
        %1297 = vmatpush1.bf16.msra.mxu0 %v1142
        %1298 = vmatprep.subr.bf16.mxu0 0
        %1299 = vmatpush1.bf16.msra.mxu0 %v1143
        %1300 = vmatprep.subr.bf16.mxu0 0
        %1301 = vmatpush1.bf16.msra.mxu0 %v1144
        %1302 = vmatprep.subr.bf16.mxu0 0
        %1303 = vmatpush1.bf16.msra.mxu0 %v1145
        %1304 = vmatprep.subr.bf16.mxu0 0
        %1305 = vmatpush1.bf16.msra.mxu0 %v1146
        %1306 = vmatprep.subr.bf16.mxu0 0
        %1307 = vmatpush1.bf16.msra.mxu0 %v1147
        %1308 = vmatprep.mubr.bf16.mxu0 %v644
        %1309 = vmatmul.mubr.bf16.gmra.mrb[0].mxu0 %v644
        %v1310 = vpop.f32.mrb[0].mxu0
        %v1311 = vadd.f32 %v842, %v1310
        %v1312 = vpop.f32.mrb[0].mxu0
        %v1313 = vpop.f32.mrb[0].mxu0
        %v1314 = vadd.f32 %v842, %v1313
        %v1315 = vpop.f32.mrb[0].mxu0
        %1316 = vmatprep.mubr.bf16.mxu0 %v646
        %1317 = vmatmul.mubr.bf16.gmra.mrb[0].mxu0 %v645
        %v1318 = vpop.f32.mrb[0].mxu0
        %v1319 = vadd.f32 %v842, %v1318
        %v1320 = vpop.f32.mrb[0].mxu0
        %v1321 = vpop.f32.mrb[0].mxu0
        %v1322 = vadd.f32 %v842, %v1321
        %v1323 = vpop.f32.mrb[0].mxu0
        %1324 = vmatprep.mubr.bf16.mxu0 %v649
        %1325 = vmatmul.mubr.bf16.gmra.mrb[0].mxu0 %v648
        %v1326 = vpop.f32.mrb[0].mxu0
        %v1327 = vadd.f32 %v842, %v1326
        %v1328 = vpop.f32.mrb[0].mxu0
        %v1329 = vpop.f32.mrb[0].mxu0
        %v1330 = vadd.f32 %v842, %v1329
        %v1331 = vpop.f32.mrb[0].mxu0
        %1332 = vmatprep.mubr.bf16.mxu0 %v652
        %1333 = vmatmul.mubr.bf16.gmra.mrb[0].mxu0 %v651
        %v1334 = vpop.f32.mrb[0].mxu0
        %v1335 = vadd.f32 %v842, %v1334
        %v1336 = vpop.f32.mrb[0].mxu0
        %v1337 = vpop.f32.mrb[0].mxu0
        %v1338 = vadd.f32 %v842, %v1337
        %v1339 = vpop.f32.mrb[0].mxu0
        %1340 = vmatprep.mubr.bf16.mxu0 %v655
        %1341 = vmatmul.mubr.bf16.gmra.mrb[0].mxu0 %v654
        %v1342 = vpop.f32.mrb[0].mxu0
        %v1343 = vadd.f32 %v842, %v1342
        %v1344 = vpop.f32.mrb[0].mxu0
        %v1345 = vpop.f32.mrb[0].mxu0
        %v1346 = vadd.f32 %v842, %v1345
        %v1347 = vpop.f32.mrb[0].mxu0
        %1348 = vmatprep.mubr.bf16.mxu0 %v658
        %1349 = vmatmul.mubr.bf16.gmra.mrb[0].mxu0 %v657
        %v1350 = vpop.f32.mrb[0].mxu0
        %v1351 = vadd.f32 %v842, %v1350
        %v1352 = vpop.f32.mrb[0].mxu0
        %v1353 = vpop.f32.mrb[0].mxu0
        %v1354 = vadd.f32 %v842, %v1353
        %v1355 = vpop.f32.mrb[0].mxu0
        %1356 = vmatprep.mubr.bf16.mxu0 %v661
        %1357 = vmatmul.mubr.bf16.gmra.mrb[0].mxu0 %v660
        %v1358 = vpop.f32.mrb[0].mxu0
        %v1359 = vadd.f32 %v842, %v1358
        %v1360 = vpop.f32.mrb[0].mxu0
        %v1361 = vpop.f32.mrb[0].mxu0
        %v1362 = vadd.f32 %v842, %v1361
        %v1363 = vpop.f32.mrb[0].mxu0
        %1364 = vmatprep.mubr.bf16.mxu0 %v664
        %1365 = vmatmul.mubr.bf16.gmra.mrb[0].mxu0 %v663
        %v1366 = vpop.f32.mrb[0].mxu0
        %v1367 = vadd.f32 %v842, %v1366
        %v1368 = vpop.f32.mrb[0].mxu0
        %v1369 = vpop.f32.mrb[0].mxu0
        %v1370 = vadd.f32 %v842, %v1369
        %v1371 = vpop.f32.mrb[0].mxu0
        %1372 = vmatprep.mubr.bf16.mxu0 %v667
        %1373 = vmatmul.mubr.bf16.gmra.mrb[0].mxu0 %v666
        %v1374 = vpop.f32.mrb[0].mxu0
        %v1375 = vadd.f32 %v842, %v1374
        %v1376 = vpop.f32.mrb[0].mxu0
        %v1377 = vpop.f32.mrb[0].mxu0
        %v1378 = vadd.f32 %v842, %v1377
        %v1379 = vpop.f32.mrb[0].mxu0
        %1380 = vmatprep.mubr.bf16.mxu0 %v670
        %1381 = vmatmul.mubr.bf16.gmra.mrb[0].mxu0 %v669
        %v1382 = vpop.f32.mrb[0].mxu0
        %v1383 = vadd.f32 %v842, %v1382
        %v1384 = vpop.f32.mrb[0].mxu0
        %v1385 = vpop.f32.mrb[0].mxu0
        %v1386 = vadd.f32 %v842, %v1385
        %v1387 = vpop.f32.mrb[0].mxu0
        %1388 = vmatprep.mubr.bf16.mxu0 %v673
        %1389 = vmatmul.mubr.bf16.gmra.mrb[0].mxu0 %v672
        %v1390 = vpop.f32.mrb[0].mxu0
        %v1391 = vadd.f32 %v842, %v1390
        %v1392 = vpop.f32.mrb[0].mxu0
        %v1393 = vpop.f32.mrb[0].mxu0
        %v1394 = vadd.f32 %v842, %v1393
        %v1395 = vpop.f32.mrb[0].mxu0
        %1396 = vmatprep.mubr.bf16.mxu0 %v676
        %1397 = vmatmul.mubr.bf16.gmra.mrb[0].mxu0 %v675
        %v1398 = vpop.f32.mrb[0].mxu0
        %v1399 = vadd.f32 %v842, %v1398
        %v1400 = vpop.f32.mrb[0].mxu0
        %v1401 = vpop.f32.mrb[0].mxu0
        %v1402 = vadd.f32 %v842, %v1401
        %v1403 = vpop.f32.mrb[0].mxu0
        %1404 = vmatprep.mubr.bf16.mxu0 %v679
        %1405 = vmatmul.mubr.bf16.gmra.mrb[0].mxu0 %v678
        %v1406 = vpop.f32.mrb[0].mxu0
        %v1407 = vadd.f32 %v842, %v1406
        %v1408 = vpop.f32.mrb[0].mxu0
        %v1409 = vpop.f32.mrb[0].mxu0
        %v1410 = vadd.f32 %v842, %v1409
        %v1411 = vpop.f32.mrb[0].mxu0
        %1412 = vmatprep.mubr.bf16.mxu0 %v682
        %1413 = vmatmul.mubr.bf16.gmra.mrb[0].mxu0 %v681
        %v1414 = vpop.f32.mrb[0].mxu0
        %v1415 = vadd.f32 %v842, %v1414
        %v1416 = vpop.f32.mrb[0].mxu0
        %v1417 = vpop.f32.mrb[0].mxu0
        %v1418 = vadd.f32 %v842, %v1417
        %v1419 = vpop.f32.mrb[0].mxu0
        %1420 = vmatprep.mubr.bf16.mxu0 %v685
        %1421 = vmatmul.mubr.bf16.gmra.mrb[0].mxu0 %v684
        %v1422 = vpop.f32.mrb[0].mxu0
        %v1423 = vadd.f32 %v842, %v1422
        %v1424 = vpop.f32.mrb[0].mxu0
        %v1425 = vpop.f32.mrb[0].mxu0
        %v1426 = vadd.f32 %v842, %v1425
        %v1427 = vpop.f32.mrb[0].mxu0
        %1428 = vmatprep.mubr.bf16.mxu0 %v688
        %1429 = vmatmul.mubr.bf16.gmra.mrb[0].mxu0 %v687
        %v1430 = vpop.f32.mrb[0].mxu0
        %v1431 = vadd.f32 %v842, %v1430
        %v1432 = vpop.f32.mrb[0].mxu0
        %v1433 = vpop.f32.mrb[0].mxu0
        %v1434 = vadd.f32 %v842, %v1433
        %v1435 = vpop.f32.mrb[0].mxu0
        %1436 = vdwg.mxu0
        %1437 = vmatprep.subr.bf16.mxu0 0
        %1438 = vmatpush1.bf16.msra.mxu0 %v1148
        %1439 = vmatprep.subr.bf16.mxu0 0
        %1440 = vmatpush1.bf16.msra.mxu0 %v1149
        %1441 = vmatprep.subr.bf16.mxu0 0
        %1442 = vmatpush1.bf16.msra.mxu0 %v1150
        %1443 = vmatprep.subr.bf16.mxu0 0
        %1444 = vmatpush1.bf16.msra.mxu0 %v1151
        %1445 = vmatprep.subr.bf16.mxu0 0
        %1446 = vmatpush1.bf16.msra.mxu0 %v1152
        %1447 = vmatprep.subr.bf16.mxu0 0
        %1448 = vmatpush1.bf16.msra.mxu0 %v1153
        %1449 = vmatprep.subr.bf16.mxu0 0
        %1450 = vmatpush1.bf16.msra.mxu0 %v1154
        %1451 = vmatprep.subr.bf16.mxu0 0
        %1452 = vmatpush1.bf16.msra.mxu0 %v1155
        %1453 = vmatprep.subr.bf16.mxu0 0
        %1454 = vmatpush1.bf16.msra.mxu0 %v1156
        %1455 = vmatprep.subr.bf16.mxu0 0
        %1456 = vmatpush1.bf16.msra.mxu0 %v1157
        %1457 = vmatprep.subr.bf16.mxu0 0
        %1458 = vmatpush1.bf16.msra.mxu0 %v1158
        %1459 = vmatprep.subr.bf16.mxu0 0
        %1460 = vmatpush1.bf16.msra.mxu0 %v1159
        %1461 = vmatprep.subr.bf16.mxu0 0
        %1462 = vmatpush1.bf16.msra.mxu0 %v1160
        %1463 = vmatprep.subr.bf16.mxu0 0
        %1464 = vmatpush1.bf16.msra.mxu0 %v1161
        %1465 = vmatprep.subr.bf16.mxu0 0
        %1466 = vmatpush1.bf16.msra.mxu0 %v1162
        %1467 = vmatprep.subr.bf16.mxu0 0
        %1468 = vmatpush1.bf16.msra.mxu0 %v1163
        %1469 = vmatprep.mubr.bf16.mxu0 %v645
        %1470 = vmatmul.mubr.bf16.gmra.mrb[0].mxu0 %v644
        %v1471 = vpop.f32.mrb[0].mxu0
        %v1472 = vadd.f32 %v1311, %v1471
        %v1473 = vpop.f32.mrb[0].mxu0
        %v1474 = vpop.f32.mrb[0].mxu0
        %v1475 = vadd.f32 %v1314, %v1474
        %v1476 = vpop.f32.mrb[0].mxu0
        %1477 = vmatprep.mubr.bf16.mxu0 %v648
        %1478 = vmatmul.mubr.bf16.gmra.mrb[0].mxu0 %v647
        %v1479 = vpop.f32.mrb[0].mxu0
        %v1480 = vadd.f32 %v1319, %v1479
        %v1481 = vpop.f32.mrb[0].mxu0
        %v1482 = vpop.f32.mrb[0].mxu0
        %v1483 = vadd.f32 %v1322, %v1482
        %v1484 = vpop.f32.mrb[0].mxu0
        %1485 = vmatprep.mubr.bf16.mxu0 %v651
        %1486 = vmatmul.mubr.bf16.gmra.mrb[0].mxu0 %v650
        %v1487 = vpop.f32.mrb[0].mxu0
        %v1488 = vadd.f32 %v1327, %v1487
        %v1489 = vpop.f32.mrb[0].mxu0
        %v1490 = vpop.f32.mrb[0].mxu0
        %v1491 = vadd.f32 %v1330, %v1490
        %v1492 = vpop.f32.mrb[0].mxu0
        %1493 = vmatprep.mubr.bf16.mxu0 %v654
        %1494 = vmatmul.mubr.bf16.gmra.mrb[0].mxu0 %v653
        %v1495 = vpop.f32.mrb[0].mxu0
        %v1496 = vadd.f32 %v1335, %v1495
        %v1497 = vpop.f32.mrb[0].mxu0
        %v1498 = vpop.f32.mrb[0].mxu0
        %v1499 = vadd.f32 %v1338, %v1498
        %v1500 = vpop.f32.mrb[0].mxu0
        %1501 = vmatprep.mubr.bf16.mxu0 %v657
        %1502 = vmatmul.mubr.bf16.gmra.mrb[0].mxu0 %v656
        %v1503 = vpop.f32.mrb[0].mxu0
        %v1504 = vadd.f32 %v1343, %v1503
        %v1505 = vpop.f32.mrb[0].mxu0
        %v1506 = vpop.f32.mrb[0].mxu0
        %v1507 = vadd.f32 %v1346, %v1506
        %v1508 = vpop.f32.mrb[0].mxu0
        %1509 = vmatprep.mubr.bf16.mxu0 %v660
        %1510 = vmatmul.mubr.bf16.gmra.mrb[0].mxu0 %v659
        %v1511 = vpop.f32.mrb[0].mxu0
        %v1512 = vadd.f32 %v1351, %v1511
        %v1513 = vpop.f32.mrb[0].mxu0
        %v1514 = vpop.f32.mrb[0].mxu0
        %v1515 = vadd.f32 %v1354, %v1514
        %v1516 = vpop.f32.mrb[0].mxu0
        %1517 = vmatprep.mubr.bf16.mxu0 %v663
        %1518 = vmatmul.mubr.bf16.gmra.mrb[0].mxu0 %v662
        %v1519 = vpop.f32.mrb[0].mxu0
        %v1520 = vadd.f32 %v1359, %v1519
        %v1521 = vpop.f32.mrb[0].mxu0
        %v1522 = vpop.f32.mrb[0].mxu0
        %v1523 = vadd.f32 %v1362, %v1522
        %v1524 = vpop.f32.mrb[0].mxu0
        %1525 = vmatprep.mubr.bf16.mxu0 %v666
        %1526 = vmatmul.mubr.bf16.gmra.mrb[0].mxu0 %v665
        %v1527 = vpop.f32.mrb[0].mxu0
        %v1528 = vadd.f32 %v1367, %v1527
        %v1529 = vpop.f32.mrb[0].mxu0
        %v1530 = vpop.f32.mrb[0].mxu0
        %v1531 = vadd.f32 %v1370, %v1530
        %v1532 = vpop.f32.mrb[0].mxu0
        %1533 = vmatprep.mubr.bf16.mxu0 %v669
        %1534 = vmatmul.mubr.bf16.gmra.mrb[0].mxu0 %v668
        %v1535 = vpop.f32.mrb[0].mxu0
        %v1536 = vadd.f32 %v1375, %v1535
        %v1537 = vpop.f32.mrb[0].mxu0
        %v1538 = vpop.f32.mrb[0].mxu0
        %v1539 = vadd.f32 %v1378, %v1538
        %v1540 = vpop.f32.mrb[0].mxu0
        %1541 = vmatprep.mubr.bf16.mxu0 %v672
        %1542 = vmatmul.mubr.bf16.gmra.mrb[0].mxu0 %v671
        %v1543 = vpop.f32.mrb[0].mxu0
        %v1544 = vadd.f32 %v1383, %v1543
        %v1545 = vpop.f32.mrb[0].mxu0
        %v1546 = vpop.f32.mrb[0].mxu0
        %v1547 = vadd.f32 %v1386, %v1546
        %v1548 = vpop.f32.mrb[0].mxu0
        %1549 = vmatprep.mubr.bf16.mxu0 %v675
        %1550 = vmatmul.mubr.bf16.gmra.mrb[0].mxu0 %v674
        %v1551 = vpop.f32.mrb[0].mxu0
        %v1552 = vadd.f32 %v1391, %v1551
        %v1553 = vpop.f32.mrb[0].mxu0
        %v1554 = vpop.f32.mrb[0].mxu0
        %v1555 = vadd.f32 %v1394, %v1554
        %v1556 = vpop.f32.mrb[0].mxu0
        %1557 = vmatprep.mubr.bf16.mxu0 %v678
        %1558 = vmatmul.mubr.bf16.gmra.mrb[0].mxu0 %v677
        %v1559 = vpop.f32.mrb[0].mxu0
        %v1560 = vadd.f32 %v1399, %v1559
        %v1561 = vpop.f32.mrb[0].mxu0
        %v1562 = vpop.f32.mrb[0].mxu0
        %v1563 = vadd.f32 %v1402, %v1562
        %v1564 = vpop.f32.mrb[0].mxu0
        %1565 = vmatprep.mubr.bf16.mxu0 %v681
        %1566 = vmatmul.mubr.bf16.gmra.mrb[0].mxu0 %v680
        %v1567 = vpop.f32.mrb[0].mxu0
        %v1568 = vadd.f32 %v1407, %v1567
        %v1569 = vpop.f32.mrb[0].mxu0
        %v1570 = vpop.f32.mrb[0].mxu0
        %v1571 = vadd.f32 %v1410, %v1570
        %v1572 = vpop.f32.mrb[0].mxu0
        %1573 = vmatprep.mubr.bf16.mxu0 %v684
        %1574 = vmatmul.mubr.bf16.gmra.mrb[0].mxu0 %v683
        %v1575 = vpop.f32.mrb[0].mxu0
        %v1576 = vadd.f32 %v1415, %v1575
        %v1577 = vpop.f32.mrb[0].mxu0
        %v1578 = vpop.f32.mrb[0].mxu0
        %v1579 = vadd.f32 %v1418, %v1578
        %v1580 = vpop.f32.mrb[0].mxu0
        %1581 = vmatprep.mubr.bf16.mxu0 %v687
        %1582 = vmatmul.mubr.bf16.gmra.mrb[0].mxu0 %v686
        %v1583 = vpop.f32.mrb[0].mxu0
        %v1584 = vadd.f32 %v1423, %v1583
        %v1585 = vpop.f32.mrb[0].mxu0
        %v1586 = vpop.f32.mrb[0].mxu0
        %v1587 = vadd.f32 %v1426, %v1586
        %v1588 = vpop.f32.mrb[0].mxu0
        %1589 = vmatprep.mubr.bf16.mxu0 %v690
        %1590 = vmatmul.mubr.bf16.gmra.mrb[0].mxu0 %v689
        %v1591 = vpop.f32.mrb[0].mxu0
        %v1592 = vadd.f32 %v1431, %v1591
        %v1593 = vpop.f32.mrb[0].mxu0
        %v1594 = vpop.f32.mrb[0].mxu0
        %v1595 = vadd.f32 %v1434, %v1594
        %v1596 = vpop.f32.mrb[0].mxu0
        %1597 = vdwg.mxu0
        %1598 = vmatprep.subr.bf16.mxu0 0
        %1599 = vmatpush1.bf16.msra.mxu0 %v1164
        %1600 = vmatprep.subr.bf16.mxu0 0
        %1601 = vmatpush1.bf16.msra.mxu0 %v1165
        %1602 = vmatprep.subr.bf16.mxu0 0
        %1603 = vmatpush1.bf16.msra.mxu0 %v1166
        %1604 = vmatprep.subr.bf16.mxu0 0
        %1605 = vmatpush1.bf16.msra.mxu0 %v1167
        %1606 = vmatprep.subr.bf16.mxu0 0
        %1607 = vmatpush1.bf16.msra.mxu0 %v1168
        %1608 = vmatprep.subr.bf16.mxu0 0
        %1609 = vmatpush1.bf16.msra.mxu0 %v1169
        %1610 = vmatprep.subr.bf16.mxu0 0
        %1611 = vmatpush1.bf16.msra.mxu0 %v1170
        %1612 = vmatprep.subr.bf16.mxu0 0
        %1613 = vmatpush1.bf16.msra.mxu0 %v1171
        %1614 = vmatprep.subr.bf16.mxu0 0
        %1615 = vmatpush1.bf16.msra.mxu0 %v1172
        %1616 = vmatprep.subr.bf16.mxu0 0
        %1617 = vmatpush1.bf16.msra.mxu0 %v1173
        %1618 = vmatprep.subr.bf16.mxu0 0
        %1619 = vmatpush1.bf16.msra.mxu0 %v1174
        %1620 = vmatprep.subr.bf16.mxu0 0
        %1621 = vmatpush1.bf16.msra.mxu0 %v1175
        %1622 = vmatprep.subr.bf16.mxu0 0
        %1623 = vmatpush1.bf16.msra.mxu0 %v1176
        %1624 = vmatprep.subr.bf16.mxu0 0
        %1625 = vmatpush1.bf16.msra.mxu0 %v1177
        %1626 = vmatprep.subr.bf16.mxu0 0
        %1627 = vmatpush1.bf16.msra.mxu0 %v1178
        %1628 = vmatprep.subr.bf16.mxu0 0
        %1629 = vmatpush1.bf16.msra.mxu0 %v1179
        %1630 = vmatprep.mubr.bf16.mxu0 %v647
        %1631 = vmatmul.mubr.bf16.gmra.mrb[0].mxu0 %v646
        %v1632 = vpop.f32.mrb[0].mxu0
        %v1633 = vadd.f32 %v1472, %v1632
        %v1634 = vpop.f32.mrb[0].mxu0
        %v1635 = vpop.f32.mrb[0].mxu0
        %v1636 = vadd.f32 %v1475, %v1635
        %v1637 = vpop.f32.mrb[0].mxu0
        %1638 = vmatprep.mubr.bf16.mxu0 %v650
        %1639 = vmatmul.mubr.bf16.gmra.mrb[0].mxu0 %v649
        %v1640 = vpop.f32.mrb[0].mxu0
        %v1641 = vadd.f32 %v1480, %v1640
        %v1642 = vpop.f32.mrb[0].mxu0
        %v1643 = vpop.f32.mrb[0].mxu0
        %v1644 = vadd.f32 %v1483, %v1643
        %v1645 = vpop.f32.mrb[0].mxu0
        %1646 = vmatprep.mubr.bf16.mxu0 %v653
        %1647 = vmatmul.mubr.bf16.gmra.mrb[0].mxu0 %v652
        %v1648 = vpop.f32.mrb[0].mxu0
        %v1649 = vadd.f32 %v1488, %v1648
        %v1650 = vpop.f32.mrb[0].mxu0
        %v1651 = vpop.f32.mrb[0].mxu0
        %v1652 = vadd.f32 %v1491, %v1651
        %v1653 = vpop.f32.mrb[0].mxu0
        %1654 = vmatprep.mubr.bf16.mxu0 %v656
        %1655 = vmatmul.mubr.bf16.gmra.mrb[0].mxu0 %v655
        %v1656 = vpop.f32.mrb[0].mxu0
        %v1657 = vadd.f32 %v1496, %v1656
        %v1658 = vpop.f32.mrb[0].mxu0
        %v1659 = vpop.f32.mrb[0].mxu0
        %v1660 = vadd.f32 %v1499, %v1659
        %v1661 = vpop.f32.mrb[0].mxu0
        %1662 = vmatprep.mubr.bf16.mxu0 %v659
        %1663 = vmatmul.mubr.bf16.gmra.mrb[0].mxu0 %v658
        %v1664 = vpop.f32.mrb[0].mxu0
        %v1665 = vadd.f32 %v1504, %v1664
        %v1666 = vpop.f32.mrb[0].mxu0
        %v1667 = vpop.f32.mrb[0].mxu0
        %v1668 = vadd.f32 %v1507, %v1667
        %v1669 = vpop.f32.mrb[0].mxu0
        %1670 = vmatprep.mubr.bf16.mxu0 %v662
        %1671 = vmatmul.mubr.bf16.gmra.mrb[0].mxu0 %v661
        %v1672 = vpop.f32.mrb[0].mxu0
        %v1673 = vadd.f32 %v1512, %v1672
        %v1674 = vpop.f32.mrb[0].mxu0
        %v1675 = vpop.f32.mrb[0].mxu0
        %v1676 = vadd.f32 %v1515, %v1675
        %v1677 = vpop.f32.mrb[0].mxu0
        %1678 = vmatprep.mubr.bf16.mxu0 %v665
        %1679 = vmatmul.mubr.bf16.gmra.mrb[0].mxu0 %v664
        %v1680 = vpop.f32.mrb[0].mxu0
        %v1681 = vadd.f32 %v1520, %v1680
        %v1682 = vpop.f32.mrb[0].mxu0
        %v1683 = vpop.f32.mrb[0].mxu0
        %v1684 = vadd.f32 %v1523, %v1683
        %v1685 = vpop.f32.mrb[0].mxu0
        %1686 = vmatprep.mubr.bf16.mxu0 %v668
        %1687 = vmatmul.mubr.bf16.gmra.mrb[0].mxu0 %v667
        %v1688 = vpop.f32.mrb[0].mxu0
        %v1689 = vadd.f32 %v1528, %v1688
        %v1690 = vpop.f32.mrb[0].mxu0
        %v1691 = vpop.f32.mrb[0].mxu0
        %v1692 = vadd.f32 %v1531, %v1691
        %v1693 = vpop.f32.mrb[0].mxu0
        %1694 = vmatprep.mubr.bf16.mxu0 %v671
        %1695 = vmatmul.mubr.bf16.gmra.mrb[0].mxu0 %v670
        %v1696 = vpop.f32.mrb[0].mxu0
        %v1697 = vadd.f32 %v1536, %v1696
        %v1698 = vpop.f32.mrb[0].mxu0
        %v1699 = vpop.f32.mrb[0].mxu0
        %v1700 = vadd.f32 %v1539, %v1699
        %v1701 = vpop.f32.mrb[0].mxu0
        %1702 = vmatprep.mubr.bf16.mxu0 %v674
        %1703 = vmatmul.mubr.bf16.gmra.mrb[0].mxu0 %v673
        %v1704 = vpop.f32.mrb[0].mxu0
        %v1705 = vadd.f32 %v1544, %v1704
        %v1706 = vpop.f32.mrb[0].mxu0
        %v1707 = vpop.f32.mrb[0].mxu0
        %v1708 = vadd.f32 %v1547, %v1707
        %v1709 = vpop.f32.mrb[0].mxu0
        %1710 = vmatprep.mubr.bf16.mxu0 %v677
        %1711 = vmatmul.mubr.bf16.gmra.mrb[0].mxu0 %v676
        %v1712 = vpop.f32.mrb[0].mxu0
        %v1713 = vadd.f32 %v1552, %v1712
        %v1714 = vpop.f32.mrb[0].mxu0
        %v1715 = vpop.f32.mrb[0].mxu0
        %v1716 = vadd.f32 %v1555, %v1715
        %v1717 = vpop.f32.mrb[0].mxu0
        %1718 = vmatprep.mubr.bf16.mxu0 %v680
        %1719 = vmatmul.mubr.bf16.gmra.mrb[0].mxu0 %v679
        %v1720 = vpop.f32.mrb[0].mxu0
        %v1721 = vadd.f32 %v1560, %v1720
        %v1722 = vpop.f32.mrb[0].mxu0
        %v1723 = vpop.f32.mrb[0].mxu0
        %v1724 = vadd.f32 %v1563, %v1723
        %v1725 = vpop.f32.mrb[0].mxu0
        %1726 = vmatprep.mubr.bf16.mxu0 %v683
        %1727 = vmatmul.mubr.bf16.gmra.mrb[0].mxu0 %v682
        %v1728 = vpop.f32.mrb[0].mxu0
        %v1729 = vadd.f32 %v1568, %v1728
        %v1730 = vpop.f32.mrb[0].mxu0
        %v1731 = vpop.f32.mrb[0].mxu0
        %v1732 = vadd.f32 %v1571, %v1731
        %v1733 = vpop.f32.mrb[0].mxu0
        %1734 = vmatprep.mubr.bf16.mxu0 %v686
        %1735 = vmatmul.mubr.bf16.gmra.mrb[0].mxu0 %v685
        %v1736 = vpop.f32.mrb[0].mxu0
        %v1737 = vadd.f32 %v1576, %v1736
        %v1738 = vpop.f32.mrb[0].mxu0
        %v1739 = vpop.f32.mrb[0].mxu0
        %v1740 = vadd.f32 %v1579, %v1739
        %v1741 = vpop.f32.mrb[0].mxu0
        %1742 = vmatprep.mubr.bf16.mxu0 %v689
        %1743 = vmatmul.mubr.bf16.gmra.mrb[0].mxu0 %v688
        %v1744 = vpop.f32.mrb[0].mxu0
        %v1745 = vadd.f32 %v1584, %v1744
        %v1746 = vpop.f32.mrb[0].mxu0
        %v1747 = vpop.f32.mrb[0].mxu0
        %v1748 = vadd.f32 %v1587, %v1747
        %v1749 = vpop.f32.mrb[0].mxu0
        %1750 = vmatprep.mubr.bf16.mxu0 %v692
        %1751 = vmatmul.mubr.bf16.gmra.mrb[0].mxu0 %v691
        %v1752 = vpop.f32.mrb[0].mxu0
        %v1753 = vadd.f32 %v1592, %v1752
        %v1754 = vpop.f32.mrb[0].mxu0
        %v1755 = vpop.f32.mrb[0].mxu0
        %v1756 = vadd.f32 %v1595, %v1755
        %v1757 = vpop.f32.mrb[0].mxu0
        %1758 = vdwg.mxu0
        %1759 = vmatprep.subr.bf16.mxu0 0
        %1760 = vmatpush1.bf16.msra.mxu0 %v1180
        %1761 = vmatprep.subr.bf16.mxu0 0
        %1762 = vmatpush1.bf16.msra.mxu0 %v1181
        %1763 = vmatprep.subr.bf16.mxu0 0
        %1764 = vmatpush1.bf16.msra.mxu0 %v1182
        %1765 = vmatprep.subr.bf16.mxu0 0
        %1766 = vmatpush1.bf16.msra.mxu0 %v1183
        %1767 = vmatprep.subr.bf16.mxu0 0
        %1768 = vmatpush1.bf16.msra.mxu0 %v1184
        %1769 = vmatprep.subr.bf16.mxu0 0
        %1770 = vmatpush1.bf16.msra.mxu0 %v1185
        %1771 = vmatprep.subr.bf16.mxu0 0
        %1772 = vmatpush1.bf16.msra.mxu0 %v1186
        %1773 = vmatprep.subr.bf16.mxu0 0
        %1774 = vmatpush1.bf16.msra.mxu0 %v1187
        %1775 = vmatprep.subr.bf16.mxu0 0
        %1776 = vmatpush1.bf16.msra.mxu0 %v1188
        %1777 = vmatprep.subr.bf16.mxu0 0
        %1778 = vmatpush1.bf16.msra.mxu0 %v1189
        %1779 = vmatprep.subr.bf16.mxu0 0
        %1780 = vmatpush1.bf16.msra.mxu0 %v1190
        %1781 = vmatprep.subr.bf16.mxu0 0
        %1782 = vmatpush1.bf16.msra.mxu0 %v1191
        %1783 = vmatprep.subr.bf16.mxu0 0
        %1784 = vmatpush1.bf16.msra.mxu0 %v1192
        %1785 = vmatprep.subr.bf16.mxu0 0
        %1786 = vmatpush1.bf16.msra.mxu0 %v1193
        %1787 = vmatprep.subr.bf16.mxu0 0
        %1788 = vmatpush1.bf16.msra.mxu0 %v1194
        %1789 = vmatprep.subr.bf16.mxu0 0
        %1790 = vmatpush1.bf16.msra.mxu0 %v1195
        %1791 = vmatprep.mubr.bf16.mxu0 %v649
        %1792 = vmatmul.mubr.bf16.gmra.mrb[0].mxu0 %v648
        %v1793 = vpop.f32.mrb[0].mxu0
        %v1794 = vadd.f32 %v1633, %v1793
        %v1795 = vpop.f32.mrb[0].mxu0
        %v1796 = vpop.f32.mrb[0].mxu0
        %v1797 = vadd.f32 %v1636, %v1796
        %v1798 = vpop.f32.mrb[0].mxu0
        %1799 = vmatprep.mubr.bf16.mxu0 %v652
        %1800 = vmatmul.mubr.bf16.gmra.mrb[0].mxu0 %v651
        %v1801 = vpop.f32.mrb[0].mxu0
        %v1802 = vadd.f32 %v1641, %v1801
        %v1803 = vpop.f32.mrb[0].mxu0
        %v1804 = vpop.f32.mrb[0].mxu0
        %v1805 = vadd.f32 %v1644, %v1804
        %v1806 = vpop.f32.mrb[0].mxu0
        %1807 = vmatprep.mubr.bf16.mxu0 %v655
        %1808 = vmatmul.mubr.bf16.gmra.mrb[0].mxu0 %v654
        %v1809 = vpop.f32.mrb[0].mxu0
        %v1810 = vadd.f32 %v1649, %v1809
        %v1811 = vpop.f32.mrb[0].mxu0
        %v1812 = vpop.f32.mrb[0].mxu0
        %v1813 = vadd.f32 %v1652, %v1812
        %v1814 = vpop.f32.mrb[0].mxu0
        %1815 = vmatprep.mubr.bf16.mxu0 %v658
        %1816 = vmatmul.mubr.bf16.gmra.mrb[0].mxu0 %v657
        %v1817 = vpop.f32.mrb[0].mxu0
        %v1818 = vadd.f32 %v1657, %v1817
        %v1819 = vpop.f32.mrb[0].mxu0
        %v1820 = vpop.f32.mrb[0].mxu0
        %v1821 = vadd.f32 %v1660, %v1820
        %v1822 = vpop.f32.mrb[0].mxu0
        %1823 = vmatprep.mubr.bf16.mxu0 %v661
        %1824 = vmatmul.mubr.bf16.gmra.mrb[0].mxu0 %v660
        %v1825 = vpop.f32.mrb[0].mxu0
        %v1826 = vadd.f32 %v1665, %v1825
        %v1827 = vpop.f32.mrb[0].mxu0
        %v1828 = vpop.f32.mrb[0].mxu0
        %v1829 = vadd.f32 %v1668, %v1828
        %v1830 = vpop.f32.mrb[0].mxu0
        %1831 = vmatprep.mubr.bf16.mxu0 %v664
        %1832 = vmatmul.mubr.bf16.gmra.mrb[0].mxu0 %v663
        %v1833 = vpop.f32.mrb[0].mxu0
        %v1834 = vadd.f32 %v1673, %v1833
        %v1835 = vpop.f32.mrb[0].mxu0
        %v1836 = vpop.f32.mrb[0].mxu0
        %v1837 = vadd.f32 %v1676, %v1836
        %v1838 = vpop.f32.mrb[0].mxu0
        %1839 = vmatprep.mubr.bf16.mxu0 %v667
        %1840 = vmatmul.mubr.bf16.gmra.mrb[0].mxu0 %v666
        %v1841 = vpop.f32.mrb[0].mxu0
        %v1842 = vadd.f32 %v1681, %v1841
        %v1843 = vpop.f32.mrb[0].mxu0
        %v1844 = vpop.f32.mrb[0].mxu0
        %v1845 = vadd.f32 %v1684, %v1844
        %v1846 = vpop.f32.mrb[0].mxu0
        %1847 = vmatprep.mubr.bf16.mxu0 %v670
        %1848 = vmatmul.mubr.bf16.gmra.mrb[0].mxu0 %v669
        %v1849 = vpop.f32.mrb[0].mxu0
        %v1850 = vadd.f32 %v1689, %v1849
        %v1851 = vpop.f32.mrb[0].mxu0
        %v1852 = vpop.f32.mrb[0].mxu0
        %v1853 = vadd.f32 %v1692, %v1852
        %v1854 = vpop.f32.mrb[0].mxu0
        %1855 = vmatprep.mubr.bf16.mxu0 %v673
        %1856 = vmatmul.mubr.bf16.gmra.mrb[0].mxu0 %v672
        %v1857 = vpop.f32.mrb[0].mxu0
        %v1858 = vadd.f32 %v1697, %v1857
        %v1859 = vpop.f32.mrb[0].mxu0
        %v1860 = vpop.f32.mrb[0].mxu0
        %v1861 = vadd.f32 %v1700, %v1860
        %v1862 = vpop.f32.mrb[0].mxu0
        %1863 = vmatprep.mubr.bf16.mxu0 %v676
        %1864 = vmatmul.mubr.bf16.gmra.mrb[0].mxu0 %v675
        %v1865 = vpop.f32.mrb[0].mxu0
        %v1866 = vadd.f32 %v1705, %v1865
        %v1867 = vpop.f32.mrb[0].mxu0
        %v1868 = vpop.f32.mrb[0].mxu0
        %v1869 = vadd.f32 %v1708, %v1868
        %v1870 = vpop.f32.mrb[0].mxu0
        %1871 = vmatprep.mubr.bf16.mxu0 %v679
        %1872 = vmatmul.mubr.bf16.gmra.mrb[0].mxu0 %v678
        %v1873 = vpop.f32.mrb[0].mxu0
        %v1874 = vadd.f32 %v1713, %v1873
        %v1875 = vpop.f32.mrb[0].mxu0
        %v1876 = vpop.f32.mrb[0].mxu0
        %v1877 = vadd.f32 %v1716, %v1876
        %v1878 = vpop.f32.mrb[0].mxu0
        %1879 = vmatprep.mubr.bf16.mxu0 %v682
        %1880 = vmatmul.mubr.bf16.gmra.mrb[0].mxu0 %v681
        %v1881 = vpop.f32.mrb[0].mxu0
        %v1882 = vadd.f32 %v1721, %v1881
        %v1883 = vpop.f32.mrb[0].mxu0
        %v1884 = vpop.f32.mrb[0].mxu0
        %v1885 = vadd.f32 %v1724, %v1884
        %v1886 = vpop.f32.mrb[0].mxu0
        %1887 = vmatprep.mubr.bf16.mxu0 %v685
        %1888 = vmatmul.mubr.bf16.gmra.mrb[0].mxu0 %v684
        %v1889 = vpop.f32.mrb[0].mxu0
        %v1890 = vadd.f32 %v1729, %v1889
        %v1891 = vpop.f32.mrb[0].mxu0
        %v1892 = vpop.f32.mrb[0].mxu0
        %v1893 = vadd.f32 %v1732, %v1892
        %v1894 = vpop.f32.mrb[0].mxu0
        %1895 = vmatprep.mubr.bf16.mxu0 %v688
        %1896 = vmatmul.mubr.bf16.gmra.mrb[0].mxu0 %v687
        %v1897 = vpop.f32.mrb[0].mxu0
        %v1898 = vadd.f32 %v1737, %v1897
        %v1899 = vpop.f32.mrb[0].mxu0
        %v1900 = vpop.f32.mrb[0].mxu0
        %v1901 = vadd.f32 %v1740, %v1900
        %v1902 = vpop.f32.mrb[0].mxu0
        %1903 = vmatprep.mubr.bf16.mxu0 %v691
        %1904 = vmatmul.mubr.bf16.gmra.mrb[0].mxu0 %v690
        %v1905 = vpop.f32.mrb[0].mxu0
        %v1906 = vadd.f32 %v1745, %v1905
        %v1907 = vpop.f32.mrb[0].mxu0
        %v1908 = vpop.f32.mrb[0].mxu0
        %v1909 = vadd.f32 %v1748, %v1908
        %v1910 = vpop.f32.mrb[0].mxu0
        %1911 = vmatprep.mubr.bf16.mxu0 %v644
        %1912 = vmatmul.mubr.bf16.gmra.mrb[0].mxu0 %v644
        %v1913 = vpop.f32.mrb[0].mxu0
        %v1914 = vadd.f32 %v1753, %v1913
        %v1915 = vpop.f32.mrb[0].mxu0
        %v1916 = vpop.f32.mrb[0].mxu0
        %v1917 = vadd.f32 %v1756, %v1916
        %v1918 = vpop.f32.mrb[0].mxu0
        %1919 = vdwg.mxu0
        %1920 = vmatprep.subr.bf16.mxu0 0
        %1921 = vmatpush1.bf16.msra.mxu0 %v1196
        %1922 = vmatprep.subr.bf16.mxu0 0
        %1923 = vmatpush1.bf16.msra.mxu0 %v1197
        %1924 = vmatprep.subr.bf16.mxu0 0
        %1925 = vmatpush1.bf16.msra.mxu0 %v1198
        %1926 = vmatprep.subr.bf16.mxu0 0
        %1927 = vmatpush1.bf16.msra.mxu0 %v1199
        %1928 = vmatprep.subr.bf16.mxu0 0
        %1929 = vmatpush1.bf16.msra.mxu0 %v1200
        %1930 = vmatprep.subr.bf16.mxu0 0
        %1931 = vmatpush1.bf16.msra.mxu0 %v1201
        %1932 = vmatprep.subr.bf16.mxu0 0
        %1933 = vmatpush1.bf16.msra.mxu0 %v1202
        %1934 = vmatprep.subr.bf16.mxu0 0
        %1935 = vmatpush1.bf16.msra.mxu0 %v1203
        %1936 = vmatprep.subr.bf16.mxu0 0
        %1937 = vmatpush1.bf16.msra.mxu0 0
        %1938 = vmatprep.subr.bf16.mxu0 0
        %1939 = vmatpush1.bf16.msra.mxu0 0
        %1940 = vmatprep.subr.bf16.mxu0 0
        %1941 = vmatpush1.bf16.msra.mxu0 0
        %1942 = vmatprep.subr.bf16.mxu0 0
        %1943 = vmatpush1.bf16.msra.mxu0 0
        %1944 = vmatprep.subr.bf16.mxu0 0
        %1945 = vmatpush1.bf16.msra.mxu0 0
        %1946 = vmatprep.subr.bf16.mxu0 0
        %1947 = vmatpush1.bf16.msra.mxu0 0
        %1948 = vmatprep.subr.bf16.mxu0 0
        %1949 = vmatpush1.bf16.msra.mxu0 0
        %1950 = vmatprep.subr.bf16.mxu0 0
        %1951 = vmatpush1.bf16.msra.mxu0 0
        %1952 = vmatprep.mubr.bf16.mxu0 0
        %1953 = vmatmul.mubr.bf16.gmra.mrb[0].mxu0 %v650
        %v1954 = vpop.f32.mrb[0].mxu0
        %v1955 = vadd.f32 %v1794, %v1954
        %v1956 = vpop.f32.mrb[0].mxu0
        %v1957 = vpop.f32.mrb[0].mxu0
        %v1958 = vadd.f32 %v1797, %v1957
        %v1959 = vpop.f32.mrb[0].mxu0
        %1960 = vmatprep.mubr.bf16.mxu0 0
        %1961 = vmatmul.mubr.bf16.gmra.mrb[0].mxu0 %v653
        %v1962 = vpop.f32.mrb[0].mxu0
        %v1963 = vadd.f32 %v1802, %v1962
        %v1964 = vpop.f32.mrb[0].mxu0
        %v1965 = vpop.f32.mrb[0].mxu0
        %v1966 = vadd.f32 %v1805, %v1965
        %v1967 = vpop.f32.mrb[0].mxu0
        %1968 = vmatprep.mubr.bf16.mxu0 0
        %1969 = vmatmul.mubr.bf16.gmra.mrb[0].mxu0 %v656
        %v1970 = vpop.f32.mrb[0].mxu0
        %v1971 = vadd.f32 %v1810, %v1970
        %v1972 = vpop.f32.mrb[0].mxu0
        %v1973 = vpop.f32.mrb[0].mxu0
        %v1974 = vadd.f32 %v1813, %v1973
        %v1975 = vpop.f32.mrb[0].mxu0
        %1976 = vmatprep.mubr.bf16.mxu0 0
        %1977 = vmatmul.mubr.bf16.gmra.mrb[0].mxu0 %v659
        %v1978 = vpop.f32.mrb[0].mxu0
        %v1979 = vadd.f32 %v1818, %v1978
        %v1980 = vpop.f32.mrb[0].mxu0
        %v1981 = vpop.f32.mrb[0].mxu0
        %v1982 = vadd.f32 %v1821, %v1981
        %v1983 = vpop.f32.mrb[0].mxu0
        %1984 = vmatprep.mubr.bf16.mxu0 0
        %1985 = vmatmul.mubr.bf16.gmra.mrb[0].mxu0 %v662
        %v1986 = vpop.f32.mrb[0].mxu0
        %v1987 = vadd.f32 %v1826, %v1986
        %v1988 = vpop.f32.mrb[0].mxu0
        %v1989 = vpop.f32.mrb[0].mxu0
        %v1990 = vadd.f32 %v1829, %v1989
        %v1991 = vpop.f32.mrb[0].mxu0
        %1992 = vmatprep.mubr.bf16.mxu0 0
        %1993 = vmatmul.mubr.bf16.gmra.mrb[0].mxu0 %v665
        %v1994 = vpop.f32.mrb[0].mxu0
        %v1995 = vadd.f32 %v1834, %v1994
        %v1996 = vpop.f32.mrb[0].mxu0
        %v1997 = vpop.f32.mrb[0].mxu0
        %v1998 = vadd.f32 %v1837, %v1997
        %v1999 = vpop.f32.mrb[0].mxu0
        %2000 = vmatprep.mubr.bf16.mxu0 0
        %2001 = vmatmul.mubr.bf16.gmra.mrb[0].mxu0 %v668
        %v2002 = vpop.f32.mrb[0].mxu0
        %v2003 = vadd.f32 %v1842, %v2002
        %v2004 = vpop.f32.mrb[0].mxu0
        %v2005 = vpop.f32.mrb[0].mxu0
        %v2006 = vadd.f32 %v1845, %v2005
        %v2007 = vpop.f32.mrb[0].mxu0
        %2008 = vmatprep.mubr.bf16.mxu0 0
        %2009 = vmatmul.mubr.bf16.gmra.mrb[0].mxu0 %v671
        %v2010 = vpop.f32.mrb[0].mxu0
        %v2011 = vadd.f32 %v1850, %v2010
        %v2012 = vpop.f32.mrb[0].mxu0
        %v2013 = vpop.f32.mrb[0].mxu0
        %v2014 = vadd.f32 %v1853, %v2013
        %v2015 = vpop.f32.mrb[0].mxu0
        %2016 = vmatprep.mubr.bf16.mxu0 0
        %2017 = vmatmul.mubr.bf16.gmra.mrb[0].mxu0 %v674
        %v2018 = vpop.f32.mrb[0].mxu0
        %v2019 = vadd.f32 %v1858, %v2018
        %v2020 = vpop.f32.mrb[0].mxu0
        %v2021 = vpop.f32.mrb[0].mxu0
        %v2022 = vadd.f32 %v1861, %v2021
        %v2023 = vpop.f32.mrb[0].mxu0
        %2024 = vmatprep.mubr.bf16.mxu0 0
        %2025 = vmatmul.mubr.bf16.gmra.mrb[0].mxu0 %v677
        %v2026 = vpop.f32.mrb[0].mxu0
        %v2027 = vadd.f32 %v1866, %v2026
        %v2028 = vpop.f32.mrb[0].mxu0
        %v2029 = vpop.f32.mrb[0].mxu0
        %v2030 = vadd.f32 %v1869, %v2029
        %v2031 = vpop.f32.mrb[0].mxu0
        %2032 = vmatprep.mubr.bf16.mxu0 0
        %2033 = vmatmul.mubr.bf16.gmra.mrb[0].mxu0 %v680
        %v2034 = vpop.f32.mrb[0].mxu0
        %v2035 = vadd.f32 %v1874, %v2034
        %v2036 = vpop.f32.mrb[0].mxu0
        %v2037 = vpop.f32.mrb[0].mxu0
        %v2038 = vadd.f32 %v1877, %v2037
        %v2039 = vpop.f32.mrb[0].mxu0
        %2040 = vmatprep.mubr.bf16.mxu0 0
        %2041 = vmatmul.mubr.bf16.gmra.mrb[0].mxu0 %v683
        %v2042 = vpop.f32.mrb[0].mxu0
        %v2043 = vadd.f32 %v1882, %v2042
        %v2044 = vpop.f32.mrb[0].mxu0
        %v2045 = vpop.f32.mrb[0].mxu0
        %v2046 = vadd.f32 %v1885, %v2045
        %v2047 = vpop.f32.mrb[0].mxu0
        %2048 = vmatprep.mubr.bf16.mxu0 0
        %2049 = vmatmul.mubr.bf16.gmra.mrb[0].mxu0 %v686
        %v2050 = vpop.f32.mrb[0].mxu0
        %v2051 = vadd.f32 %v1890, %v2050
        %v2052 = vpop.f32.mrb[0].mxu0
        %v2053 = vpop.f32.mrb[0].mxu0
        %v2054 = vadd.f32 %v1893, %v2053
        %v2055 = vpop.f32.mrb[0].mxu0
        %2056 = vmatprep.mubr.bf16.mxu0 0
        %2057 = vmatmul.mubr.bf16.gmra.mrb[0].mxu0 %v689
        %v2058 = vpop.f32.mrb[0].mxu0
        %v2059 = vadd.f32 %v1898, %v2058
        %v2060 = vpop.f32.mrb[0].mxu0
        %v2061 = vpop.f32.mrb[0].mxu0
        %v2062 = vadd.f32 %v1901, %v2061
        %v2063 = vpop.f32.mrb[0].mxu0
        %2064 = vmatprep.mubr.bf16.mxu0 0
        %2065 = vmatmul.mubr.bf16.gmra.mrb[0].mxu0 %v692
        %v2066 = vpop.f32.mrb[0].mxu0
        %v2067 = vadd.f32 %v1906, %v2066
        %v2068 = vpop.f32.mrb[0].mxu0
        %v2069 = vpop.f32.mrb[0].mxu0
        %v2070 = vadd.f32 %v1909, %v2069
        %v2071 = vpop.f32.mrb[0].mxu0
        %2072 = vmatprep.mubr.bf16.mxu0 0
        %2073 = vmatmul.mubr.bf16.gmra.mrb[0].mxu0 %v644
        %v2074 = vpop.f32.mrb[0].mxu0
        %v2075 = vadd.f32 %v1914, %v2074
        %v2076 = vpop.f32.mrb[0].mxu0
        %v2077 = vpop.f32.mrb[0].mxu0
        %v2078 = vadd.f32 %v1917, %v2077
        %v2079 = vpop.f32.mrb[0].mxu0
        %2080 = vdwg.mxu0
        %2081 = vst [vmem:[%s299] sm:$0xff] %v1955
        %2082 = vst [vmem:[%s299 + $0x8] sm:$0xff] %v1958
        %2083 = vst [vmem:[%s299 + $0x10] sm:$0xff] %v1963
        %2084 = vst [vmem:[%s299 + $0x18] sm:$0xff] %v1966
        %2085 = vst [vmem:[%s299 + $0x20] sm:$0xff] %v1971
        %2086 = vst [vmem:[%s299 + $0x28] sm:$0xff] %v1974
        %2087 = vst [vmem:[%s299 + $0x30] sm:$0xff] %v1979
        %2088 = vst [vmem:[%s299 + $0x38] sm:$0xff] %v1982
        %2089 = vst [vmem:[%s299 + $0x40] sm:$0xff] %v1987
        %2090 = vst [vmem:[%s299 + $0x48] sm:$0xff] %v1990
        %2091 = vst [vmem:[%s299 + $0x50] sm:$0xff] %v1995
        %2092 = vst [vmem:[%s299 + $0x58] sm:$0xff] %v1998
        %2093 = vst [vmem:[%s299 + $0x60] sm:$0xff] %v2003
        %2094 = vst [vmem:[%s299 + $0x68] sm:$0xff] %v2006
        %2095 = vst [vmem:[%s299 + $0x70] sm:$0xff] %v2011
        %2096 = vst [vmem:[%s299 + $0x78] sm:$0xff] %v2014
        %2097 = vst [vmem:[%s299 + $0x80] sm:$0xff] %v2019
        %2098 = vst [vmem:[%s299 + $0x88] sm:$0xff] %v2022
        %2099 = vst [vmem:[%s299 + $0x90] sm:$0xff] %v2027
        %2100 = vst [vmem:[%s299 + $0x98] sm:$0xff] %v2030
        %2101 = vst [vmem:[%s299 + $0xa0] sm:$0xff] %v2035
        %2102 = vst [vmem:[%s299 + $0xa8] sm:$0xff] %v2038
        %2103 = vst [vmem:[%s299 + $0xb0] sm:$0xff] %v2043
        %2104 = vst [vmem:[%s299 + $0xb8] sm:$0xff] %v2046
        %2105 = vst [vmem:[%s299 + $0xc0] sm:$0xff] %v2051
        %2106 = vst [vmem:[%s299 + $0xc8] sm:$0xff] %v2054
        %2107 = vst [vmem:[%s299 + $0xd0] sm:$0xff] %v2059
        %2108 = vst [vmem:[%s299 + $0xd8] sm:$0xff] %v2062
        %2109 = vst [vmem:[%s299 + $0xe0] sm:$0xff] %v2067
        %2110 = vst [vmem:[%s299 + $0xe8] sm:$0xff] %v2070
        %2111 = vst [vmem:[%s299 + $0xf0] sm:$0xff] %v2075
        %2112 = vst [vmem:[%s299 + $0xf8] sm:$0xff] %v2078
        %v2113 = vadd.f32 %v1955, %v1958
        %v2114 = vadd.f32 %v2113, %v1963
        %v2115 = vadd.f32 %v2114, %v1966
        %v2116 = vadd.f32 %v2115, %v1971
        %v2117 = vadd.f32 %v2116, %v1974
        %v2118 = vadd.f32 %v2117, %v1979
        %v2119 = vadd.f32 %v2118, %v1982
        %v2120 = vadd.f32 %v2119, %v1987
        %v2121 = vadd.f32 %v2120, %v1990
        %v2122 = vadd.f32 %v2121, %v1995
        %v2123 = vadd.f32 %v2122, %v1998
        %v2124 = vadd.f32 %v2123, %v2003
        %v2125 = vadd.f32 %v2124, %v2006
        %v2126 = vadd.f32 %v2125, %v2011
        %v2127 = vadd.f32 %v2126, %v2014
        %v2128 = vadd.f32 %v2127, %v2019
        %v2129 = vadd.f32 %v2128, %v2022
        %v2130 = vadd.f32 %v2129, %v2027
        %v2131 = vadd.f32 %v2130, %v2030
        %v2132 = vadd.f32 %v2131, %v2035
        %v2133 = vadd.f32 %v2132, %v2038
        %v2134 = vadd.f32 %v2133, %v2043
        %v2135 = vadd.f32 %v2134, %v2046
        %v2136 = vadd.f32 %v2135, %v2051
        %v2137 = vadd.f32 %v2136, %v2054
        %v2138 = vadd.f32 %v2137, %v2059
        %v2139 = vadd.f32 %v2138, %v2062
        %v2140 = vadd.f32 %v2139, %v2067
        %v2141 = vadd.f32 %v2140, %v2070
        %v2142 = vadd.f32 %v2141, %v2075
        %v2143 = vadd.f32 %v2142, %v2078
        %2144 = vst [vmem:[%s282] sm:$0xff] %v2143
        %v2145 = vmul.f32 %v1955, %v1955
        %v2146 = vmul.f32 %v1958, %v1958
        %v2147 = vmul.f32 %v1963, %v1963
        %v2148 = vmul.f32 %v1966, %v1966
        %v2149 = vmul.f32 %v1971, %v1971
        %v2150 = vmul.f32 %v1974, %v1974
        %v2151 = vmul.f32 %v1979, %v1979
        %v2152 = vmul.f32 %v1982, %v1982
        %v2153 = vmul.f32 %v1987, %v1987
        %v2154 = vmul.f32 %v1990, %v1990
        %v2155 = vmul.f32 %v1995, %v1995
        %v2156 = vmul.f32 %v1998, %v1998
        %v2157 = vmul.f32 %v2003, %v2003
        %v2158 = vmul.f32 %v2006, %v2006
        %v2159 = vmul.f32 %v2011, %v2011
        %v2160 = vmul.f32 %v2014, %v2014
        %v2161 = vmul.f32 %v2019, %v2019
        %v2162 = vmul.f32 %v2022, %v2022
        %v2163 = vmul.f32 %v2027, %v2027
        %v2164 = vmul.f32 %v2030, %v2030
        %v2165 = vmul.f32 %v2035, %v2035
        %v2166 = vmul.f32 %v2038, %v2038
        %v2167 = vmul.f32 %v2043, %v2043
        %v2168 = vmul.f32 %v2046, %v2046
        %v2169 = vmul.f32 %v2051, %v2051
        %v2170 = vmul.f32 %v2054, %v2054
        %v2171 = vmul.f32 %v2059, %v2059
        %v2172 = vmul.f32 %v2062, %v2062
        %v2173 = vmul.f32 %v2067, %v2067
        %v2174 = vmul.f32 %v2070, %v2070
        %v2175 = vmul.f32 %v2075, %v2075
        %v2176 = vmul.f32 %v2078, %v2078
        %v2177 = vadd.f32 %v2145, %v2146
        %v2178 = vadd.f32 %v2177, %v2147
        %v2179 = vadd.f32 %v2178, %v2148
        %v2180 = vadd.f32 %v2179, %v2149
        %v2181 = vadd.f32 %v2180, %v2150
        %v2182 = vadd.f32 %v2181, %v2151
        %v2183 = vadd.f32 %v2182, %v2152
        %v2184 = vadd.f32 %v2183, %v2153
        %v2185 = vadd.f32 %v2184, %v2154
        %v2186 = vadd.f32 %v2185, %v2155
        %v2187 = vadd.f32 %v2186, %v2156
        %v2188 = vadd.f32 %v2187, %v2157
        %v2189 = vadd.f32 %v2188, %v2158
        %v2190 = vadd.f32 %v2189, %v2159
        %v2191 = vadd.f32 %v2190, %v2160
        %v2192 = vadd.f32 %v2191, %v2161
        %v2193 = vadd.f32 %v2192, %v2162
        %v2194 = vadd.f32 %v2193, %v2163
        %v2195 = vadd.f32 %v2194, %v2164
        %v2196 = vadd.f32 %v2195, %v2165
        %v2197 = vadd.f32 %v2196, %v2166
        %v2198 = vadd.f32 %v2197, %v2167
        %v2199 = vadd.f32 %v2198, %v2168
        %v2200 = vadd.f32 %v2199, %v2169
        %v2201 = vadd.f32 %v2200, %v2170
        %v2202 = vadd.f32 %v2201, %v2171
        %v2203 = vadd.f32 %v2202, %v2172
        %v2204 = vadd.f32 %v2203, %v2173
        %v2205 = vadd.f32 %v2204, %v2174
        %v2206 = vadd.f32 %v2205, %v2175
        %v2207 = vadd.f32 %v2206, %v2176
        %2208 = vst [vmem:[%s289] sm:$0xff] %v2207
        %p2209 = scmp.lt.s32.totalorder %s25, 1
        %s2210 = scalar_select %p2209, %s25, 1
        %s2211 = smul.addr %s2210, 32
        %s2212 = smul.addr %s2211, 8
        %s2213 = scalar_lea.vmem %s5, %s2212
        %s2214 = sand.u32 %s169, 1
        %s2215 = scalar_lea.sflag [#allocation3], %s2214
        %s2216 = sand.u32 %s169, 1
        %s2217 = smul.addr %s2216, 8
        %s2218 = scalar_lea.vmem [#allocation2], %s2217
        %s2219 = sand.u32 %s195, 1
        %s2220 = scalar_lea.sflag [#allocation5], %s2219
        %s2221 = sand.u32 %s195, 1
        %s2222 = smul.addr %s2221, 8
        %s2223 = scalar_lea.vmem [#allocation4], %s2222
        // Predicated region
        $region41: #{dense_block_forward.7} parent=39 // pred_check
          %p2224 = pneg %p153
        $region42: #{dense_block_forward.7} parent=39 // pred_check_branch
          %2226 = sbr.rel (%p2224) target = $region44
        $region43: #{dense_block_forward.7} parent=39 // pred_region
          _
        $region44: #{dense_block_forward.7} parent=39 // pred_fallthru
          _
        // Predicated region
        $region45: #{dense_block_forward.7} parent=39 // pred_check
          %p2227 = pneg %p179
        $region46: #{dense_block_forward.7} parent=39 // pred_check_branch
          %2229 = sbr.rel (%p2227) target = $region48
        $region47: #{dense_block_forward.7} parent=39 // pred_region
          %s2231 = ssub.s32 128, 128
          %2232 = vsyncadd %s2215, %s2231
          %s2233 = smul.addr %s25, 128
          %s2234 = scalar_lea.hbm %s6, %s2233
          %s2236 = sshll.u32 %s2218, 4
          %s2237 = int_to_ptr.vmem [resolvable:$true] %s2236
          %2239 = dma.vmem_to_hbm [thread:$0]  %s2237, 128, %s2234, %s2215
        $region48: #{dense_block_forward.7} parent=39 // pred_fallthru
          _
        // Predicated region
        $region49: #{dense_block_forward.7} parent=39 // pred_check
          %p2240 = pneg %p205
        $region50: #{dense_block_forward.7} parent=39 // pred_check_branch
          %2242 = sbr.rel (%p2240) target = $region52
        $region51: #{dense_block_forward.7} parent=39 // pred_region
          %s2244 = ssub.s32 128, 128
          %2245 = vsyncadd %s2220, %s2244
          %s2246 = smul.addr %s25, 128
          %s2247 = scalar_lea.hbm %s7, %s2246
          %s2249 = sshll.u32 %s2223, 4
          %s2250 = int_to_ptr.vmem [resolvable:$true] %s2249
          %2252 = dma.vmem_to_hbm [thread:$0]  %s2250, 128, %s2247, %s2220
        $region52: #{dense_block_forward.7} parent=39 // pred_fallthru
          _
      $region40: #{dense_block_forward.7} parent=5 // pred_fallthru
        _
      %p2253 = scmp.le.s32.totalorder 2, %s20
      // Predicated region
      $region53: #{dense_block_forward.7} parent=5 // pred_check
        %p2254 = pneg %p2253
      $region54: #{dense_block_forward.7} parent=5 // pred_check_branch
        %2256 = sbr.rel (%p2254) target = $region56
      $region55: #{dense_block_forward.7} parent=5 // pred_region
        %s2257 = ssub.s32 %s20, 2
        // Predicated region
        $region57: #{dense_block_forward.7} parent=55 // pred_check
          %p2258 = pneg %p159
        $region58: #{dense_block_forward.7} parent=55 // pred_check_branch
          %2260 = sbr.rel (%p2258) target = $region60
        $region59: #{dense_block_forward.7} parent=55 // pred_region
          %p2261 = scmp.lt.s32.totalorder %s26, 1
          %s2262 = scalar_select %p2261, %s26, 1
          %s2263 = smul.addr %s2262, 32
          %s2264 = smul.addr %s2263, 8
          %s2265 = scalar_lea.vmem %s5, %s2264
        $region60: #{dense_block_forward.7} parent=55 // pred_fallthru
          _
        // Predicated region
        $region61: #{dense_block_forward.7} parent=55 // pred_check
          %p2266 = pneg %p185
        $region62: #{dense_block_forward.7} parent=55 // pred_check_branch
          %2268 = sbr.rel (%p2266) target = $region64
        $region63: #{dense_block_forward.7} parent=55 // pred_region
          %s2269 = sand.u32 %s170, 1
          %s2270 = scalar_lea.sflag [#allocation3], %s2269
          %s2271 = sand.u32 %s170, 1
          %s2272 = smul.addr %s2271, 8
          %s2273 = scalar_lea.vmem [#allocation2], %s2272
          %2274 = dma.done %s2270, 128
        $region64: #{dense_block_forward.7} parent=55 // pred_fallthru
          _
        // Predicated region
        $region65: #{dense_block_forward.7} parent=55 // pred_check
          %p2275 = pneg %p211
        $region66: #{dense_block_forward.7} parent=55 // pred_check_branch
          %2277 = sbr.rel (%p2275) target = $region68
        $region67: #{dense_block_forward.7} parent=55 // pred_region
          %s2278 = sand.u32 %s196, 1
          %s2279 = scalar_lea.sflag [#allocation5], %s2278
          %s2280 = sand.u32 %s196, 1
          %s2281 = smul.addr %s2280, 8
          %s2282 = scalar_lea.vmem [#allocation4], %s2281
          %2283 = dma.done %s2279, 128
        $region68: #{dense_block_forward.7} parent=55 // pred_fallthru
          _
      $region56: #{dense_block_forward.7} parent=5 // pred_fallthru
        _
    $region6: #{dense_block_forward.7} parent=1 // loop_footer
      %s24 = sadd.s32 1, %s20
    $region7: #{dense_block_forward.7} parent=1 // loop_footer_branch
      %19 = sbr.rel target = $region3
    $region8: #{dense_block_forward.7} parent=1 // loop_exit
      _
    %2284 = vsyncpa [#allocation3], 1
    %s2285 = scalar_lea.sflag [#allocation3], 1
    %2286 = vsyncpa %s2285, 1
    %2287 = vsyncpa [#allocation5], 1
    %s2288 = scalar_lea.sflag [#allocation5], 1
    %2289 = vsyncpa %s2288, 1

</llo_original>
